<compile_context>
chip_gen: v6e
topology: v6e:2x2x1
jax: 0.10.0
libtpu: 0.0.40
codegen_flags: <defaults>
</compile_context>

<pallas_src>
import functools
import math

import jax
import jax.numpy as jnp
from jax import lax
from jax.experimental import pallas as pl
from jax.experimental.pallas import tpu as pltpu


def _encoder_layer_kernel(
    xp_ref,                                    # (BT, S, D+P) f32   [x | pos]
    wq_ref, bq_ref,                            # (D+P, D) bf16, (1, D) f32  (fused x/pos)
    wk_ref, bk_ref,                            # (D+P, D) bf16, (1, D) f32
    wv_ref, bv_ref,                            # (D,   D) bf16, (1, D) f32
    wo_ref, bo_ref,                            # (D,   D) bf16, (1, D) f32
    g1_ref, be1_ref, g2_ref, be2_ref,          # (1, D) f32 LayerNorm params
    w1_ref, b1_ref,                            # (D, F) bf16, (1, F) f32
    w2_ref, b2_ref,                            # (F, D) bf16, (1, D) f32
    out_ref,                                   # (BT, S, D)      f32
    attn_ref,                                  # (BT, H, S, S)   f32
    *, head_num: int, dim: int,
):
    BT, S, DP = xp_ref.shape
    D = dim
    H = head_num
    hd = D // H
    rows = BT * S

    xp = xp_ref[...].astype(jnp.float32)       # (BT, S, D+P)
    x = xp[:, :, :D]                           # residual path, f32 (BT, S, D)

    # ---- flattened-row projections (bf16 operands, f32 accumulation) ----
    xp_rows = xp.reshape(rows, DP).astype(jnp.bfloat16)
    x_rows_bf = x.reshape(rows, D).astype(jnp.bfloat16)

    def mm(a_bf16, w_ref):
        # weights are pre-transposed to (in, out): plain A @ W, no .T in-kernel
        return jnp.dot(a_bf16, w_ref[...], preferred_element_type=jnp.float32)

    scale = 1.0 / math.sqrt(hd)
    q = (mm(xp_rows, wq_ref) + bq_ref[...]) * scale    # 1/sqrt(hd) folded into q
    k = mm(xp_rows, wk_ref) + bk_ref[...]
    v = mm(x_rows_bf, wv_ref) + bv_ref[...]

    q3 = q.astype(jnp.bfloat16).reshape(BT, S, D)
    k3 = k.astype(jnp.bfloat16).reshape(BT, S, D)
    v3 = v.astype(jnp.bfloat16).reshape(BT, S, D)

    # ---- attention: static loops over the (small) batch tile and heads.
    # Head outputs are accumulated through the matching row-slice of Wo, which
    # equals concat_heads(...) @ Wo without any lane-axis concat.
    per_batch_out = []
    for b in range(BT):
        o_b = jnp.zeros((S, D), jnp.float32)
        for h in range(H):
            qh = q3[b, :, h * hd:(h + 1) * hd]           # (S, hd) bf16
            kh = k3[b, :, h * hd:(h + 1) * hd]
            vh = v3[b, :, h * hd:(h + 1) * hd]
            # q @ k^T via transposed contraction (no materialized transpose)
            s = lax.dot_general(qh, kh, (((1,), (1,)), ((), ())),
                                preferred_element_type=jnp.float32)   # (S, S) f32
            s = s - jnp.max(s, axis=-1, keepdims=True)
            e = jnp.exp(s)
            p = e * pl.reciprocal(jnp.sum(e, axis=-1, keepdims=True), approx=True)
            attn_ref[b, h] = p.astype(attn_ref.dtype)
            hv = jnp.dot(p.astype(jnp.bfloat16), vh,
                         preferred_element_type=jnp.float32)          # (S, hd)
            o_b = o_b + jnp.dot(hv.astype(jnp.bfloat16),
                                wo_ref[h * hd:(h + 1) * hd, :],
                                preferred_element_type=jnp.float32)   # (S, D)
        per_batch_out.append(o_b)

    attn_out = jnp.concatenate(per_batch_out, axis=0) + bo_ref[...]   # (rows, D)

    def layer_norm(a, g_ref, b_ref):
        mu = jnp.mean(a, axis=-1, keepdims=True)
        var = jnp.mean((a - mu) ** 2, axis=-1, keepdims=True)
        return (a - mu) * lax.rsqrt(var + 1e-5) * g_ref[...] + b_ref[...]

    x_rows = x.reshape(rows, D)
    # residual + LayerNorm1 (dropout = identity in eval mode)
    x1 = layer_norm(x_rows + attn_out, g1_ref, be1_ref)

    # FFN: Linear -> ReLU -> (Dropout) -> Linear, on flattened rows
    hidden = jnp.maximum(mm(x1.astype(jnp.bfloat16), w1_ref) + b1_ref[...], 0.0)
    ffn = mm(hidden.astype(jnp.bfloat16), w2_ref) + b2_ref[...]

    # residual + LayerNorm2
    x2 = layer_norm(x1 + ffn, g2_ref, be2_ref)
    out_ref[...] = x2.reshape(BT, S, D).astype(out_ref.dtype)


def transformer_encoder_layer(x_sbd, pos_sbd, params, *, head_num: int):
    """x_sbd, pos_sbd: [seq_len, batch, dim] (PyTorch layout). Returns
    (out [seq_len, batch, dim], attn_score [batch, head_num, seq, seq])."""
    S, B, D = x_sbd.shape
    P = pos_sbd.shape[-1]

    # batch-major for the kernel; concat [x | pos] to fuse the q/k pos-projections
    x = jnp.transpose(x_sbd, (1, 0, 2)).astype(jnp.float32)     # (B, S, D)
    pos = jnp.transpose(pos_sbd, (1, 0, 2)).astype(jnp.float32)  # (B, S, P)
    xp = jnp.concatenate([x, pos], axis=-1)                      # (B, S, D+P)

    def t(w):    # pre-transpose Linear weights to (in, out), cast to bf16 for MXU
        return jnp.asarray(w, jnp.float32).T.astype(jnp.bfloat16)

    def row(v):  # biases / LN params as (1, dim) f32 rows
        return jnp.asarray(v, jnp.float32).reshape(1, -1)

    wq_f = jnp.concatenate([t(params["wq"]), t(params["wqp"])], axis=0)  # (D+P, D)
    wk_f = jnp.concatenate([t(params["wk"]), t(params["wkp"])], axis=0)  # (D+P, D)
    bq_f = row(params["bq"] + params["bqp"])
    bk_f = row(params["bk"] + params["bkp"])

    weight_args = [
        wq_f, bq_f, wk_f, bk_f,
        t(params["wv"]), row(params["bv"]),
        t(params["wo"]), row(params["bo"]),
        row(params["ln1_g"]), row(params["ln1_b"]),
        row(params["ln2_g"]), row(params["ln2_b"]),
        t(params["w1"]), row(params["b1"]),
        t(params["w2"]), row(params["b2"]),
    ]

    # batch tile: flatten several batch elements into one grid step so the
    # projection / FFN matmuls see many rows (amortizes grid overhead, fills MXU).
    BT = 1
    for cand in range(1, B + 1):
        if B % cand == 0 and cand * S <= 512:
            BT = cand
    n_steps = B // BT

    kernel = functools.partial(_encoder_layer_kernel, head_num=head_num, dim=D)

    # Weights: whole-array, VMEM-resident, NOT double-buffered across grid steps.
    def resident_spec(_arr):
        return pl.BlockSpec(memory_space=pltpu.MemorySpace.VMEM)

    # Portability fallback: full-array blocked spec (constant index map).
    def blocked_full_spec(arr):
        nd = arr.ndim
        return pl.BlockSpec(arr.shape, lambda i, _nd=nd: (0,) * _nd)

    out_shape = (
        jax.ShapeDtypeStruct((B, S, D), jnp.float32),
        jax.ShapeDtypeStruct((B, head_num, S, S), jnp.float32),
    )
    out_specs = (
        pl.BlockSpec((BT, S, D), lambda i: (i, 0, 0)),
        pl.BlockSpec((BT, head_num, S, S), lambda i: (i, 0, 0, 0)),
    )

    def build(weight_spec_fn):
        in_specs = [pl.BlockSpec((BT, S, D + P), lambda i: (i, 0, 0))]
        in_specs += [weight_spec_fn(a) for a in weight_args]
        return pl.pallas_call(
            kernel,
            out_shape=out_shape,
            grid_spec=pltpu.PrefetchScalarGridSpec(
                num_scalar_prefetch=0,
                grid=(n_steps,),
                in_specs=in_specs,
                out_specs=out_specs,
            ),
            compiler_params=pltpu.CompilerParams(
                dimension_semantics=("parallel",),
                vmem_limit_bytes=64 * 1024 * 1024,
            ),
        )

    try:
        out, attn = build(resident_spec)(xp, *weight_args)
    except Exception:
        # Some Pallas versions reject unblocked VMEM input specs next to a grid;
        # fall back to full-array blocked specs (double-buffered weights).
        out, attn = build(blocked_full_spec)(xp, *weight_args)

    # back to PyTorch layout [seq, batch, dim]
    return jnp.transpose(out, (1, 0, 2)), attn


def init_params(key, dim, head_num, ffn_interm_dim, pos_dim):
    ks = jax.random.split(key, 16)

    def lin_init(kw, kb, out_d, in_d):
        bound = 1.0 / jnp.sqrt(in_d)
        w = jax.random.uniform(kw, (out_d, in_d), jnp.float32, -bound, bound)
        b = jax.random.uniform(kb, (out_d,), jnp.float32, -bound, bound)
        return w, b

    p = {}
    p["wq"], p["bq"] = lin_init(ks[0], ks[1], dim, dim)
    p["wk"], p["bk"] = lin_init(ks[2], ks[3], dim, dim)
    p["wv"], p["bv"] = lin_init(ks[4], ks[5], dim, dim)
    p["wqp"], p["bqp"] = lin_init(ks[6], ks[7], dim, pos_dim)
    p["wkp"], p["bkp"] = lin_init(ks[8], ks[9], dim, pos_dim)
    p["wo"], p["bo"] = lin_init(ks[10], ks[11], dim, dim)
    p["w1"], p["b1"] = lin_init(ks[12], ks[13], ffn_interm_dim, dim)
    p["w2"], p["b2"] = lin_init(ks[14], ks[15], dim, ffn_interm_dim)
    p["ln1_g"] = jnp.ones((dim,), jnp.float32)
    p["ln1_b"] = jnp.zeros((dim,), jnp.float32)
    p["ln2_g"] = jnp.ones((dim,), jnp.float32)
    p["ln2_b"] = jnp.zeros((dim,), jnp.float32)
    return p


if __name__ == "__main__":
    SEQ, BATCH, DIM, HEADS = 8, 2, 32, 4
    FFN = 4 * DIM          # ffn_interm_dim default = dim * 4
    POS_DIM = DIM          # pos_dim default = dim

    key = jax.random.PRNGKey(0)
    kx, kp, kparam = jax.random.split(key, 3)
    x = jax.random.normal(kx, (SEQ, BATCH, DIM), jnp.float32)
    pos = jax.random.normal(kp, (SEQ, BATCH, POS_DIM), jnp.float32)
    params = init_params(kparam, DIM, HEADS, FFN, POS_DIM)

    out, attn = transformer_encoder_layer(x, pos, params, head_num=HEADS)
    out = jax.block_until_ready(out)
    attn = jax.block_until_ready(attn)

    assert out.shape == (SEQ, BATCH, DIM)
    assert attn.shape == (BATCH, HEADS, SEQ, SEQ)
    assert bool(jnp.all(jnp.isfinite(out)))
    # softmax rows must sum to ~1 (approx-reciprocal EUP path -> loose atol)
    assert bool(jnp.allclose(jnp.sum(attn, axis=-1), 1.0, atol=1e-2))
    print("KERNEL_OK")
</pallas_src>

<mosaic_0001>
module attributes {stable_mosaic.version = 11 : i64} {
  func.func @_encoder_layer_kernel(%arg0: i32, %arg1: memref<2x8x64xf32, #tpu.memory_space<vmem>>, %arg2: memref<64x32xbf16, #tpu.memory_space<vmem>>, %arg3: memref<1x32xf32, #tpu.memory_space<vmem>>, %arg4: memref<64x32xbf16, #tpu.memory_space<vmem>>, %arg5: memref<1x32xf32, #tpu.memory_space<vmem>>, %arg6: memref<32x32xbf16, #tpu.memory_space<vmem>>, %arg7: memref<1x32xf32, #tpu.memory_space<vmem>>, %arg8: memref<32x32xbf16, #tpu.memory_space<vmem>>, %arg9: memref<1x32xf32, #tpu.memory_space<vmem>>, %arg10: memref<1x32xf32, #tpu.memory_space<vmem>>, %arg11: memref<1x32xf32, #tpu.memory_space<vmem>>, %arg12: memref<1x32xf32, #tpu.memory_space<vmem>>, %arg13: memref<1x32xf32, #tpu.memory_space<vmem>>, %arg14: memref<32x128xbf16, #tpu.memory_space<vmem>>, %arg15: memref<1x128xf32, #tpu.memory_space<vmem>>, %arg16: memref<128x32xbf16, #tpu.memory_space<vmem>>, %arg17: memref<1x32xf32, #tpu.memory_space<vmem>>, %arg18: memref<2x8x32xf32, #tpu.memory_space<vmem>>, %arg19: memref<2x4x8x8xf32, #tpu.memory_space<vmem>>) attributes {dimension_semantics = [#tpu.dimension_semantics<parallel>], iteration_bounds = array<i64: 1>, scalar_prefetch = 0 : i64, scratch_operands = 0 : i64, tpu.core_type = #tpu.core_type<tc>, window_params = [{transform_indices = @transform_0, window_bounds = array<i64: 2, 8, 64>}, {pipeline_mode = #tpu.pipeline_mode<synchronous>, transform_indices = @transform_1, window_bounds = array<i64: 64, 32>}, {pipeline_mode = #tpu.pipeline_mode<synchronous>, transform_indices = @transform_2, window_bounds = array<i64: 1, 32>}, {pipeline_mode = #tpu.pipeline_mode<synchronous>, transform_indices = @transform_3, window_bounds = array<i64: 64, 32>}, {pipeline_mode = #tpu.pipeline_mode<synchronous>, transform_indices = @transform_4, window_bounds = array<i64: 1, 32>}, {pipeline_mode = #tpu.pipeline_mode<synchronous>, transform_indices = @transform_5, window_bounds = array<i64: 32, 32>}, {pipeline_mode = #tpu.pipeline_mode<synchronous>, transform_indices = @transform_6, window_bounds = array<i64: 1, 32>}, {pipeline_mode = #tpu.pipeline_mode<synchronous>, transform_indices = @transform_7, window_bounds = array<i64: 32, 32>}, {pipeline_mode = #tpu.pipeline_mode<synchronous>, transform_indices = @transform_8, window_bounds = array<i64: 1, 32>}, {pipeline_mode = #tpu.pipeline_mode<synchronous>, transform_indices = @transform_9, window_bounds = array<i64: 1, 32>}, {pipeline_mode = #tpu.pipeline_mode<synchronous>, transform_indices = @transform_10, window_bounds = array<i64: 1, 32>}, {pipeline_mode = #tpu.pipeline_mode<synchronous>, transform_indices = @transform_11, window_bounds = array<i64: 1, 32>}, {pipeline_mode = #tpu.pipeline_mode<synchronous>, transform_indices = @transform_12, window_bounds = array<i64: 1, 32>}, {pipeline_mode = #tpu.pipeline_mode<synchronous>, transform_indices = @transform_13, window_bounds = array<i64: 32, 128>}, {pipeline_mode = #tpu.pipeline_mode<synchronous>, transform_indices = @transform_14, window_bounds = array<i64: 1, 128>}, {pipeline_mode = #tpu.pipeline_mode<synchronous>, transform_indices = @transform_15, window_bounds = array<i64: 128, 32>}, {pipeline_mode = #tpu.pipeline_mode<synchronous>, transform_indices = @transform_16, window_bounds = array<i64: 1, 32>}, {transform_indices = @transform_17, window_bounds = array<i64: 2, 8, 32>}, {transform_indices = @transform_18, window_bounds = array<i64: 2, 4, 8, 8>}]} {
    %c0 = arith.constant 0 : index
    %c0_0 = arith.constant 0 : index
    %c0_1 = arith.constant 0 : index
    %0 = vector.load %arg1[%c0, %c0_0, %c0_1] : memref<2x8x64xf32, #tpu.memory_space<vmem>>, vector<2x8x64xf32>
    %1 = vector.extract_strided_slice %0 {offsets = [0, 0, 0], sizes = [2, 8, 32], strides = [1, 1, 1]} : vector<2x8x64xf32> to vector<2x8x32xf32>
    %2 = vector.shape_cast %0 : vector<2x8x64xf32> to vector<16x64xf32>
    %3 = arith.truncf %2 : vector<16x64xf32> to vector<16x64xbf16>
    %4 = vector.shape_cast %1 : vector<2x8x32xf32> to vector<16x32xf32>
    %5 = arith.truncf %4 : vector<16x32xf32> to vector<16x32xbf16>
    %c0_2 = arith.constant 0 : index
    %c0_3 = arith.constant 0 : index
    %6 = vector.load %arg2[%c0_2, %c0_3] : memref<64x32xbf16, #tpu.memory_space<vmem>>, vector<64x32xbf16>
    %cst = arith.constant dense<0.000000e+00> : vector<16x32xf32>
    %7 = tpu.matmul %3, %6, %cst {dimension_numbers = #tpu.dot_dimension_numbers<[1], [0], [0], [1], [0, 0, 1, 1], [], []>} : vector<16x64xbf16>, vector<64x32xbf16>, vector<16x32xf32> -> vector<16x32xf32>
    %c0_4 = arith.constant 0 : index
    %c0_5 = arith.constant 0 : index
    %8 = vector.load %arg3[%c0_4, %c0_5] : memref<1x32xf32, #tpu.memory_space<vmem>>, vector<1x32xf32>
    %9 = vector.broadcast %8 : vector<1x32xf32> to vector<16x32xf32>
    %10 = arith.addf %7, %9 : vector<16x32xf32>
    %cst_6 = arith.constant 0.353553385 : f32
    %11 = vector.broadcast %cst_6 : f32 to vector<16x32xf32>
    %12 = arith.mulf %10, %11 : vector<16x32xf32>
    %c0_7 = arith.constant 0 : index
    %c0_8 = arith.constant 0 : index
    %13 = vector.load %arg4[%c0_7, %c0_8] : memref<64x32xbf16, #tpu.memory_space<vmem>>, vector<64x32xbf16>
    %cst_9 = arith.constant dense<0.000000e+00> : vector<16x32xf32>
    %14 = tpu.matmul %3, %13, %cst_9 {dimension_numbers = #tpu.dot_dimension_numbers<[1], [0], [0], [1], [0, 0, 1, 1], [], []>} : vector<16x64xbf16>, vector<64x32xbf16>, vector<16x32xf32> -> vector<16x32xf32>
    %c0_10 = arith.constant 0 : index
    %c0_11 = arith.constant 0 : index
    %15 = vector.load %arg5[%c0_10, %c0_11] : memref<1x32xf32, #tpu.memory_space<vmem>>, vector<1x32xf32>
    %16 = vector.broadcast %15 : vector<1x32xf32> to vector<16x32xf32>
    %17 = arith.addf %14, %16 : vector<16x32xf32>
    %c0_12 = arith.constant 0 : index
    %c0_13 = arith.constant 0 : index
    %18 = vector.load %arg6[%c0_12, %c0_13] : memref<32x32xbf16, #tpu.memory_space<vmem>>, vector<32x32xbf16>
    %cst_14 = arith.constant dense<0.000000e+00> : vector<16x32xf32>
    %19 = tpu.matmul %5, %18, %cst_14 {dimension_numbers = #tpu.dot_dimension_numbers<[1], [0], [0], [1], [0, 0, 1, 1], [], []>} : vector<16x32xbf16>, vector<32x32xbf16>, vector<16x32xf32> -> vector<16x32xf32>
    %c0_15 = arith.constant 0 : index
    %c0_16 = arith.constant 0 : index
    %20 = vector.load %arg7[%c0_15, %c0_16] : memref<1x32xf32, #tpu.memory_space<vmem>>, vector<1x32xf32>
    %21 = vector.broadcast %20 : vector<1x32xf32> to vector<16x32xf32>
    %22 = arith.addf %19, %21 : vector<16x32xf32>
    %23 = arith.truncf %12 : vector<16x32xf32> to vector<16x32xbf16>
    %24 = vector.shape_cast %23 : vector<16x32xbf16> to vector<2x8x32xbf16>
    %25 = arith.truncf %17 : vector<16x32xf32> to vector<16x32xbf16>
    %26 = vector.shape_cast %25 : vector<16x32xbf16> to vector<2x8x32xbf16>
    %27 = arith.truncf %22 : vector<16x32xf32> to vector<16x32xbf16>
    %28 = vector.shape_cast %27 : vector<16x32xbf16> to vector<2x8x32xbf16>
    %cst_17 = arith.constant 0.000000e+00 : f32
    %29 = vector.broadcast %cst_17 : f32 to vector<8x32xf32>
    %30 = vector.extract_strided_slice %24 {offsets = [0, 0, 0], sizes = [1, 8, 8], strides = [1, 1, 1]} : vector<2x8x32xbf16> to vector<1x8x8xbf16>
    %31 = vector.shape_cast %30 : vector<1x8x8xbf16> to vector<8x8xbf16>
    %32 = vector.extract_strided_slice %26 {offsets = [0, 0, 0], sizes = [1, 8, 8], strides = [1, 1, 1]} : vector<2x8x32xbf16> to vector<1x8x8xbf16>
    %33 = vector.shape_cast %32 : vector<1x8x8xbf16> to vector<8x8xbf16>
    %34 = vector.extract_strided_slice %28 {offsets = [0, 0, 0], sizes = [1, 8, 8], strides = [1, 1, 1]} : vector<2x8x32xbf16> to vector<1x8x8xbf16>
    %35 = vector.shape_cast %34 : vector<1x8x8xbf16> to vector<8x8xbf16>
    %cst_18 = arith.constant dense<0.000000e+00> : vector<8x8xf32>
    %36 = tpu.matmul %31, %33, %cst_18 {dimension_numbers = #tpu.dot_dimension_numbers<[1], [1], [0], [0], [0, 0, 1, 0], [], []>} : vector<8x8xbf16>, vector<8x8xbf16>, vector<8x8xf32> -> vector<8x8xf32>
    %cst_19 = arith.constant dense<0xFF800000> : vector<8xf32>
    %37 = vector.multi_reduction <maximumf>, %36, %cst_19 [1] : vector<8x8xf32> to vector<8xf32>
    %38 = vector.shape_cast %37 : vector<8xf32> to vector<8x1xf32>
    %39 = vector.broadcast %38 : vector<8x1xf32> to vector<8x8xf32>
    %40 = arith.subf %36, %39 : vector<8x8xf32>
    %41 = math.exp %40 : vector<8x8xf32>
    %cst_20 = arith.constant dense<0.000000e+00> : vector<8xf32>
    %42 = vector.multi_reduction <add>, %41, %cst_20 [1] : vector<8x8xf32> to vector<8xf32>
    %43 = vector.shape_cast %42 : vector<8xf32> to vector<8x1xf32>
    %44 = tpu.reciprocal %43 {approx = true} : vector<8x1xf32> -> vector<8x1xf32>
    %45 = vector.broadcast %44 : vector<8x1xf32> to vector<8x8xf32>
    %46 = arith.mulf %41, %45 : vector<8x8xf32>
    %c0_21 = arith.constant 0 : index
    %c0_22 = arith.constant 0 : index
    %c0_23 = arith.constant 0 : index
    %c0_24 = arith.constant 0 : index
    %47 = vector.load %arg19[%c0_21, %c0_22, %c0_23, %c0_24] : memref<2x4x8x8xf32, #tpu.memory_space<vmem>>, vector<1x1x8x8xf32>
    %48 = vector.shape_cast %47 : vector<1x1x8x8xf32> to vector<8x8xf32>
    %49 = vector.shape_cast %46 : vector<8x8xf32> to vector<1x1x8x8xf32>
    tpu.vector_store %arg19[%c0_21, %c0_22, %c0_23, %c0_24], %49 {strides = array<i32>} : memref<2x4x8x8xf32, #tpu.memory_space<vmem>>, vector<1x1x8x8xf32>,
    %50 = arith.truncf %46 : vector<8x8xf32> to vector<8x8xbf16>
    %cst_25 = arith.constant dense<0.000000e+00> : vector<8x8xf32>
    %51 = tpu.matmul %50, %35, %cst_25 {dimension_numbers = #tpu.dot_dimension_numbers<[1], [0], [0], [1], [0, 0, 1, 1], [], []>} : vector<8x8xbf16>, vector<8x8xbf16>, vector<8x8xf32> -> vector<8x8xf32>
    %52 = arith.truncf %51 : vector<8x8xf32> to vector<8x8xbf16>
    %c0_26 = arith.constant 0 : index
    %c0_27 = arith.constant 0 : index
    %53 = vector.load %arg8[%c0_26, %c0_27] : memref<32x32xbf16, #tpu.memory_space<vmem>>, vector<8x32xbf16>
    %cst_28 = arith.constant dense<0.000000e+00> : vector<8x32xf32>
    %54 = tpu.matmul %52, %53, %cst_28 {dimension_numbers = #tpu.dot_dimension_numbers<[1], [0], [0], [1], [0, 0, 1, 1], [], []>} : vector<8x8xbf16>, vector<8x32xbf16>, vector<8x32xf32> -> vector<8x32xf32>
    %55 = arith.addf %29, %54 : vector<8x32xf32>
    %56 = vector.extract_strided_slice %24 {offsets = [0, 0, 8], sizes = [1, 8, 8], strides = [1, 1, 1]} : vector<2x8x32xbf16> to vector<1x8x8xbf16>
    %57 = vector.shape_cast %56 : vector<1x8x8xbf16> to vector<8x8xbf16>
    %58 = vector.extract_strided_slice %26 {offsets = [0, 0, 8], sizes = [1, 8, 8], strides = [1, 1, 1]} : vector<2x8x32xbf16> to vector<1x8x8xbf16>
    %59 = vector.shape_cast %58 : vector<1x8x8xbf16> to vector<8x8xbf16>
    %60 = vector.extract_strided_slice %28 {offsets = [0, 0, 8], sizes = [1, 8, 8], strides = [1, 1, 1]} : vector<2x8x32xbf16> to vector<1x8x8xbf16>
    %61 = vector.shape_cast %60 : vector<1x8x8xbf16> to vector<8x8xbf16>
    %cst_29 = arith.constant dense<0.000000e+00> : vector<8x8xf32>
    %62 = tpu.matmul %57, %59, %cst_29 {dimension_numbers = #tpu.dot_dimension_numbers<[1], [1], [0], [0], [0, 0, 1, 0], [], []>} : vector<8x8xbf16>, vector<8x8xbf16>, vector<8x8xf32> -> vector<8x8xf32>
    %cst_30 = arith.constant dense<0xFF800000> : vector<8xf32>
    %63 = vector.multi_reduction <maximumf>, %62, %cst_30 [1] : vector<8x8xf32> to vector<8xf32>
    %64 = vector.shape_cast %63 : vector<8xf32> to vector<8x1xf32>
    %65 = vector.broadcast %64 : vector<8x1xf32> to vector<8x8xf32>
    %66 = arith.subf %62, %65 : vector<8x8xf32>
    %67 = math.exp %66 : vector<8x8xf32>
    %cst_31 = arith.constant dense<0.000000e+00> : vector<8xf32>
    %68 = vector.multi_reduction <add>, %67, %cst_31 [1] : vector<8x8xf32> to vector<8xf32>
    %69 = vector.shape_cast %68 : vector<8xf32> to vector<8x1xf32>
    %70 = tpu.reciprocal %69 {approx = true} : vector<8x1xf32> -> vector<8x1xf32>
    %71 = vector.broadcast %70 : vector<8x1xf32> to vector<8x8xf32>
    %72 = arith.mulf %67, %71 : vector<8x8xf32>
    %c0_32 = arith.constant 0 : index
    %c1 = arith.constant 1 : index
    %c0_33 = arith.constant 0 : index
    %c0_34 = arith.constant 0 : index
    %73 = vector.load %arg19[%c0_32, %c1, %c0_33, %c0_34] : memref<2x4x8x8xf32, #tpu.memory_space<vmem>>, vector<1x1x8x8xf32>
    %74 = vector.shape_cast %73 : vector<1x1x8x8xf32> to vector<8x8xf32>
    %75 = vector.shape_cast %72 : vector<8x8xf32> to vector<1x1x8x8xf32>
    tpu.vector_store %arg19[%c0_32, %c1, %c0_33, %c0_34], %75 {strides = array<i32>} : memref<2x4x8x8xf32, #tpu.memory_space<vmem>>, vector<1x1x8x8xf32>,
    %76 = arith.truncf %72 : vector<8x8xf32> to vector<8x8xbf16>
    %cst_35 = arith.constant dense<0.000000e+00> : vector<8x8xf32>
    %77 = tpu.matmul %76, %61, %cst_35 {dimension_numbers = #tpu.dot_dimension_numbers<[1], [0], [0], [1], [0, 0, 1, 1], [], []>} : vector<8x8xbf16>, vector<8x8xbf16>, vector<8x8xf32> -> vector<8x8xf32>
    %78 = arith.truncf %77 : vector<8x8xf32> to vector<8x8xbf16>
    %c8 = arith.constant 8 : index
    %c0_36 = arith.constant 0 : index
    %79 = vector.load %arg8[%c8, %c0_36] : memref<32x32xbf16, #tpu.memory_space<vmem>>, vector<8x32xbf16>
    %cst_37 = arith.constant dense<0.000000e+00> : vector<8x32xf32>
    %80 = tpu.matmul %78, %79, %cst_37 {dimension_numbers = #tpu.dot_dimension_numbers<[1], [0], [0], [1], [0, 0, 1, 1], [], []>} : vector<8x8xbf16>, vector<8x32xbf16>, vector<8x32xf32> -> vector<8x32xf32>
    %81 = arith.addf %55, %80 : vector<8x32xf32>
    %82 = vector.extract_strided_slice %24 {offsets = [0, 0, 16], sizes = [1, 8, 8], strides = [1, 1, 1]} : vector<2x8x32xbf16> to vector<1x8x8xbf16>
    %83 = vector.shape_cast %82 : vector<1x8x8xbf16> to vector<8x8xbf16>
    %84 = vector.extract_strided_slice %26 {offsets = [0, 0, 16], sizes = [1, 8, 8], strides = [1, 1, 1]} : vector<2x8x32xbf16> to vector<1x8x8xbf16>
    %85 = vector.shape_cast %84 : vector<1x8x8xbf16> to vector<8x8xbf16>
    %86 = vector.extract_strided_slice %28 {offsets = [0, 0, 16], sizes = [1, 8, 8], strides = [1, 1, 1]} : vector<2x8x32xbf16> to vector<1x8x8xbf16>
    %87 = vector.shape_cast %86 : vector<1x8x8xbf16> to vector<8x8xbf16>
    %cst_38 = arith.constant dense<0.000000e+00> : vector<8x8xf32>
    %88 = tpu.matmul %83, %85, %cst_38 {dimension_numbers = #tpu.dot_dimension_numbers<[1], [1], [0], [0], [0, 0, 1, 0], [], []>} : vector<8x8xbf16>, vector<8x8xbf16>, vector<8x8xf32> -> vector<8x8xf32>
    %cst_39 = arith.constant dense<0xFF800000> : vector<8xf32>
    %89 = vector.multi_reduction <maximumf>, %88, %cst_39 [1] : vector<8x8xf32> to vector<8xf32>
    %90 = vector.shape_cast %89 : vector<8xf32> to vector<8x1xf32>
    %91 = vector.broadcast %90 : vector<8x1xf32> to vector<8x8xf32>
    %92 = arith.subf %88, %91 : vector<8x8xf32>
    %93 = math.exp %92 : vector<8x8xf32>
    %cst_40 = arith.constant dense<0.000000e+00> : vector<8xf32>
    %94 = vector.multi_reduction <add>, %93, %cst_40 [1] : vector<8x8xf32> to vector<8xf32>
    %95 = vector.shape_cast %94 : vector<8xf32> to vector<8x1xf32>
    %96 = tpu.reciprocal %95 {approx = true} : vector<8x1xf32> -> vector<8x1xf32>
    %97 = vector.broadcast %96 : vector<8x1xf32> to vector<8x8xf32>
    %98 = arith.mulf %93, %97 : vector<8x8xf32>
    %c0_41 = arith.constant 0 : index
    %c2 = arith.constant 2 : index
    %c0_42 = arith.constant 0 : index
    %c0_43 = arith.constant 0 : index
    %99 = vector.load %arg19[%c0_41, %c2, %c0_42, %c0_43] : memref<2x4x8x8xf32, #tpu.memory_space<vmem>>, vector<1x1x8x8xf32>
    %100 = vector.shape_cast %99 : vector<1x1x8x8xf32> to vector<8x8xf32>
    %101 = vector.shape_cast %98 : vector<8x8xf32> to vector<1x1x8x8xf32>
    tpu.vector_store %arg19[%c0_41, %c2, %c0_42, %c0_43], %101 {strides = array<i32>} : memref<2x4x8x8xf32, #tpu.memory_space<vmem>>, vector<1x1x8x8xf32>,
    %102 = arith.truncf %98 : vector<8x8xf32> to vector<8x8xbf16>
    %cst_44 = arith.constant dense<0.000000e+00> : vector<8x8xf32>
    %103 = tpu.matmul %102, %87, %cst_44 {dimension_numbers = #tpu.dot_dimension_numbers<[1], [0], [0], [1], [0, 0, 1, 1], [], []>} : vector<8x8xbf16>, vector<8x8xbf16>, vector<8x8xf32> -> vector<8x8xf32>
    %104 = arith.truncf %103 : vector<8x8xf32> to vector<8x8xbf16>
    %c16 = arith.constant 16 : index
    %c0_45 = arith.constant 0 : index
    %105 = vector.load %arg8[%c16, %c0_45] : memref<32x32xbf16, #tpu.memory_space<vmem>>, vector<8x32xbf16>
    %cst_46 = arith.constant dense<0.000000e+00> : vector<8x32xf32>
    %106 = tpu.matmul %104, %105, %cst_46 {dimension_numbers = #tpu.dot_dimension_numbers<[1], [0], [0], [1], [0, 0, 1, 1], [], []>} : vector<8x8xbf16>, vector<8x32xbf16>, vector<8x32xf32> -> vector<8x32xf32>
    %107 = arith.addf %81, %106 : vector<8x32xf32>
    %108 = vector.extract_strided_slice %24 {offsets = [0, 0, 24], sizes = [1, 8, 8], strides = [1, 1, 1]} : vector<2x8x32xbf16> to vector<1x8x8xbf16>
    %109 = vector.shape_cast %108 : vector<1x8x8xbf16> to vector<8x8xbf16>
    %110 = vector.extract_strided_slice %26 {offsets = [0, 0, 24], sizes = [1, 8, 8], strides = [1, 1, 1]} : vector<2x8x32xbf16> to vector<1x8x8xbf16>
    %111 = vector.shape_cast %110 : vector<1x8x8xbf16> to vector<8x8xbf16>
    %112 = vector.extract_strided_slice %28 {offsets = [0, 0, 24], sizes = [1, 8, 8], strides = [1, 1, 1]} : vector<2x8x32xbf16> to vector<1x8x8xbf16>
    %113 = vector.shape_cast %112 : vector<1x8x8xbf16> to vector<8x8xbf16>
    %cst_47 = arith.constant dense<0.000000e+00> : vector<8x8xf32>
    %114 = tpu.matmul %109, %111, %cst_47 {dimension_numbers = #tpu.dot_dimension_numbers<[1], [1], [0], [0], [0, 0, 1, 0], [], []>} : vector<8x8xbf16>, vector<8x8xbf16>, vector<8x8xf32> -> vector<8x8xf32>
    %cst_48 = arith.constant dense<0xFF800000> : vector<8xf32>
    %115 = vector.multi_reduction <maximumf>, %114, %cst_48 [1] : vector<8x8xf32> to vector<8xf32>
    %116 = vector.shape_cast %115 : vector<8xf32> to vector<8x1xf32>
    %117 = vector.broadcast %116 : vector<8x1xf32> to vector<8x8xf32>
    %118 = arith.subf %114, %117 : vector<8x8xf32>
    %119 = math.exp %118 : vector<8x8xf32>
    %cst_49 = arith.constant dense<0.000000e+00> : vector<8xf32>
    %120 = vector.multi_reduction <add>, %119, %cst_49 [1] : vector<8x8xf32> to vector<8xf32>
    %121 = vector.shape_cast %120 : vector<8xf32> to vector<8x1xf32>
    %122 = tpu.reciprocal %121 {approx = true} : vector<8x1xf32> -> vector<8x1xf32>
    %123 = vector.broadcast %122 : vector<8x1xf32> to vector<8x8xf32>
    %124 = arith.mulf %119, %123 : vector<8x8xf32>
    %c0_50 = arith.constant 0 : index
    %c3 = arith.constant 3 : index
    %c0_51 = arith.constant 0 : index
    %c0_52 = arith.constant 0 : index
    %125 = vector.load %arg19[%c0_50, %c3, %c0_51, %c0_52] : memref<2x4x8x8xf32, #tpu.memory_space<vmem>>, vector<1x1x8x8xf32>
    %126 = vector.shape_cast %125 : vector<1x1x8x8xf32> to vector<8x8xf32>
    %127 = vector.shape_cast %124 : vector<8x8xf32> to vector<1x1x8x8xf32>
    tpu.vector_store %arg19[%c0_50, %c3, %c0_51, %c0_52], %127 {strides = array<i32>} : memref<2x4x8x8xf32, #tpu.memory_space<vmem>>, vector<1x1x8x8xf32>,
    %128 = arith.truncf %124 : vector<8x8xf32> to vector<8x8xbf16>
    %cst_53 = arith.constant dense<0.000000e+00> : vector<8x8xf32>
    %129 = tpu.matmul %128, %113, %cst_53 {dimension_numbers = #tpu.dot_dimension_numbers<[1], [0], [0], [1], [0, 0, 1, 1], [], []>} : vector<8x8xbf16>, vector<8x8xbf16>, vector<8x8xf32> -> vector<8x8xf32>
    %130 = arith.truncf %129 : vector<8x8xf32> to vector<8x8xbf16>
    %c24 = arith.constant 24 : index
    %c0_54 = arith.constant 0 : index
    %131 = vector.load %arg8[%c24, %c0_54] : memref<32x32xbf16, #tpu.memory_space<vmem>>, vector<8x32xbf16>
    %cst_55 = arith.constant dense<0.000000e+00> : vector<8x32xf32>
    %132 = tpu.matmul %130, %131, %cst_55 {dimension_numbers = #tpu.dot_dimension_numbers<[1], [0], [0], [1], [0, 0, 1, 1], [], []>} : vector<8x8xbf16>, vector<8x32xbf16>, vector<8x32xf32> -> vector<8x32xf32>
    %133 = arith.addf %107, %132 : vector<8x32xf32>
    %cst_56 = arith.constant 0.000000e+00 : f32
    %134 = vector.broadcast %cst_56 : f32 to vector<8x32xf32>
    %135 = vector.extract_strided_slice %24 {offsets = [1, 0, 0], sizes = [1, 8, 8], strides = [1, 1, 1]} : vector<2x8x32xbf16> to vector<1x8x8xbf16>
    %136 = vector.shape_cast %135 : vector<1x8x8xbf16> to vector<8x8xbf16>
    %137 = vector.extract_strided_slice %26 {offsets = [1, 0, 0], sizes = [1, 8, 8], strides = [1, 1, 1]} : vector<2x8x32xbf16> to vector<1x8x8xbf16>
    %138 = vector.shape_cast %137 : vector<1x8x8xbf16> to vector<8x8xbf16>
    %139 = vector.extract_strided_slice %28 {offsets = [1, 0, 0], sizes = [1, 8, 8], strides = [1, 1, 1]} : vector<2x8x32xbf16> to vector<1x8x8xbf16>
    %140 = vector.shape_cast %139 : vector<1x8x8xbf16> to vector<8x8xbf16>
    %cst_57 = arith.constant dense<0.000000e+00> : vector<8x8xf32>
    %141 = tpu.matmul %136, %138, %cst_57 {dimension_numbers = #tpu.dot_dimension_numbers<[1], [1], [0], [0], [0, 0, 1, 0], [], []>} : vector<8x8xbf16>, vector<8x8xbf16>, vector<8x8xf32> -> vector<8x8xf32>
    %cst_58 = arith.constant dense<0xFF800000> : vector<8xf32>
    %142 = vector.multi_reduction <maximumf>, %141, %cst_58 [1] : vector<8x8xf32> to vector<8xf32>
    %143 = vector.shape_cast %142 : vector<8xf32> to vector<8x1xf32>
    %144 = vector.broadcast %143 : vector<8x1xf32> to vector<8x8xf32>
    %145 = arith.subf %141, %144 : vector<8x8xf32>
    %146 = math.exp %145 : vector<8x8xf32>
    %cst_59 = arith.constant dense<0.000000e+00> : vector<8xf32>
    %147 = vector.multi_reduction <add>, %146, %cst_59 [1] : vector<8x8xf32> to vector<8xf32>
    %148 = vector.shape_cast %147 : vector<8xf32> to vector<8x1xf32>
    %149 = tpu.reciprocal %148 {approx = true} : vector<8x1xf32> -> vector<8x1xf32>
    %150 = vector.broadcast %149 : vector<8x1xf32> to vector<8x8xf32>
    %151 = arith.mulf %146, %150 : vector<8x8xf32>
    %c1_60 = arith.constant 1 : index
    %c0_61 = arith.constant 0 : index
    %c0_62 = arith.constant 0 : index
    %c0_63 = arith.constant 0 : index
    %152 = vector.load %arg19[%c1_60, %c0_61, %c0_62, %c0_63] : memref<2x4x8x8xf32, #tpu.memory_space<vmem>>, vector<1x1x8x8xf32>
    %153 = vector.shape_cast %152 : vector<1x1x8x8xf32> to vector<8x8xf32>
    %154 = vector.shape_cast %151 : vector<8x8xf32> to vector<1x1x8x8xf32>
    tpu.vector_store %arg19[%c1_60, %c0_61, %c0_62, %c0_63], %154 {strides = array<i32>} : memref<2x4x8x8xf32, #tpu.memory_space<vmem>>, vector<1x1x8x8xf32>,
    %155 = arith.truncf %151 : vector<8x8xf32> to vector<8x8xbf16>
    %cst_64 = arith.constant dense<0.000000e+00> : vector<8x8xf32>
    %156 = tpu.matmul %155, %140, %cst_64 {dimension_numbers = #tpu.dot_dimension_numbers<[1], [0], [0], [1], [0, 0, 1, 1], [], []>} : vector<8x8xbf16>, vector<8x8xbf16>, vector<8x8xf32> -> vector<8x8xf32>
    %157 = arith.truncf %156 : vector<8x8xf32> to vector<8x8xbf16>
    %c0_65 = arith.constant 0 : index
    %c0_66 = arith.constant 0 : index
    %158 = vector.load %arg8[%c0_65, %c0_66] : memref<32x32xbf16, #tpu.memory_space<vmem>>, vector<8x32xbf16>
    %cst_67 = arith.constant dense<0.000000e+00> : vector<8x32xf32>
    %159 = tpu.matmul %157, %158, %cst_67 {dimension_numbers = #tpu.dot_dimension_numbers<[1], [0], [0], [1], [0, 0, 1, 1], [], []>} : vector<8x8xbf16>, vector<8x32xbf16>, vector<8x32xf32> -> vector<8x32xf32>
    %160 = arith.addf %134, %159 : vector<8x32xf32>
    %161 = vector.extract_strided_slice %24 {offsets = [1, 0, 8], sizes = [1, 8, 8], strides = [1, 1, 1]} : vector<2x8x32xbf16> to vector<1x8x8xbf16>
    %162 = vector.shape_cast %161 : vector<1x8x8xbf16> to vector<8x8xbf16>
    %163 = vector.extract_strided_slice %26 {offsets = [1, 0, 8], sizes = [1, 8, 8], strides = [1, 1, 1]} : vector<2x8x32xbf16> to vector<1x8x8xbf16>
    %164 = vector.shape_cast %163 : vector<1x8x8xbf16> to vector<8x8xbf16>
    %165 = vector.extract_strided_slice %28 {offsets = [1, 0, 8], sizes = [1, 8, 8], strides = [1, 1, 1]} : vector<2x8x32xbf16> to vector<1x8x8xbf16>
    %166 = vector.shape_cast %165 : vector<1x8x8xbf16> to vector<8x8xbf16>
    %cst_68 = arith.constant dense<0.000000e+00> : vector<8x8xf32>
    %167 = tpu.matmul %162, %164, %cst_68 {dimension_numbers = #tpu.dot_dimension_numbers<[1], [1], [0], [0], [0, 0, 1, 0], [], []>} : vector<8x8xbf16>, vector<8x8xbf16>, vector<8x8xf32> -> vector<8x8xf32>
    %cst_69 = arith.constant dense<0xFF800000> : vector<8xf32>
    %168 = vector.multi_reduction <maximumf>, %167, %cst_69 [1] : vector<8x8xf32> to vector<8xf32>
    %169 = vector.shape_cast %168 : vector<8xf32> to vector<8x1xf32>
    %170 = vector.broadcast %169 : vector<8x1xf32> to vector<8x8xf32>
    %171 = arith.subf %167, %170 : vector<8x8xf32>
    %172 = math.exp %171 : vector<8x8xf32>
    %cst_70 = arith.constant dense<0.000000e+00> : vector<8xf32>
    %173 = vector.multi_reduction <add>, %172, %cst_70 [1] : vector<8x8xf32> to vector<8xf32>
    %174 = vector.shape_cast %173 : vector<8xf32> to vector<8x1xf32>
    %175 = tpu.reciprocal %174 {approx = true} : vector<8x1xf32> -> vector<8x1xf32>
    %176 = vector.broadcast %175 : vector<8x1xf32> to vector<8x8xf32>
    %177 = arith.mulf %172, %176 : vector<8x8xf32>
    %c1_71 = arith.constant 1 : index
    %c1_72 = arith.constant 1 : index
    %c0_73 = arith.constant 0 : index
    %c0_74 = arith.constant 0 : index
    %178 = vector.load %arg19[%c1_71, %c1_72, %c0_73, %c0_74] : memref<2x4x8x8xf32, #tpu.memory_space<vmem>>, vector<1x1x8x8xf32>
    %179 = vector.shape_cast %178 : vector<1x1x8x8xf32> to vector<8x8xf32>
    %180 = vector.shape_cast %177 : vector<8x8xf32> to vector<1x1x8x8xf32>
    tpu.vector_store %arg19[%c1_71, %c1_72, %c0_73, %c0_74], %180 {strides = array<i32>} : memref<2x4x8x8xf32, #tpu.memory_space<vmem>>, vector<1x1x8x8xf32>,
    %181 = arith.truncf %177 : vector<8x8xf32> to vector<8x8xbf16>
    %cst_75 = arith.constant dense<0.000000e+00> : vector<8x8xf32>
    %182 = tpu.matmul %181, %166, %cst_75 {dimension_numbers = #tpu.dot_dimension_numbers<[1], [0], [0], [1], [0, 0, 1, 1], [], []>} : vector<8x8xbf16>, vector<8x8xbf16>, vector<8x8xf32> -> vector<8x8xf32>
    %183 = arith.truncf %182 : vector<8x8xf32> to vector<8x8xbf16>
    %c8_76 = arith.constant 8 : index
    %c0_77 = arith.constant 0 : index
    %184 = vector.load %arg8[%c8_76, %c0_77] : memref<32x32xbf16, #tpu.memory_space<vmem>>, vector<8x32xbf16>
    %cst_78 = arith.constant dense<0.000000e+00> : vector<8x32xf32>
    %185 = tpu.matmul %183, %184, %cst_78 {dimension_numbers = #tpu.dot_dimension_numbers<[1], [0], [0], [1], [0, 0, 1, 1], [], []>} : vector<8x8xbf16>, vector<8x32xbf16>, vector<8x32xf32> -> vector<8x32xf32>
    %186 = arith.addf %160, %185 : vector<8x32xf32>
    %187 = vector.extract_strided_slice %24 {offsets = [1, 0, 16], sizes = [1, 8, 8], strides = [1, 1, 1]} : vector<2x8x32xbf16> to vector<1x8x8xbf16>
    %188 = vector.shape_cast %187 : vector<1x8x8xbf16> to vector<8x8xbf16>
    %189 = vector.extract_strided_slice %26 {offsets = [1, 0, 16], sizes = [1, 8, 8], strides = [1, 1, 1]} : vector<2x8x32xbf16> to vector<1x8x8xbf16>
    %190 = vector.shape_cast %189 : vector<1x8x8xbf16> to vector<8x8xbf16>
    %191 = vector.extract_strided_slice %28 {offsets = [1, 0, 16], sizes = [1, 8, 8], strides = [1, 1, 1]} : vector<2x8x32xbf16> to vector<1x8x8xbf16>
    %192 = vector.shape_cast %191 : vector<1x8x8xbf16> to vector<8x8xbf16>
    %cst_79 = arith.constant dense<0.000000e+00> : vector<8x8xf32>
    %193 = tpu.matmul %188, %190, %cst_79 {dimension_numbers = #tpu.dot_dimension_numbers<[1], [1], [0], [0], [0, 0, 1, 0], [], []>} : vector<8x8xbf16>, vector<8x8xbf16>, vector<8x8xf32> -> vector<8x8xf32>
    %cst_80 = arith.constant dense<0xFF800000> : vector<8xf32>
    %194 = vector.multi_reduction <maximumf>, %193, %cst_80 [1] : vector<8x8xf32> to vector<8xf32>
    %195 = vector.shape_cast %194 : vector<8xf32> to vector<8x1xf32>
    %196 = vector.broadcast %195 : vector<8x1xf32> to vector<8x8xf32>
    %197 = arith.subf %193, %196 : vector<8x8xf32>
    %198 = math.exp %197 : vector<8x8xf32>
    %cst_81 = arith.constant dense<0.000000e+00> : vector<8xf32>
    %199 = vector.multi_reduction <add>, %198, %cst_81 [1] : vector<8x8xf32> to vector<8xf32>
    %200 = vector.shape_cast %199 : vector<8xf32> to vector<8x1xf32>
    %201 = tpu.reciprocal %200 {approx = true} : vector<8x1xf32> -> vector<8x1xf32>
    %202 = vector.broadcast %201 : vector<8x1xf32> to vector<8x8xf32>
    %203 = arith.mulf %198, %202 : vector<8x8xf32>
    %c1_82 = arith.constant 1 : index
    %c2_83 = arith.constant 2 : index
    %c0_84 = arith.constant 0 : index
    %c0_85 = arith.constant 0 : index
    %204 = vector.load %arg19[%c1_82, %c2_83, %c0_84, %c0_85] : memref<2x4x8x8xf32, #tpu.memory_space<vmem>>, vector<1x1x8x8xf32>
    %205 = vector.shape_cast %204 : vector<1x1x8x8xf32> to vector<8x8xf32>
    %206 = vector.shape_cast %203 : vector<8x8xf32> to vector<1x1x8x8xf32>
    tpu.vector_store %arg19[%c1_82, %c2_83, %c0_84, %c0_85], %206 {strides = array<i32>} : memref<2x4x8x8xf32, #tpu.memory_space<vmem>>, vector<1x1x8x8xf32>,
    %207 = arith.truncf %203 : vector<8x8xf32> to vector<8x8xbf16>
    %cst_86 = arith.constant dense<0.000000e+00> : vector<8x8xf32>
    %208 = tpu.matmul %207, %192, %cst_86 {dimension_numbers = #tpu.dot_dimension_numbers<[1], [0], [0], [1], [0, 0, 1, 1], [], []>} : vector<8x8xbf16>, vector<8x8xbf16>, vector<8x8xf32> -> vector<8x8xf32>
    %209 = arith.truncf %208 : vector<8x8xf32> to vector<8x8xbf16>
    %c16_87 = arith.constant 16 : index
    %c0_88 = arith.constant 0 : index
    %210 = vector.load %arg8[%c16_87, %c0_88] : memref<32x32xbf16, #tpu.memory_space<vmem>>, vector<8x32xbf16>
    %cst_89 = arith.constant dense<0.000000e+00> : vector<8x32xf32>
    %211 = tpu.matmul %209, %210, %cst_89 {dimension_numbers = #tpu.dot_dimension_numbers<[1], [0], [0], [1], [0, 0, 1, 1], [], []>} : vector<8x8xbf16>, vector<8x32xbf16>, vector<8x32xf32> -> vector<8x32xf32>
    %212 = arith.addf %186, %211 : vector<8x32xf32>
    %213 = vector.extract_strided_slice %24 {offsets = [1, 0, 24], sizes = [1, 8, 8], strides = [1, 1, 1]} : vector<2x8x32xbf16> to vector<1x8x8xbf16>
    %214 = vector.shape_cast %213 : vector<1x8x8xbf16> to vector<8x8xbf16>
    %215 = vector.extract_strided_slice %26 {offsets = [1, 0, 24], sizes = [1, 8, 8], strides = [1, 1, 1]} : vector<2x8x32xbf16> to vector<1x8x8xbf16>
    %216 = vector.shape_cast %215 : vector<1x8x8xbf16> to vector<8x8xbf16>
    %217 = vector.extract_strided_slice %28 {offsets = [1, 0, 24], sizes = [1, 8, 8], strides = [1, 1, 1]} : vector<2x8x32xbf16> to vector<1x8x8xbf16>
    %218 = vector.shape_cast %217 : vector<1x8x8xbf16> to vector<8x8xbf16>
    %cst_90 = arith.constant dense<0.000000e+00> : vector<8x8xf32>
    %219 = tpu.matmul %214, %216, %cst_90 {dimension_numbers = #tpu.dot_dimension_numbers<[1], [1], [0], [0], [0, 0, 1, 0], [], []>} : vector<8x8xbf16>, vector<8x8xbf16>, vector<8x8xf32> -> vector<8x8xf32>
    %cst_91 = arith.constant dense<0xFF800000> : vector<8xf32>
    %220 = vector.multi_reduction <maximumf>, %219, %cst_91 [1] : vector<8x8xf32> to vector<8xf32>
    %221 = vector.shape_cast %220 : vector<8xf32> to vector<8x1xf32>
    %222 = vector.broadcast %221 : vector<8x1xf32> to vector<8x8xf32>
    %223 = arith.subf %219, %222 : vector<8x8xf32>
    %224 = math.exp %223 : vector<8x8xf32>
    %cst_92 = arith.constant dense<0.000000e+00> : vector<8xf32>
    %225 = vector.multi_reduction <add>, %224, %cst_92 [1] : vector<8x8xf32> to vector<8xf32>
    %226 = vector.shape_cast %225 : vector<8xf32> to vector<8x1xf32>
    %227 = tpu.reciprocal %226 {approx = true} : vector<8x1xf32> -> vector<8x1xf32>
    %228 = vector.broadcast %227 : vector<8x1xf32> to vector<8x8xf32>
    %229 = arith.mulf %224, %228 : vector<8x8xf32>
    %c1_93 = arith.constant 1 : index
    %c3_94 = arith.constant 3 : index
    %c0_95 = arith.constant 0 : index
    %c0_96 = arith.constant 0 : index
    %230 = vector.load %arg19[%c1_93, %c3_94, %c0_95, %c0_96] : memref<2x4x8x8xf32, #tpu.memory_space<vmem>>, vector<1x1x8x8xf32>
    %231 = vector.shape_cast %230 : vector<1x1x8x8xf32> to vector<8x8xf32>
    %232 = vector.shape_cast %229 : vector<8x8xf32> to vector<1x1x8x8xf32>
    tpu.vector_store %arg19[%c1_93, %c3_94, %c0_95, %c0_96], %232 {strides = array<i32>} : memref<2x4x8x8xf32, #tpu.memory_space<vmem>>, vector<1x1x8x8xf32>,
    %233 = arith.truncf %229 : vector<8x8xf32> to vector<8x8xbf16>
    %cst_97 = arith.constant dense<0.000000e+00> : vector<8x8xf32>
    %234 = tpu.matmul %233, %218, %cst_97 {dimension_numbers = #tpu.dot_dimension_numbers<[1], [0], [0], [1], [0, 0, 1, 1], [], []>} : vector<8x8xbf16>, vector<8x8xbf16>, vector<8x8xf32> -> vector<8x8xf32>
    %235 = arith.truncf %234 : vector<8x8xf32> to vector<8x8xbf16>
    %c24_98 = arith.constant 24 : index
    %c0_99 = arith.constant 0 : index
    %236 = vector.load %arg8[%c24_98, %c0_99] : memref<32x32xbf16, #tpu.memory_space<vmem>>, vector<8x32xbf16>
    %cst_100 = arith.constant dense<0.000000e+00> : vector<8x32xf32>
    %237 = tpu.matmul %235, %236, %cst_100 {dimension_numbers = #tpu.dot_dimension_numbers<[1], [0], [0], [1], [0, 0, 1, 1], [], []>} : vector<8x8xbf16>, vector<8x32xbf16>, vector<8x32xf32> -> vector<8x32xf32>
    %238 = arith.addf %212, %237 : vector<8x32xf32>
    %239 = tpu.concatenate %133, %238 in 0 : vector<8x32xf32>, vector<8x32xf32> -> vector<16x32xf32>
    %c0_101 = arith.constant 0 : index
    %c0_102 = arith.constant 0 : index
    %240 = vector.load %arg9[%c0_101, %c0_102] : memref<1x32xf32, #tpu.memory_space<vmem>>, vector<1x32xf32>
    %241 = vector.broadcast %240 : vector<1x32xf32> to vector<16x32xf32>
    %242 = arith.addf %239, %241 : vector<16x32xf32>
    %243 = vector.shape_cast %1 : vector<2x8x32xf32> to vector<16x32xf32>
    %244 = arith.addf %243, %242 : vector<16x32xf32>
    %cst_103 = arith.constant dense<0.000000e+00> : vector<16xf32>
    %245 = vector.multi_reduction <add>, %244, %cst_103 [1] : vector<16x32xf32> to vector<16xf32>
    %246 = vector.shape_cast %245 : vector<16xf32> to vector<16x1xf32>
    %cst_104 = arith.constant 3.200000e+01 : f32
    %247 = vector.broadcast %cst_104 : f32 to vector<16x1xf32>
    %248 = arith.divf %246, %247 : vector<16x1xf32>
    %249 = vector.broadcast %248 : vector<16x1xf32> to vector<16x32xf32>
    %250 = arith.subf %244, %249 : vector<16x32xf32>
    %251 = arith.mulf %250, %250 : vector<16x32xf32>
    %cst_105 = arith.constant dense<0.000000e+00> : vector<16xf32>
    %252 = vector.multi_reduction <add>, %251, %cst_105 [1] : vector<16x32xf32> to vector<16xf32>
    %253 = vector.shape_cast %252 : vector<16xf32> to vector<16x1xf32>
    %cst_106 = arith.constant 3.200000e+01 : f32
    %254 = vector.broadcast %cst_106 : f32 to vector<16x1xf32>
    %255 = arith.divf %253, %254 : vector<16x1xf32>
    %256 = vector.broadcast %248 : vector<16x1xf32> to vector<16x32xf32>
    %257 = arith.subf %244, %256 : vector<16x32xf32>
    %cst_107 = arith.constant 9.99999974E-6 : f32
    %258 = vector.broadcast %cst_107 : f32 to vector<16x1xf32>
    %259 = arith.addf %255, %258 : vector<16x1xf32>
    %260 = math.rsqrt %259 : vector<16x1xf32>
    %261 = vector.broadcast %260 : vector<16x1xf32> to vector<16x32xf32>
    %262 = arith.mulf %257, %261 : vector<16x32xf32>
    %c0_108 = arith.constant 0 : index
    %c0_109 = arith.constant 0 : index
    %263 = vector.load %arg10[%c0_108, %c0_109] : memref<1x32xf32, #tpu.memory_space<vmem>>, vector<1x32xf32>
    %264 = vector.broadcast %263 : vector<1x32xf32> to vector<16x32xf32>
    %265 = arith.mulf %262, %264 : vector<16x32xf32>
    %c0_110 = arith.constant 0 : index
    %c0_111 = arith.constant 0 : index
    %266 = vector.load %arg11[%c0_110, %c0_111] : memref<1x32xf32, #tpu.memory_space<vmem>>, vector<1x32xf32>
    %267 = vector.broadcast %266 : vector<1x32xf32> to vector<16x32xf32>
    %268 = arith.addf %265, %267 : vector<16x32xf32>
    %269 = arith.truncf %268 : vector<16x32xf32> to vector<16x32xbf16>
    %c0_112 = arith.constant 0 : index
    %c0_113 = arith.constant 0 : index
    %270 = vector.load %arg14[%c0_112, %c0_113] : memref<32x128xbf16, #tpu.memory_space<vmem>>, vector<32x128xbf16>
    %cst_114 = arith.constant dense<0.000000e+00> : vector<16x128xf32>
    %271 = tpu.matmul %269, %270, %cst_114 {dimension_numbers = #tpu.dot_dimension_numbers<[1], [0], [0], [1], [0, 0, 1, 1], [], []>} : vector<16x32xbf16>, vector<32x128xbf16>, vector<16x128xf32> -> vector<16x128xf32>
    %c0_115 = arith.constant 0 : index
    %c0_116 = arith.constant 0 : index
    %272 = vector.load %arg15[%c0_115, %c0_116] : memref<1x128xf32, #tpu.memory_space<vmem>>, vector<1x128xf32>
    %273 = vector.broadcast %272 : vector<1x128xf32> to vector<16x128xf32>
    %274 = arith.addf %271, %273 : vector<16x128xf32>
    %cst_117 = arith.constant 0.000000e+00 : f32
    %275 = vector.broadcast %cst_117 : f32 to vector<16x128xf32>
    %276 = arith.maximumf %274, %275 : vector<16x128xf32>
    %277 = arith.truncf %276 : vector<16x128xf32> to vector<16x128xbf16>
    %c0_118 = arith.constant 0 : index
    %c0_119 = arith.constant 0 : index
    %278 = vector.load %arg16[%c0_118, %c0_119] : memref<128x32xbf16, #tpu.memory_space<vmem>>, vector<128x32xbf16>
    %cst_120 = arith.constant dense<0.000000e+00> : vector<16x32xf32>
    %279 = tpu.matmul %277, %278, %cst_120 {dimension_numbers = #tpu.dot_dimension_numbers<[1], [0], [0], [1], [0, 0, 1, 1], [], []>} : vector<16x128xbf16>, vector<128x32xbf16>, vector<16x32xf32> -> vector<16x32xf32>
    %c0_121 = arith.constant 0 : index
    %c0_122 = arith.constant 0 : index
    %280 = vector.load %arg17[%c0_121, %c0_122] : memref<1x32xf32, #tpu.memory_space<vmem>>, vector<1x32xf32>
    %281 = vector.broadcast %280 : vector<1x32xf32> to vector<16x32xf32>
    %282 = arith.addf %279, %281 : vector<16x32xf32>
    %283 = arith.addf %268, %282 : vector<16x32xf32>
    %cst_123 = arith.constant dense<0.000000e+00> : vector<16xf32>
    %284 = vector.multi_reduction <add>, %283, %cst_123 [1] : vector<16x32xf32> to vector<16xf32>
    %285 = vector.shape_cast %284 : vector<16xf32> to vector<16x1xf32>
    %cst_124 = arith.constant 3.200000e+01 : f32
    %286 = vector.broadcast %cst_124 : f32 to vector<16x1xf32>
    %287 = arith.divf %285, %286 : vector<16x1xf32>
    %288 = vector.broadcast %287 : vector<16x1xf32> to vector<16x32xf32>
    %289 = arith.subf %283, %288 : vector<16x32xf32>
    %290 = arith.mulf %289, %289 : vector<16x32xf32>
    %cst_125 = arith.constant dense<0.000000e+00> : vector<16xf32>
    %291 = vector.multi_reduction <add>, %290, %cst_125 [1] : vector<16x32xf32> to vector<16xf32>
    %292 = vector.shape_cast %291 : vector<16xf32> to vector<16x1xf32>
    %cst_126 = arith.constant 3.200000e+01 : f32
    %293 = vector.broadcast %cst_126 : f32 to vector<16x1xf32>
    %294 = arith.divf %292, %293 : vector<16x1xf32>
    %295 = vector.broadcast %287 : vector<16x1xf32> to vector<16x32xf32>
    %296 = arith.subf %283, %295 : vector<16x32xf32>
    %cst_127 = arith.constant 9.99999974E-6 : f32
    %297 = vector.broadcast %cst_127 : f32 to vector<16x1xf32>
    %298 = arith.addf %294, %297 : vector<16x1xf32>
    %299 = math.rsqrt %298 : vector<16x1xf32>
    %300 = vector.broadcast %299 : vector<16x1xf32> to vector<16x32xf32>
    %301 = arith.mulf %296, %300 : vector<16x32xf32>
    %c0_128 = arith.constant 0 : index
    %c0_129 = arith.constant 0 : index
    %302 = vector.load %arg12[%c0_128, %c0_129] : memref<1x32xf32, #tpu.memory_space<vmem>>, vector<1x32xf32>
    %303 = vector.broadcast %302 : vector<1x32xf32> to vector<16x32xf32>
    %304 = arith.mulf %301, %303 : vector<16x32xf32>
    %c0_130 = arith.constant 0 : index
    %c0_131 = arith.constant 0 : index
    %305 = vector.load %arg13[%c0_130, %c0_131] : memref<1x32xf32, #tpu.memory_space<vmem>>, vector<1x32xf32>
    %306 = vector.broadcast %305 : vector<1x32xf32> to vector<16x32xf32>
    %307 = arith.addf %304, %306 : vector<16x32xf32>
    %308 = vector.shape_cast %307 : vector<16x32xf32> to vector<2x8x32xf32>
    %c0_132 = arith.constant 0 : index
    %c0_133 = arith.constant 0 : index
    %c0_134 = arith.constant 0 : index
    %309 = vector.load %arg18[%c0_132, %c0_133, %c0_134] : memref<2x8x32xf32, #tpu.memory_space<vmem>>, vector<2x8x32xf32>
    tpu.vector_store %arg18[%c0_132, %c0_133, %c0_134], %308 {strides = array<i32>} : memref<2x8x32xf32, #tpu.memory_space<vmem>>, vector<2x8x32xf32>,
    return
  }
  func.func @transform_0(%arg0: i32) -> (i32, i32, i32) {
    %c0_i32 = arith.constant 0 : i32
    %c0_i32_0 = arith.constant 0 : i32
    %c0_i32_1 = arith.constant 0 : i32
    return %arg0, %c0_i32, %c0_i32_0 : i32, i32, i32
  }
  func.func @transform_1(%arg0: i32) -> (i32, i32) {
    %c0_i32 = arith.constant 0 : i32
    %c0_i32_0 = arith.constant 0 : i32
    %c0_i32_1 = arith.constant 0 : i32
    return %c0_i32, %c0_i32_0 : i32, i32
  }
  func.func @transform_2(%arg0: i32) -> (i32, i32) {
    %c0_i32 = arith.constant 0 : i32
    %c0_i32_0 = arith.constant 0 : i32
    %c0_i32_1 = arith.constant 0 : i32
    return %c0_i32, %c0_i32_0 : i32, i32
  }
  func.func @transform_3(%arg0: i32) -> (i32, i32) {
    %c0_i32 = arith.constant 0 : i32
    %c0_i32_0 = arith.constant 0 : i32
    %c0_i32_1 = arith.constant 0 : i32
    return %c0_i32, %c0_i32_0 : i32, i32
  }
  func.func @transform_4(%arg0: i32) -> (i32, i32) {
    %c0_i32 = arith.constant 0 : i32
    %c0_i32_0 = arith.constant 0 : i32
    %c0_i32_1 = arith.constant 0 : i32
    return %c0_i32, %c0_i32_0 : i32, i32
  }
  func.func @transform_5(%arg0: i32) -> (i32, i32) {
    %c0_i32 = arith.constant 0 : i32
    %c0_i32_0 = arith.constant 0 : i32
    %c0_i32_1 = arith.constant 0 : i32
    return %c0_i32, %c0_i32_0 : i32, i32
  }
  func.func @transform_6(%arg0: i32) -> (i32, i32) {
    %c0_i32 = arith.constant 0 : i32
    %c0_i32_0 = arith.constant 0 : i32
    %c0_i32_1 = arith.constant 0 : i32
    return %c0_i32, %c0_i32_0 : i32, i32
  }
  func.func @transform_7(%arg0: i32) -> (i32, i32) {
    %c0_i32 = arith.constant 0 : i32
    %c0_i32_0 = arith.constant 0 : i32
    %c0_i32_1 = arith.constant 0 : i32
    return %c0_i32, %c0_i32_0 : i32, i32
  }
  func.func @transform_8(%arg0: i32) -> (i32, i32) {
    %c0_i32 = arith.constant 0 : i32
    %c0_i32_0 = arith.constant 0 : i32
    %c0_i32_1 = arith.constant 0 : i32
    return %c0_i32, %c0_i32_0 : i32, i32
  }
  func.func @transform_9(%arg0: i32) -> (i32, i32) {
    %c0_i32 = arith.constant 0 : i32
    %c0_i32_0 = arith.constant 0 : i32
    %c0_i32_1 = arith.constant 0 : i32
    return %c0_i32, %c0_i32_0 : i32, i32
  }
  func.func @transform_10(%arg0: i32) -> (i32, i32) {
    %c0_i32 = arith.constant 0 : i32
    %c0_i32_0 = arith.constant 0 : i32
    %c0_i32_1 = arith.constant 0 : i32
    return %c0_i32, %c0_i32_0 : i32, i32
  }
  func.func @transform_11(%arg0: i32) -> (i32, i32) {
    %c0_i32 = arith.constant 0 : i32
    %c0_i32_0 = arith.constant 0 : i32
    %c0_i32_1 = arith.constant 0 : i32
    return %c0_i32, %c0_i32_0 : i32, i32
  }
  func.func @transform_12(%arg0: i32) -> (i32, i32) {
    %c0_i32 = arith.constant 0 : i32
    %c0_i32_0 = arith.constant 0 : i32
    %c0_i32_1 = arith.constant 0 : i32
    return %c0_i32, %c0_i32_0 : i32, i32
  }
  func.func @transform_13(%arg0: i32) -> (i32, i32) {
    %c0_i32 = arith.constant 0 : i32
    %c0_i32_0 = arith.constant 0 : i32
    %c0_i32_1 = arith.constant 0 : i32
    return %c0_i32, %c0_i32_0 : i32, i32
  }
  func.func @transform_14(%arg0: i32) -> (i32, i32) {
    %c0_i32 = arith.constant 0 : i32
    %c0_i32_0 = arith.constant 0 : i32
    %c0_i32_1 = arith.constant 0 : i32
    return %c0_i32, %c0_i32_0 : i32, i32
  }
  func.func @transform_15(%arg0: i32) -> (i32, i32) {
    %c0_i32 = arith.constant 0 : i32
    %c0_i32_0 = arith.constant 0 : i32
    %c0_i32_1 = arith.constant 0 : i32
    return %c0_i32, %c0_i32_0 : i32, i32
  }
  func.func @transform_16(%arg0: i32) -> (i32, i32) {
    %c0_i32 = arith.constant 0 : i32
    %c0_i32_0 = arith.constant 0 : i32
    %c0_i32_1 = arith.constant 0 : i32
    return %c0_i32, %c0_i32_0 : i32, i32
  }
  func.func @transform_17(%arg0: i32) -> (i32, i32, i32) {
    %c0_i32 = arith.constant 0 : i32
    %c0_i32_0 = arith.constant 0 : i32
    %c0_i32_1 = arith.constant 0 : i32
    return %arg0, %c0_i32, %c0_i32_0 : i32, i32, i32
  }
  func.func @transform_18(%arg0: i32) -> (i32, i32, i32, i32) {
    %c0_i32 = arith.constant 0 : i32
    %c0_i32_0 = arith.constant 0 : i32
    %c0_i32_1 = arith.constant 0 : i32
    %c0_i32_2 = arith.constant 0 : i32
    return %arg0, %c0_i32, %c0_i32_0, %c0_i32_1 : i32, i32, i32, i32
  }
}

module attributes {stable_mosaic.version = 11 : i64} {
  func.func @_encoder_layer_kernel(%arg0: i32, %arg1: memref<2x8x64xf32, #tpu.memory_space<vmem>>, %arg2: memref<64x32xbf16, #tpu.memory_space<vmem>>, %arg3: memref<1x32xf32, #tpu.memory_space<vmem>>, %arg4: memref<64x32xbf16, #tpu.memory_space<vmem>>, %arg5: memref<1x32xf32, #tpu.memory_space<vmem>>, %arg6: memref<32x32xbf16, #tpu.memory_space<vmem>>, %arg7: memref<1x32xf32, #tpu.memory_space<vmem>>, %arg8: memref<32x32xbf16, #tpu.memory_space<vmem>>, %arg9: memref<1x32xf32, #tpu.memory_space<vmem>>, %arg10: memref<1x32xf32, #tpu.memory_space<vmem>>, %arg11: memref<1x32xf32, #tpu.memory_space<vmem>>, %arg12: memref<1x32xf32, #tpu.memory_space<vmem>>, %arg13: memref<1x32xf32, #tpu.memory_space<vmem>>, %arg14: memref<32x128xbf16, #tpu.memory_space<vmem>>, %arg15: memref<1x128xf32, #tpu.memory_space<vmem>>, %arg16: memref<128x32xbf16, #tpu.memory_space<vmem>>, %arg17: memref<1x32xf32, #tpu.memory_space<vmem>>, %arg18: memref<2x8x32xf32, #tpu.memory_space<vmem>>, %arg19: memref<2x4x8x8xf32, #tpu.memory_space<vmem>>) attributes {dimension_semantics = [#tpu.dimension_semantics<parallel>], iteration_bounds = array<i64: 1>, scalar_prefetch = 0 : i64, scratch_operands = 0 : i64, tpu.core_type = #tpu.core_type<tc>, window_params = [{transform_indices = @transform_0, window_bounds = array<i64: 2, 8, 64>}, {pipeline_mode = #tpu.pipeline_mode<synchronous>, transform_indices = @transform_1, window_bounds = array<i64: 64, 32>}, {pipeline_mode = #tpu.pipeline_mode<synchronous>, transform_indices = @transform_2, window_bounds = array<i64: 1, 32>}, {pipeline_mode = #tpu.pipeline_mode<synchronous>, transform_indices = @transform_3, window_bounds = array<i64: 64, 32>}, {pipeline_mode = #tpu.pipeline_mode<synchronous>, transform_indices = @transform_4, window_bounds = array<i64: 1, 32>}, {pipeline_mode = #tpu.pipeline_mode<synchronous>, transform_indices = @transform_5, window_bounds = array<i64: 32, 32>}, {pipeline_mode = #tpu.pipeline_mode<synchronous>, transform_indices = @transform_6, window_bounds = array<i64: 1, 32>}, {pipeline_mode = #tpu.pipeline_mode<synchronous>, transform_indices = @transform_7, window_bounds = array<i64: 32, 32>}, {pipeline_mode = #tpu.pipeline_mode<synchronous>, transform_indices = @transform_8, window_bounds = array<i64: 1, 32>}, {pipeline_mode = #tpu.pipeline_mode<synchronous>, transform_indices = @transform_9, window_bounds = array<i64: 1, 32>}, {pipeline_mode = #tpu.pipeline_mode<synchronous>, transform_indices = @transform_10, window_bounds = array<i64: 1, 32>}, {pipeline_mode = #tpu.pipeline_mode<synchronous>, transform_indices = @transform_11, window_bounds = array<i64: 1, 32>}, {pipeline_mode = #tpu.pipeline_mode<synchronous>, transform_indices = @transform_12, window_bounds = array<i64: 1, 32>}, {pipeline_mode = #tpu.pipeline_mode<synchronous>, transform_indices = @transform_13, window_bounds = array<i64: 32, 128>}, {pipeline_mode = #tpu.pipeline_mode<synchronous>, transform_indices = @transform_14, window_bounds = array<i64: 1, 128>}, {pipeline_mode = #tpu.pipeline_mode<synchronous>, transform_indices = @transform_15, window_bounds = array<i64: 128, 32>}, {pipeline_mode = #tpu.pipeline_mode<synchronous>, transform_indices = @transform_16, window_bounds = array<i64: 1, 32>}, {transform_indices = @transform_17, window_bounds = array<i64: 2, 8, 32>}, {transform_indices = @transform_18, window_bounds = array<i64: 2, 4, 8, 8>}]} {
    %c0 = arith.constant 0 : index
    %c0_0 = arith.constant 0 : index
    %c0_1 = arith.constant 0 : index
    %0 = vector.load %arg1[%c0, %c0_0, %c0_1] : memref<2x8x64xf32, #tpu.memory_space<vmem>>, vector<2x8x64xf32>
    %1 = vector.extract_strided_slice %0 {offsets = [0, 0, 0], sizes = [2, 8, 32], strides = [1, 1, 1]} : vector<2x8x64xf32> to vector<2x8x32xf32>
    %2 = vector.shape_cast %0 : vector<2x8x64xf32> to vector<16x64xf32>
    %3 = arith.truncf %2 : vector<16x64xf32> to vector<16x64xbf16>
    %4 = vector.shape_cast %1 : vector<2x8x32xf32> to vector<16x32xf32>
    %5 = arith.truncf %4 : vector<16x32xf32> to vector<16x32xbf16>
    %c0_2 = arith.constant 0 : index
    %c0_3 = arith.constant 0 : index
    %6 = vector.load %arg2[%c0_2, %c0_3] : memref<64x32xbf16, #tpu.memory_space<vmem>>, vector<64x32xbf16>
    %cst = arith.constant dense<0.000000e+00> : vector<16x32xf32>
    %7 = tpu.matmul %3, %6, %cst {dimension_numbers = #tpu.dot_dimension_numbers<[1], [0], [0], [1], [0, 0, 1, 1], [], []>} : vector<16x64xbf16>, vector<64x32xbf16>, vector<16x32xf32> -> vector<16x32xf32>
    %c0_4 = arith.constant 0 : index
    %c0_5 = arith.constant 0 : index
    %8 = vector.load %arg3[%c0_4, %c0_5] : memref<1x32xf32, #tpu.memory_space<vmem>>, vector<1x32xf32>
    %9 = vector.broadcast %8 : vector<1x32xf32> to vector<16x32xf32>
    %10 = arith.addf %7, %9 : vector<16x32xf32>
    %cst_6 = arith.constant 0.353553385 : f32
    %11 = vector.broadcast %cst_6 : f32 to vector<16x32xf32>
    %12 = arith.mulf %10, %11 : vector<16x32xf32>
    %c0_7 = arith.constant 0 : index
    %c0_8 = arith.constant 0 : index
    %13 = vector.load %arg4[%c0_7, %c0_8] : memref<64x32xbf16, #tpu.memory_space<vmem>>, vector<64x32xbf16>
    %cst_9 = arith.constant dense<0.000000e+00> : vector<16x32xf32>
    %14 = tpu.matmul %3, %13, %cst_9 {dimension_numbers = #tpu.dot_dimension_numbers<[1], [0], [0], [1], [0, 0, 1, 1], [], []>} : vector<16x64xbf16>, vector<64x32xbf16>, vector<16x32xf32> -> vector<16x32xf32>
    %c0_10 = arith.constant 0 : index
    %c0_11 = arith.constant 0 : index
    %15 = vector.load %arg5[%c0_10, %c0_11] : memref<1x32xf32, #tpu.memory_space<vmem>>, vector<1x32xf32>
    %16 = vector.broadcast %15 : vector<1x32xf32> to vector<16x32xf32>
    %17 = arith.addf %14, %16 : vector<16x32xf32>
    %c0_12 = arith.constant 0 : index
    %c0_13 = arith.constant 0 : index
    %18 = vector.load %arg6[%c0_12, %c0_13] : memref<32x32xbf16, #tpu.memory_space<vmem>>, vector<32x32xbf16>
    %cst_14 = arith.constant dense<0.000000e+00> : vector<16x32xf32>
    %19 = tpu.matmul %5, %18, %cst_14 {dimension_numbers = #tpu.dot_dimension_numbers<[1], [0], [0], [1], [0, 0, 1, 1], [], []>} : vector<16x32xbf16>, vector<32x32xbf16>, vector<16x32xf32> -> vector<16x32xf32>
    %c0_15 = arith.constant 0 : index
    %c0_16 = arith.constant 0 : index
    %20 = vector.load %arg7[%c0_15, %c0_16] : memref<1x32xf32, #tpu.memory_space<vmem>>, vector<1x32xf32>
    %21 = vector.broadcast %20 : vector<1x32xf32> to vector<16x32xf32>
    %22 = arith.addf %19, %21 : vector<16x32xf32>
    %23 = arith.truncf %12 : vector<16x32xf32> to vector<16x32xbf16>
    %24 = vector.shape_cast %23 : vector<16x32xbf16> to vector<2x8x32xbf16>
    %25 = arith.truncf %17 : vector<16x32xf32> to vector<16x32xbf16>
    %26 = vector.shape_cast %25 : vector<16x32xbf16> to vector<2x8x32xbf16>
    %27 = arith.truncf %22 : vector<16x32xf32> to vector<16x32xbf16>
    %28 = vector.shape_cast %27 : vector<16x32xbf16> to vector<2x8x32xbf16>
    %cst_17 = arith.constant 0.000000e+00 : f32
    %29 = vector.broadcast %cst_17 : f32 to vector<8x32xf32>
    %30 = vector.extract_strided_slice %24 {offsets = [0, 0, 0], sizes = [1, 8, 8], strides = [1, 1, 1]} : vector<2x8x32xbf16> to vector<1x8x8xbf16>
    %31 = vector.shape_cast %30 : vector<1x8x8xbf16> to vector<8x8xbf16>
    %32 = vector.extract_strided_slice %26 {offsets = [0, 0, 0], sizes = [1, 8, 8], strides = [1, 1, 1]} : vector<2x8x32xbf16> to vector<1x8x8xbf16>
    %33 = vector.shape_cast %32 : vector<1x8x8xbf16> to vector<8x8xbf16>
    %34 = vector.extract_strided_slice %28 {offsets = [0, 0, 0], sizes = [1, 8, 8], strides = [1, 1, 1]} : vector<2x8x32xbf16> to vector<1x8x8xbf16>
    %35 = vector.shape_cast %34 : vector<1x8x8xbf16> to vector<8x8xbf16>
    %cst_18 = arith.constant dense<0.000000e+00> : vector<8x8xf32>
    %36 = tpu.matmul %31, %33, %cst_18 {dimension_numbers = #tpu.dot_dimension_numbers<[1], [1], [0], [0], [0, 0, 1, 0], [], []>} : vector<8x8xbf16>, vector<8x8xbf16>, vector<8x8xf32> -> vector<8x8xf32>
    %cst_19 = arith.constant dense<0xFF800000> : vector<8xf32>
    %37 = vector.multi_reduction <maximumf>, %36, %cst_19 [1] : vector<8x8xf32> to vector<8xf32>
    %38 = vector.shape_cast %37 : vector<8xf32> to vector<8x1xf32>
    %39 = vector.broadcast %38 : vector<8x1xf32> to vector<8x8xf32>
    %40 = arith.subf %36, %39 : vector<8x8xf32>
    %41 = math.exp %40 : vector<8x8xf32>
    %cst_20 = arith.constant dense<0.000000e+00> : vector<8xf32>
    %42 = vector.multi_reduction <add>, %41, %cst_20 [1] : vector<8x8xf32> to vector<8xf32>
    %43 = vector.shape_cast %42 : vector<8xf32> to vector<8x1xf32>
    %44 = tpu.reciprocal %43 {approx = true} : vector<8x1xf32> -> vector<8x1xf32>
    %45 = vector.broadcast %44 : vector<8x1xf32> to vector<8x8xf32>
    %46 = arith.mulf %41, %45 : vector<8x8xf32>
    %c0_21 = arith.constant 0 : index
    %c0_22 = arith.constant 0 : index
    %c0_23 = arith.constant 0 : index
    %c0_24 = arith.constant 0 : index
    %47 = vector.load %arg19[%c0_21, %c0_22, %c0_23, %c0_24] : memref<2x4x8x8xf32, #tpu.memory_space<vmem>>, vector<1x1x8x8xf32>
    %48 = vector.shape_cast %47 : vector<1x1x8x8xf32> to vector<8x8xf32>
    %49 = vector.shape_cast %46 : vector<8x8xf32> to vector<1x1x8x8xf32>
    tpu.vector_store %arg19[%c0_21, %c0_22, %c0_23, %c0_24], %49 {strides = array<i32>} : memref<2x4x8x8xf32, #tpu.memory_space<vmem>>, vector<1x1x8x8xf32>,
    %50 = arith.truncf %46 : vector<8x8xf32> to vector<8x8xbf16>
    %cst_25 = arith.constant dense<0.000000e+00> : vector<8x8xf32>
    %51 = tpu.matmul %50, %35, %cst_25 {dimension_numbers = #tpu.dot_dimension_numbers<[1], [0], [0], [1], [0, 0, 1, 1], [], []>} : vector<8x8xbf16>, vector<8x8xbf16>, vector<8x8xf32> -> vector<8x8xf32>
    %52 = arith.truncf %51 : vector<8x8xf32> to vector<8x8xbf16>
    %c0_26 = arith.constant 0 : index
    %c0_27 = arith.constant 0 : index
    %53 = vector.load %arg8[%c0_26, %c0_27] : memref<32x32xbf16, #tpu.memory_space<vmem>>, vector<8x32xbf16>
    %cst_28 = arith.constant dense<0.000000e+00> : vector<8x32xf32>
    %54 = tpu.matmul %52, %53, %cst_28 {dimension_numbers = #tpu.dot_dimension_numbers<[1], [0], [0], [1], [0, 0, 1, 1], [], []>} : vector<8x8xbf16>, vector<8x32xbf16>, vector<8x32xf32> -> vector<8x32xf32>
    %55 = arith.addf %29, %54 : vector<8x32xf32>
    %56 = vector.extract_strided_slice %24 {offsets = [0, 0, 8], sizes = [1, 8, 8], strides = [1, 1, 1]} : vector<2x8x32xbf16> to vector<1x8x8xbf16>
    %57 = vector.shape_cast %56 : vector<1x8x8xbf16> to vector<8x8xbf16>
    %58 = vector.extract_strided_slice %26 {offsets = [0, 0, 8], sizes = [1, 8, 8], strides = [1, 1, 1]} : vector<2x8x32xbf16> to vector<1x8x8xbf16>
    %59 = vector.shape_cast %58 : vector<1x8x8xbf16> to vector<8x8xbf16>
    %60 = vector.extract_strided_slice %28 {offsets = [0, 0, 8], sizes = [1, 8, 8], strides = [1, 1, 1]} : vector<2x8x32xbf16> to vector<1x8x8xbf16>
    %61 = vector.shape_cast %60 : vector<1x8x8xbf16> to vector<8x8xbf16>
    %cst_29 = arith.constant dense<0.000000e+00> : vector<8x8xf32>
    %62 = tpu.matmul %57, %59, %cst_29 {dimension_numbers = #tpu.dot_dimension_numbers<[1], [1], [0], [0], [0, 0, 1, 0], [], []>} : vector<8x8xbf16>, vector<8x8xbf16>, vector<8x8xf32> -> vector<8x8xf32>
    %cst_30 = arith.constant dense<0xFF800000> : vector<8xf32>
    %63 = vector.multi_reduction <maximumf>, %62, %cst_30 [1] : vector<8x8xf32> to vector<8xf32>
    %64 = vector.shape_cast %63 : vector<8xf32> to vector<8x1xf32>
    %65 = vector.broadcast %64 : vector<8x1xf32> to vector<8x8xf32>
    %66 = arith.subf %62, %65 : vector<8x8xf32>
    %67 = math.exp %66 : vector<8x8xf32>
    %cst_31 = arith.constant dense<0.000000e+00> : vector<8xf32>
    %68 = vector.multi_reduction <add>, %67, %cst_31 [1] : vector<8x8xf32> to vector<8xf32>
    %69 = vector.shape_cast %68 : vector<8xf32> to vector<8x1xf32>
    %70 = tpu.reciprocal %69 {approx = true} : vector<8x1xf32> -> vector<8x1xf32>
    %71 = vector.broadcast %70 : vector<8x1xf32> to vector<8x8xf32>
    %72 = arith.mulf %67, %71 : vector<8x8xf32>
    %c0_32 = arith.constant 0 : index
    %c1 = arith.constant 1 : index
    %c0_33 = arith.constant 0 : index
    %c0_34 = arith.constant 0 : index
    %73 = vector.load %arg19[%c0_32, %c1, %c0_33, %c0_34] : memref<2x4x8x8xf32, #tpu.memory_space<vmem>>, vector<1x1x8x8xf32>
    %74 = vector.shape_cast %73 : vector<1x1x8x8xf32> to vector<8x8xf32>
    %75 = vector.shape_cast %72 : vector<8x8xf32> to vector<1x1x8x8xf32>
    tpu.vector_store %arg19[%c0_32, %c1, %c0_33, %c0_34], %75 {strides = array<i32>} : memref<2x4x8x8xf32, #tpu.memory_space<vmem>>, vector<1x1x8x8xf32>,
    %76 = arith.truncf %72 : vector<8x8xf32> to vector<8x8xbf16>
    %cst_35 = arith.constant dense<0.000000e+00> : vector<8x8xf32>
    %77 = tpu.matmul %76, %61, %cst_35 {dimension_numbers = #tpu.dot_dimension_numbers<[1], [0], [0], [1], [0, 0, 1, 1], [], []>} : vector<8x8xbf16>, vector<8x8xbf16>, vector<8x8xf32> -> vector<8x8xf32>
    %78 = arith.truncf %77 : vector<8x8xf32> to vector<8x8xbf16>
    %c8 = arith.constant 8 : index
    %c0_36 = arith.constant 0 : index
    %79 = vector.load %arg8[%c8, %c0_36] : memref<32x32xbf16, #tpu.memory_space<vmem>>, vector<8x32xbf16>
    %cst_37 = arith.constant dense<0.000000e+00> : vector<8x32xf32>
    %80 = tpu.matmul %78, %79, %cst_37 {dimension_numbers = #tpu.dot_dimension_numbers<[1], [0], [0], [1], [0, 0, 1, 1], [], []>} : vector<8x8xbf16>, vector<8x32xbf16>, vector<8x32xf32> -> vector<8x32xf32>
    %81 = arith.addf %55, %80 : vector<8x32xf32>
    %82 = vector.extract_strided_slice %24 {offsets = [0, 0, 16], sizes = [1, 8, 8], strides = [1, 1, 1]} : vector<2x8x32xbf16> to vector<1x8x8xbf16>
    %83 = vector.shape_cast %82 : vector<1x8x8xbf16> to vector<8x8xbf16>
    %84 = vector.extract_strided_slice %26 {offsets = [0, 0, 16], sizes = [1, 8, 8], strides = [1, 1, 1]} : vector<2x8x32xbf16> to vector<1x8x8xbf16>
    %85 = vector.shape_cast %84 : vector<1x8x8xbf16> to vector<8x8xbf16>
    %86 = vector.extract_strided_slice %28 {offsets = [0, 0, 16], sizes = [1, 8, 8], strides = [1, 1, 1]} : vector<2x8x32xbf16> to vector<1x8x8xbf16>
    %87 = vector.shape_cast %86 : vector<1x8x8xbf16> to vector<8x8xbf16>
    %cst_38 = arith.constant dense<0.000000e+00> : vector<8x8xf32>
    %88 = tpu.matmul %83, %85, %cst_38 {dimension_numbers = #tpu.dot_dimension_numbers<[1], [1], [0], [0], [0, 0, 1, 0], [], []>} : vector<8x8xbf16>, vector<8x8xbf16>, vector<8x8xf32> -> vector<8x8xf32>
    %cst_39 = arith.constant dense<0xFF800000> : vector<8xf32>
    %89 = vector.multi_reduction <maximumf>, %88, %cst_39 [1] : vector<8x8xf32> to vector<8xf32>
    %90 = vector.shape_cast %89 : vector<8xf32> to vector<8x1xf32>
    %91 = vector.broadcast %90 : vector<8x1xf32> to vector<8x8xf32>
    %92 = arith.subf %88, %91 : vector<8x8xf32>
    %93 = math.exp %92 : vector<8x8xf32>
    %cst_40 = arith.constant dense<0.000000e+00> : vector<8xf32>
    %94 = vector.multi_reduction <add>, %93, %cst_40 [1] : vector<8x8xf32> to vector<8xf32>
    %95 = vector.shape_cast %94 : vector<8xf32> to vector<8x1xf32>
    %96 = tpu.reciprocal %95 {approx = true} : vector<8x1xf32> -> vector<8x1xf32>
    %97 = vector.broadcast %96 : vector<8x1xf32> to vector<8x8xf32>
    %98 = arith.mulf %93, %97 : vector<8x8xf32>
    %c0_41 = arith.constant 0 : index
    %c2 = arith.constant 2 : index
    %c0_42 = arith.constant 0 : index
    %c0_43 = arith.constant 0 : index
    %99 = vector.load %arg19[%c0_41, %c2, %c0_42, %c0_43] : memref<2x4x8x8xf32, #tpu.memory_space<vmem>>, vector<1x1x8x8xf32>
    %100 = vector.shape_cast %99 : vector<1x1x8x8xf32> to vector<8x8xf32>
    %101 = vector.shape_cast %98 : vector<8x8xf32> to vector<1x1x8x8xf32>
    tpu.vector_store %arg19[%c0_41, %c2, %c0_42, %c0_43], %101 {strides = array<i32>} : memref<2x4x8x8xf32, #tpu.memory_space<vmem>>, vector<1x1x8x8xf32>,
    %102 = arith.truncf %98 : vector<8x8xf32> to vector<8x8xbf16>
    %cst_44 = arith.constant dense<0.000000e+00> : vector<8x8xf32>
    %103 = tpu.matmul %102, %87, %cst_44 {dimension_numbers = #tpu.dot_dimension_numbers<[1], [0], [0], [1], [0, 0, 1, 1], [], []>} : vector<8x8xbf16>, vector<8x8xbf16>, vector<8x8xf32> -> vector<8x8xf32>
    %104 = arith.truncf %103 : vector<8x8xf32> to vector<8x8xbf16>
    %c16 = arith.constant 16 : index
    %c0_45 = arith.constant 0 : index
    %105 = vector.load %arg8[%c16, %c0_45] : memref<32x32xbf16, #tpu.memory_space<vmem>>, vector<8x32xbf16>
    %cst_46 = arith.constant dense<0.000000e+00> : vector<8x32xf32>
    %106 = tpu.matmul %104, %105, %cst_46 {dimension_numbers = #tpu.dot_dimension_numbers<[1], [0], [0], [1], [0, 0, 1, 1], [], []>} : vector<8x8xbf16>, vector<8x32xbf16>, vector<8x32xf32> -> vector<8x32xf32>
    %107 = arith.addf %81, %106 : vector<8x32xf32>
    %108 = vector.extract_strided_slice %24 {offsets = [0, 0, 24], sizes = [1, 8, 8], strides = [1, 1, 1]} : vector<2x8x32xbf16> to vector<1x8x8xbf16>
    %109 = vector.shape_cast %108 : vector<1x8x8xbf16> to vector<8x8xbf16>
    %110 = vector.extract_strided_slice %26 {offsets = [0, 0, 24], sizes = [1, 8, 8], strides = [1, 1, 1]} : vector<2x8x32xbf16> to vector<1x8x8xbf16>
    %111 = vector.shape_cast %110 : vector<1x8x8xbf16> to vector<8x8xbf16>
    %112 = vector.extract_strided_slice %28 {offsets = [0, 0, 24], sizes = [1, 8, 8], strides = [1, 1, 1]} : vector<2x8x32xbf16> to vector<1x8x8xbf16>
    %113 = vector.shape_cast %112 : vector<1x8x8xbf16> to vector<8x8xbf16>
    %cst_47 = arith.constant dense<0.000000e+00> : vector<8x8xf32>
    %114 = tpu.matmul %109, %111, %cst_47 {dimension_numbers = #tpu.dot_dimension_numbers<[1], [1], [0], [0], [0, 0, 1, 0], [], []>} : vector<8x8xbf16>, vector<8x8xbf16>, vector<8x8xf32> -> vector<8x8xf32>
    %cst_48 = arith.constant dense<0xFF800000> : vector<8xf32>
    %115 = vector.multi_reduction <maximumf>, %114, %cst_48 [1] : vector<8x8xf32> to vector<8xf32>
    %116 = vector.shape_cast %115 : vector<8xf32> to vector<8x1xf32>
    %117 = vector.broadcast %116 : vector<8x1xf32> to vector<8x8xf32>
    %118 = arith.subf %114, %117 : vector<8x8xf32>
    %119 = math.exp %118 : vector<8x8xf32>
    %cst_49 = arith.constant dense<0.000000e+00> : vector<8xf32>
    %120 = vector.multi_reduction <add>, %119, %cst_49 [1] : vector<8x8xf32> to vector<8xf32>
    %121 = vector.shape_cast %120 : vector<8xf32> to vector<8x1xf32>
    %122 = tpu.reciprocal %121 {approx = true} : vector<8x1xf32> -> vector<8x1xf32>
    %123 = vector.broadcast %122 : vector<8x1xf32> to vector<8x8xf32>
    %124 = arith.mulf %119, %123 : vector<8x8xf32>
    %c0_50 = arith.constant 0 : index
    %c3 = arith.constant 3 : index
    %c0_51 = arith.constant 0 : index
    %c0_52 = arith.constant 0 : index
    %125 = vector.load %arg19[%c0_50, %c3, %c0_51, %c0_52] : memref<2x4x8x8xf32, #tpu.memory_space<vmem>>, vector<1x1x8x8xf32>
    %126 = vector.shape_cast %125 : vector<1x1x8x8xf32> to vector<8x8xf32>
    %127 = vector.shape_cast %124 : vector<8x8xf32> to vector<1x1x8x8xf32>
    tpu.vector_store %arg19[%c0_50, %c3, %c0_51, %c0_52], %127 {strides = array<i32>} : memref<2x4x8x8xf32, #tpu.memory_space<vmem>>, vector<1x1x8x8xf32>,
    %128 = arith.truncf %124 : vector<8x8xf32> to vector<8x8xbf16>
    %cst_53 = arith.constant dense<0.000000e+00> : vector<8x8xf32>
    %129 = tpu.matmul %128, %113, %cst_53 {dimension_numbers = #tpu.dot_dimension_numbers<[1], [0], [0], [1], [0, 0, 1, 1], [], []>} : vector<8x8xbf16>, vector<8x8xbf16>, vector<8x8xf32> -> vector<8x8xf32>
    %130 = arith.truncf %129 : vector<8x8xf32> to vector<8x8xbf16>
    %c24 = arith.constant 24 : index
    %c0_54 = arith.constant 0 : index
    %131 = vector.load %arg8[%c24, %c0_54] : memref<32x32xbf16, #tpu.memory_space<vmem>>, vector<8x32xbf16>
    %cst_55 = arith.constant dense<0.000000e+00> : vector<8x32xf32>
    %132 = tpu.matmul %130, %131, %cst_55 {dimension_numbers = #tpu.dot_dimension_numbers<[1], [0], [0], [1], [0, 0, 1, 1], [], []>} : vector<8x8xbf16>, vector<8x32xbf16>, vector<8x32xf32> -> vector<8x32xf32>
    %133 = arith.addf %107, %132 : vector<8x32xf32>
    %cst_56 = arith.constant 0.000000e+00 : f32
    %134 = vector.broadcast %cst_56 : f32 to vector<8x32xf32>
    %135 = vector.extract_strided_slice %24 {offsets = [1, 0, 0], sizes = [1, 8, 8], strides = [1, 1, 1]} : vector<2x8x32xbf16> to vector<1x8x8xbf16>
    %136 = vector.shape_cast %135 : vector<1x8x8xbf16> to vector<8x8xbf16>
    %137 = vector.extract_strided_slice %26 {offsets = [1, 0, 0], sizes = [1, 8, 8], strides = [1, 1, 1]} : vector<2x8x32xbf16> to vector<1x8x8xbf16>
    %138 = vector.shape_cast %137 : vector<1x8x8xbf16> to vector<8x8xbf16>
    %139 = vector.extract_strided_slice %28 {offsets = [1, 0, 0], sizes = [1, 8, 8], strides = [1, 1, 1]} : vector<2x8x32xbf16> to vector<1x8x8xbf16>
    %140 = vector.shape_cast %139 : vector<1x8x8xbf16> to vector<8x8xbf16>
    %cst_57 = arith.constant dense<0.000000e+00> : vector<8x8xf32>
    %141 = tpu.matmul %136, %138, %cst_57 {dimension_numbers = #tpu.dot_dimension_numbers<[1], [1], [0], [0], [0, 0, 1, 0], [], []>} : vector<8x8xbf16>, vector<8x8xbf16>, vector<8x8xf32> -> vector<8x8xf32>
    %cst_58 = arith.constant dense<0xFF800000> : vector<8xf32>
    %142 = vector.multi_reduction <maximumf>, %141, %cst_58 [1] : vector<8x8xf32> to vector<8xf32>
    %143 = vector.shape_cast %142 : vector<8xf32> to vector<8x1xf32>
    %144 = vector.broadcast %143 : vector<8x1xf32> to vector<8x8xf32>
    %145 = arith.subf %141, %144 : vector<8x8xf32>
    %146 = math.exp %145 : vector<8x8xf32>
    %cst_59 = arith.constant dense<0.000000e+00> : vector<8xf32>
    %147 = vector.multi_reduction <add>, %146, %cst_59 [1] : vector<8x8xf32> to vector<8xf32>
    %148 = vector.shape_cast %147 : vector<8xf32> to vector<8x1xf32>
    %149 = tpu.reciprocal %148 {approx = true} : vector<8x1xf32> -> vector<8x1xf32>
    %150 = vector.broadcast %149 : vector<8x1xf32> to vector<8x8xf32>
    %151 = arith.mulf %146, %150 : vector<8x8xf32>
    %c1_60 = arith.constant 1 : index
    %c0_61 = arith.constant 0 : index
    %c0_62 = arith.constant 0 : index
    %c0_63 = arith.constant 0 : index
    %152 = vector.load %arg19[%c1_60, %c0_61, %c0_62, %c0_63] : memref<2x4x8x8xf32, #tpu.memory_space<vmem>>, vector<1x1x8x8xf32>
    %153 = vector.shape_cast %152 : vector<1x1x8x8xf32> to vector<8x8xf32>
    %154 = vector.shape_cast %151 : vector<8x8xf32> to vector<1x1x8x8xf32>
    tpu.vector_store %arg19[%c1_60, %c0_61, %c0_62, %c0_63], %154 {strides = array<i32>} : memref<2x4x8x8xf32, #tpu.memory_space<vmem>>, vector<1x1x8x8xf32>,
    %155 = arith.truncf %151 : vector<8x8xf32> to vector<8x8xbf16>
    %cst_64 = arith.constant dense<0.000000e+00> : vector<8x8xf32>
    %156 = tpu.matmul %155, %140, %cst_64 {dimension_numbers = #tpu.dot_dimension_numbers<[1], [0], [0], [1], [0, 0, 1, 1], [], []>} : vector<8x8xbf16>, vector<8x8xbf16>, vector<8x8xf32> -> vector<8x8xf32>
    %157 = arith.truncf %156 : vector<8x8xf32> to vector<8x8xbf16>
    %c0_65 = arith.constant 0 : index
    %c0_66 = arith.constant 0 : index
    %158 = vector.load %arg8[%c0_65, %c0_66] : memref<32x32xbf16, #tpu.memory_space<vmem>>, vector<8x32xbf16>
    %cst_67 = arith.constant dense<0.000000e+00> : vector<8x32xf32>
    %159 = tpu.matmul %157, %158, %cst_67 {dimension_numbers = #tpu.dot_dimension_numbers<[1], [0], [0], [1], [0, 0, 1, 1], [], []>} : vector<8x8xbf16>, vector<8x32xbf16>, vector<8x32xf32> -> vector<8x32xf32>
    %160 = arith.addf %134, %159 : vector<8x32xf32>
    %161 = vector.extract_strided_slice %24 {offsets = [1, 0, 8], sizes = [1, 8, 8], strides = [1, 1, 1]} : vector<2x8x32xbf16> to vector<1x8x8xbf16>
    %162 = vector.shape_cast %161 : vector<1x8x8xbf16> to vector<8x8xbf16>
    %163 = vector.extract_strided_slice %26 {offsets = [1, 0, 8], sizes = [1, 8, 8], strides = [1, 1, 1]} : vector<2x8x32xbf16> to vector<1x8x8xbf16>
    %164 = vector.shape_cast %163 : vector<1x8x8xbf16> to vector<8x8xbf16>
    %165 = vector.extract_strided_slice %28 {offsets = [1, 0, 8], sizes = [1, 8, 8], strides = [1, 1, 1]} : vector<2x8x32xbf16> to vector<1x8x8xbf16>
    %166 = vector.shape_cast %165 : vector<1x8x8xbf16> to vector<8x8xbf16>
    %cst_68 = arith.constant dense<0.000000e+00> : vector<8x8xf32>
    %167 = tpu.matmul %162, %164, %cst_68 {dimension_numbers = #tpu.dot_dimension_numbers<[1], [1], [0], [0], [0, 0, 1, 0], [], []>} : vector<8x8xbf16>, vector<8x8xbf16>, vector<8x8xf32> -> vector<8x8xf32>
    %cst_69 = arith.constant dense<0xFF800000> : vector<8xf32>
    %168 = vector.multi_reduction <maximumf>, %167, %cst_69 [1] : vector<8x8xf32> to vector<8xf32>
    %169 = vector.shape_cast %168 : vector<8xf32> to vector<8x1xf32>
    %170 = vector.broadcast %169 : vector<8x1xf32> to vector<8x8xf32>
    %171 = arith.subf %167, %170 : vector<8x8xf32>
    %172 = math.exp %171 : vector<8x8xf32>
    %cst_70 = arith.constant dense<0.000000e+00> : vector<8xf32>
    %173 = vector.multi_reduction <add>, %172, %cst_70 [1] : vector<8x8xf32> to vector<8xf32>
    %174 = vector.shape_cast %173 : vector<8xf32> to vector<8x1xf32>
    %175 = tpu.reciprocal %174 {approx = true} : vector<8x1xf32> -> vector<8x1xf32>
    %176 = vector.broadcast %175 : vector<8x1xf32> to vector<8x8xf32>
    %177 = arith.mulf %172, %176 : vector<8x8xf32>
    %c1_71 = arith.constant 1 : index
    %c1_72 = arith.constant 1 : index
    %c0_73 = arith.constant 0 : index
    %c0_74 = arith.constant 0 : index
    %178 = vector.load %arg19[%c1_71, %c1_72, %c0_73, %c0_74] : memref<2x4x8x8xf32, #tpu.memory_space<vmem>>, vector<1x1x8x8xf32>
    %179 = vector.shape_cast %178 : vector<1x1x8x8xf32> to vector<8x8xf32>
    %180 = vector.shape_cast %177 : vector<8x8xf32> to vector<1x1x8x8xf32>
    tpu.vector_store %arg19[%c1_71, %c1_72, %c0_73, %c0_74], %180 {strides = array<i32>} : memref<2x4x8x8xf32, #tpu.memory_space<vmem>>, vector<1x1x8x8xf32>,
    %181 = arith.truncf %177 : vector<8x8xf32> to vector<8x8xbf16>
    %cst_75 = arith.constant dense<0.000000e+00> : vector<8x8xf32>
    %182 = tpu.matmul %181, %166, %cst_75 {dimension_numbers = #tpu.dot_dimension_numbers<[1], [0], [0], [1], [0, 0, 1, 1], [], []>} : vector<8x8xbf16>, vector<8x8xbf16>, vector<8x8xf32> -> vector<8x8xf32>
    %183 = arith.truncf %182 : vector<8x8xf32> to vector<8x8xbf16>
    %c8_76 = arith.constant 8 : index
    %c0_77 = arith.constant 0 : index
    %184 = vector.load %arg8[%c8_76, %c0_77] : memref<32x32xbf16, #tpu.memory_space<vmem>>, vector<8x32xbf16>
    %cst_78 = arith.constant dense<0.000000e+00> : vector<8x32xf32>
    %185 = tpu.matmul %183, %184, %cst_78 {dimension_numbers = #tpu.dot_dimension_numbers<[1], [0], [0], [1], [0, 0, 1, 1], [], []>} : vector<8x8xbf16>, vector<8x32xbf16>, vector<8x32xf32> -> vector<8x32xf32>
    %186 = arith.addf %160, %185 : vector<8x32xf32>
    %187 = vector.extract_strided_slice %24 {offsets = [1, 0, 16], sizes = [1, 8, 8], strides = [1, 1, 1]} : vector<2x8x32xbf16> to vector<1x8x8xbf16>
    %188 = vector.shape_cast %187 : vector<1x8x8xbf16> to vector<8x8xbf16>
    %189 = vector.extract_strided_slice %26 {offsets = [1, 0, 16], sizes = [1, 8, 8], strides = [1, 1, 1]} : vector<2x8x32xbf16> to vector<1x8x8xbf16>
    %190 = vector.shape_cast %189 : vector<1x8x8xbf16> to vector<8x8xbf16>
    %191 = vector.extract_strided_slice %28 {offsets = [1, 0, 16], sizes = [1, 8, 8], strides = [1, 1, 1]} : vector<2x8x32xbf16> to vector<1x8x8xbf16>
    %192 = vector.shape_cast %191 : vector<1x8x8xbf16> to vector<8x8xbf16>
    %cst_79 = arith.constant dense<0.000000e+00> : vector<8x8xf32>
    %193 = tpu.matmul %188, %190, %cst_79 {dimension_numbers = #tpu.dot_dimension_numbers<[1], [1], [0], [0], [0, 0, 1, 0], [], []>} : vector<8x8xbf16>, vector<8x8xbf16>, vector<8x8xf32> -> vector<8x8xf32>
    %cst_80 = arith.constant dense<0xFF800000> : vector<8xf32>
    %194 = vector.multi_reduction <maximumf>, %193, %cst_80 [1] : vector<8x8xf32> to vector<8xf32>
    %195 = vector.shape_cast %194 : vector<8xf32> to vector<8x1xf32>
    %196 = vector.broadcast %195 : vector<8x1xf32> to vector<8x8xf32>
    %197 = arith.subf %193, %196 : vector<8x8xf32>
    %198 = math.exp %197 : vector<8x8xf32>
    %cst_81 = arith.constant dense<0.000000e+00> : vector<8xf32>
    %199 = vector.multi_reduction <add>, %198, %cst_81 [1] : vector<8x8xf32> to vector<8xf32>
    %200 = vector.shape_cast %199 : vector<8xf32> to vector<8x1xf32>
    %201 = tpu.reciprocal %200 {approx = true} : vector<8x1xf32> -> vector<8x1xf32>
    %202 = vector.broadcast %201 : vector<8x1xf32> to vector<8x8xf32>
    %203 = arith.mulf %198, %202 : vector<8x8xf32>
    %c1_82 = arith.constant 1 : index
    %c2_83 = arith.constant 2 : index
    %c0_84 = arith.constant 0 : index
    %c0_85 = arith.constant 0 : index
    %204 = vector.load %arg19[%c1_82, %c2_83, %c0_84, %c0_85] : memref<2x4x8x8xf32, #tpu.memory_space<vmem>>, vector<1x1x8x8xf32>
    %205 = vector.shape_cast %204 : vector<1x1x8x8xf32> to vector<8x8xf32>
    %206 = vector.shape_cast %203 : vector<8x8xf32> to vector<1x1x8x8xf32>
    tpu.vector_store %arg19[%c1_82, %c2_83, %c0_84, %c0_85], %206 {strides = array<i32>} : memref<2x4x8x8xf32, #tpu.memory_space<vmem>>, vector<1x1x8x8xf32>,
    %207 = arith.truncf %203 : vector<8x8xf32> to vector<8x8xbf16>
    %cst_86 = arith.constant dense<0.000000e+00> : vector<8x8xf32>
    %208 = tpu.matmul %207, %192, %cst_86 {dimension_numbers = #tpu.dot_dimension_numbers<[1], [0], [0], [1], [0, 0, 1, 1], [], []>} : vector<8x8xbf16>, vector<8x8xbf16>, vector<8x8xf32> -> vector<8x8xf32>
    %209 = arith.truncf %208 : vector<8x8xf32> to vector<8x8xbf16>
    %c16_87 = arith.constant 16 : index
    %c0_88 = arith.constant 0 : index
    %210 = vector.load %arg8[%c16_87, %c0_88] : memref<32x32xbf16, #tpu.memory_space<vmem>>, vector<8x32xbf16>
    %cst_89 = arith.constant dense<0.000000e+00> : vector<8x32xf32>
    %211 = tpu.matmul %209, %210, %cst_89 {dimension_numbers = #tpu.dot_dimension_numbers<[1], [0], [0], [1], [0, 0, 1, 1], [], []>} : vector<8x8xbf16>, vector<8x32xbf16>, vector<8x32xf32> -> vector<8x32xf32>
    %212 = arith.addf %186, %211 : vector<8x32xf32>
    %213 = vector.extract_strided_slice %24 {offsets = [1, 0, 24], sizes = [1, 8, 8], strides = [1, 1, 1]} : vector<2x8x32xbf16> to vector<1x8x8xbf16>
    %214 = vector.shape_cast %213 : vector<1x8x8xbf16> to vector<8x8xbf16>
    %215 = vector.extract_strided_slice %26 {offsets = [1, 0, 24], sizes = [1, 8, 8], strides = [1, 1, 1]} : vector<2x8x32xbf16> to vector<1x8x8xbf16>
    %216 = vector.shape_cast %215 : vector<1x8x8xbf16> to vector<8x8xbf16>
    %217 = vector.extract_strided_slice %28 {offsets = [1, 0, 24], sizes = [1, 8, 8], strides = [1, 1, 1]} : vector<2x8x32xbf16> to vector<1x8x8xbf16>
    %218 = vector.shape_cast %217 : vector<1x8x8xbf16> to vector<8x8xbf16>
    %cst_90 = arith.constant dense<0.000000e+00> : vector<8x8xf32>
    %219 = tpu.matmul %214, %216, %cst_90 {dimension_numbers = #tpu.dot_dimension_numbers<[1], [1], [0], [0], [0, 0, 1, 0], [], []>} : vector<8x8xbf16>, vector<8x8xbf16>, vector<8x8xf32> -> vector<8x8xf32>
    %cst_91 = arith.constant dense<0xFF800000> : vector<8xf32>
    %220 = vector.multi_reduction <maximumf>, %219, %cst_91 [1] : vector<8x8xf32> to vector<8xf32>
    %221 = vector.shape_cast %220 : vector<8xf32> to vector<8x1xf32>
    %222 = vector.broadcast %221 : vector<8x1xf32> to vector<8x8xf32>
    %223 = arith.subf %219, %222 : vector<8x8xf32>
    %224 = math.exp %223 : vector<8x8xf32>
    %cst_92 = arith.constant dense<0.000000e+00> : vector<8xf32>
    %225 = vector.multi_reduction <add>, %224, %cst_92 [1] : vector<8x8xf32> to vector<8xf32>
    %226 = vector.shape_cast %225 : vector<8xf32> to vector<8x1xf32>
    %227 = tpu.reciprocal %226 {approx = true} : vector<8x1xf32> -> vector<8x1xf32>
    %228 = vector.broadcast %227 : vector<8x1xf32> to vector<8x8xf32>
    %229 = arith.mulf %224, %228 : vector<8x8xf32>
    %c1_93 = arith.constant 1 : index
    %c3_94 = arith.constant 3 : index
    %c0_95 = arith.constant 0 : index
    %c0_96 = arith.constant 0 : index
    %230 = vector.load %arg19[%c1_93, %c3_94, %c0_95, %c0_96] : memref<2x4x8x8xf32, #tpu.memory_space<vmem>>, vector<1x1x8x8xf32>
    %231 = vector.shape_cast %230 : vector<1x1x8x8xf32> to vector<8x8xf32>
    %232 = vector.shape_cast %229 : vector<8x8xf32> to vector<1x1x8x8xf32>
    tpu.vector_store %arg19[%c1_93, %c3_94, %c0_95, %c0_96], %232 {strides = array<i32>} : memref<2x4x8x8xf32, #tpu.memory_space<vmem>>, vector<1x1x8x8xf32>,
    %233 = arith.truncf %229 : vector<8x8xf32> to vector<8x8xbf16>
    %cst_97 = arith.constant dense<0.000000e+00> : vector<8x8xf32>
    %234 = tpu.matmul %233, %218, %cst_97 {dimension_numbers = #tpu.dot_dimension_numbers<[1], [0], [0], [1], [0, 0, 1, 1], [], []>} : vector<8x8xbf16>, vector<8x8xbf16>, vector<8x8xf32> -> vector<8x8xf32>
    %235 = arith.truncf %234 : vector<8x8xf32> to vector<8x8xbf16>
    %c24_98 = arith.constant 24 : index
    %c0_99 = arith.constant 0 : index
    %236 = vector.load %arg8[%c24_98, %c0_99] : memref<32x32xbf16, #tpu.memory_space<vmem>>, vector<8x32xbf16>
    %cst_100 = arith.constant dense<0.000000e+00> : vector<8x32xf32>
    %237 = tpu.matmul %235, %236, %cst_100 {dimension_numbers = #tpu.dot_dimension_numbers<[1], [0], [0], [1], [0, 0, 1, 1], [], []>} : vector<8x8xbf16>, vector<8x32xbf16>, vector<8x32xf32> -> vector<8x32xf32>
    %238 = arith.addf %212, %237 : vector<8x32xf32>
    %239 = tpu.concatenate %133, %238 in 0 : vector<8x32xf32>, vector<8x32xf32> -> vector<16x32xf32>
    %c0_101 = arith.constant 0 : index
    %c0_102 = arith.constant 0 : index
    %240 = vector.load %arg9[%c0_101, %c0_102] : memref<1x32xf32, #tpu.memory_space<vmem>>, vector<1x32xf32>
    %241 = vector.broadcast %240 : vector<1x32xf32> to vector<16x32xf32>
    %242 = arith.addf %239, %241 : vector<16x32xf32>
    %243 = vector.shape_cast %1 : vector<2x8x32xf32> to vector<16x32xf32>
    %244 = arith.addf %243, %242 : vector<16x32xf32>
    %cst_103 = arith.constant dense<0.000000e+00> : vector<16xf32>
    %245 = vector.multi_reduction <add>, %244, %cst_103 [1] : vector<16x32xf32> to vector<16xf32>
    %246 = vector.shape_cast %245 : vector<16xf32> to vector<16x1xf32>
    %cst_104 = arith.constant 3.200000e+01 : f32
    %247 = vector.broadcast %cst_104 : f32 to vector<16x1xf32>
    %248 = arith.divf %246, %247 : vector<16x1xf32>
    %249 = vector.broadcast %248 : vector<16x1xf32> to vector<16x32xf32>
    %250 = arith.subf %244, %249 : vector<16x32xf32>
    %251 = arith.mulf %250, %250 : vector<16x32xf32>
    %cst_105 = arith.constant dense<0.000000e+00> : vector<16xf32>
    %252 = vector.multi_reduction <add>, %251, %cst_105 [1] : vector<16x32xf32> to vector<16xf32>
    %253 = vector.shape_cast %252 : vector<16xf32> to vector<16x1xf32>
    %cst_106 = arith.constant 3.200000e+01 : f32
    %254 = vector.broadcast %cst_106 : f32 to vector<16x1xf32>
    %255 = arith.divf %253, %254 : vector<16x1xf32>
    %256 = vector.broadcast %248 : vector<16x1xf32> to vector<16x32xf32>
    %257 = arith.subf %244, %256 : vector<16x32xf32>
    %cst_107 = arith.constant 9.99999974E-6 : f32
    %258 = vector.broadcast %cst_107 : f32 to vector<16x1xf32>
    %259 = arith.addf %255, %258 : vector<16x1xf32>
    %260 = math.rsqrt %259 : vector<16x1xf32>
    %261 = vector.broadcast %260 : vector<16x1xf32> to vector<16x32xf32>
    %262 = arith.mulf %257, %261 : vector<16x32xf32>
    %c0_108 = arith.constant 0 : index
    %c0_109 = arith.constant 0 : index
    %263 = vector.load %arg10[%c0_108, %c0_109] : memref<1x32xf32, #tpu.memory_space<vmem>>, vector<1x32xf32>
    %264 = vector.broadcast %263 : vector<1x32xf32> to vector<16x32xf32>
    %265 = arith.mulf %262, %264 : vector<16x32xf32>
    %c0_110 = arith.constant 0 : index
    %c0_111 = arith.constant 0 : index
    %266 = vector.load %arg11[%c0_110, %c0_111] : memref<1x32xf32, #tpu.memory_space<vmem>>, vector<1x32xf32>
    %267 = vector.broadcast %266 : vector<1x32xf32> to vector<16x32xf32>
    %268 = arith.addf %265, %267 : vector<16x32xf32>
    %269 = arith.truncf %268 : vector<16x32xf32> to vector<16x32xbf16>
    %c0_112 = arith.constant 0 : index
    %c0_113 = arith.constant 0 : index
    %270 = vector.load %arg14[%c0_112, %c0_113] : memref<32x128xbf16, #tpu.memory_space<vmem>>, vector<32x128xbf16>
    %cst_114 = arith.constant dense<0.000000e+00> : vector<16x128xf32>
    %271 = tpu.matmul %269, %270, %cst_114 {dimension_numbers = #tpu.dot_dimension_numbers<[1], [0], [0], [1], [0, 0, 1, 1], [], []>} : vector<16x32xbf16>, vector<32x128xbf16>, vector<16x128xf32> -> vector<16x128xf32>
    %c0_115 = arith.constant 0 : index
    %c0_116 = arith.constant 0 : index
    %272 = vector.load %arg15[%c0_115, %c0_116] : memref<1x128xf32, #tpu.memory_space<vmem>>, vector<1x128xf32>
    %273 = vector.broadcast %272 : vector<1x128xf32> to vector<16x128xf32>
    %274 = arith.addf %271, %273 : vector<16x128xf32>
    %cst_117 = arith.constant 0.000000e+00 : f32
    %275 = vector.broadcast %cst_117 : f32 to vector<16x128xf32>
    %276 = arith.maximumf %274, %275 : vector<16x128xf32>
    %277 = arith.truncf %276 : vector<16x128xf32> to vector<16x128xbf16>
    %c0_118 = arith.constant 0 : index
    %c0_119 = arith.constant 0 : index
    %278 = vector.load %arg16[%c0_118, %c0_119] : memref<128x32xbf16, #tpu.memory_space<vmem>>, vector<128x32xbf16>
    %cst_120 = arith.constant dense<0.000000e+00> : vector<16x32xf32>
    %279 = tpu.matmul %277, %278, %cst_120 {dimension_numbers = #tpu.dot_dimension_numbers<[1], [0], [0], [1], [0, 0, 1, 1], [], []>} : vector<16x128xbf16>, vector<128x32xbf16>, vector<16x32xf32> -> vector<16x32xf32>
    %c0_121 = arith.constant 0 : index
    %c0_122 = arith.constant 0 : index
    %280 = vector.load %arg17[%c0_121, %c0_122] : memref<1x32xf32, #tpu.memory_space<vmem>>, vector<1x32xf32>
    %281 = vector.broadcast %280 : vector<1x32xf32> to vector<16x32xf32>
    %282 = arith.addf %279, %281 : vector<16x32xf32>
    %283 = arith.addf %268, %282 : vector<16x32xf32>
    %cst_123 = arith.constant dense<0.000000e+00> : vector<16xf32>
    %284 = vector.multi_reduction <add>, %283, %cst_123 [1] : vector<16x32xf32> to vector<16xf32>
    %285 = vector.shape_cast %284 : vector<16xf32> to vector<16x1xf32>
    %cst_124 = arith.constant 3.200000e+01 : f32
    %286 = vector.broadcast %cst_124 : f32 to vector<16x1xf32>
    %287 = arith.divf %285, %286 : vector<16x1xf32>
    %288 = vector.broadcast %287 : vector<16x1xf32> to vector<16x32xf32>
    %289 = arith.subf %283, %288 : vector<16x32xf32>
    %290 = arith.mulf %289, %289 : vector<16x32xf32>
    %cst_125 = arith.constant dense<0.000000e+00> : vector<16xf32>
    %291 = vector.multi_reduction <add>, %290, %cst_125 [1] : vector<16x32xf32> to vector<16xf32>
    %292 = vector.shape_cast %291 : vector<16xf32> to vector<16x1xf32>
    %cst_126 = arith.constant 3.200000e+01 : f32
    %293 = vector.broadcast %cst_126 : f32 to vector<16x1xf32>
    %294 = arith.divf %292, %293 : vector<16x1xf32>
    %295 = vector.broadcast %287 : vector<16x1xf32> to vector<16x32xf32>
    %296 = arith.subf %283, %295 : vector<16x32xf32>
    %cst_127 = arith.constant 9.99999974E-6 : f32
    %297 = vector.broadcast %cst_127 : f32 to vector<16x1xf32>
    %298 = arith.addf %294, %297 : vector<16x1xf32>
    %299 = math.rsqrt %298 : vector<16x1xf32>
    %300 = vector.broadcast %299 : vector<16x1xf32> to vector<16x32xf32>
    %301 = arith.mulf %296, %300 : vector<16x32xf32>
    %c0_128 = arith.constant 0 : index
    %c0_129 = arith.constant 0 : index
    %302 = vector.load %arg12[%c0_128, %c0_129] : memref<1x32xf32, #tpu.memory_space<vmem>>, vector<1x32xf32>
    %303 = vector.broadcast %302 : vector<1x32xf32> to vector<16x32xf32>
    %304 = arith.mulf %301, %303 : vector<16x32xf32>
    %c0_130 = arith.constant 0 : index
    %c0_131 = arith.constant 0 : index
    %305 = vector.load %arg13[%c0_130, %c0_131] : memref<1x32xf32, #tpu.memory_space<vmem>>, vector<1x32xf32>
    %306 = vector.broadcast %305 : vector<1x32xf32> to vector<16x32xf32>
    %307 = arith.addf %304, %306 : vector<16x32xf32>
    %308 = vector.shape_cast %307 : vector<16x32xf32> to vector<2x8x32xf32>
    %c0_132 = arith.constant 0 : index
    %c0_133 = arith.constant 0 : index
    %c0_134 = arith.constant 0 : index
    %309 = vector.load %arg18[%c0_132, %c0_133, %c0_134] : memref<2x8x32xf32, #tpu.memory_space<vmem>>, vector<2x8x32xf32>
    tpu.vector_store %arg18[%c0_132, %c0_133, %c0_134], %308 {strides = array<i32>} : memref<2x8x32xf32, #tpu.memory_space<vmem>>, vector<2x8x32xf32>,
    return
  }
  func.func @transform_0(%arg0: i32) -> (i32, i32, i32) {
    %c0_i32 = arith.constant 0 : i32
    %c0_i32_0 = arith.constant 0 : i32
    %c0_i32_1 = arith.constant 0 : i32
    return %arg0, %c0_i32, %c0_i32_0 : i32, i32, i32
  }
  func.func @transform_1(%arg0: i32) -> (i32, i32) {
    %c0_i32 = arith.constant 0 : i32
    %c0_i32_0 = arith.constant 0 : i32
    %c0_i32_1 = arith.constant 0 : i32
    return %c0_i32, %c0_i32_0 : i32, i32
  }
  func.func @transform_2(%arg0: i32) -> (i32, i32) {
    %c0_i32 = arith.constant 0 : i32
    %c0_i32_0 = arith.constant 0 : i32
    %c0_i32_1 = arith.constant 0 : i32
    return %c0_i32, %c0_i32_0 : i32, i32
  }
  func.func @transform_3(%arg0: i32) -> (i32, i32) {
    %c0_i32 = arith.constant 0 : i32
    %c0_i32_0 = arith.constant 0 : i32
    %c0_i32_1 = arith.constant 0 : i32
    return %c0_i32, %c0_i32_0 : i32, i32
  }
  func.func @transform_4(%arg0: i32) -> (i32, i32) {
    %c0_i32 = arith.constant 0 : i32
    %c0_i32_0 = arith.constant 0 : i32
    %c0_i32_1 = arith.constant 0 : i32
    return %c0_i32, %c0_i32_0 : i32, i32
  }
  func.func @transform_5(%arg0: i32) -> (i32, i32) {
    %c0_i32 = arith.constant 0 : i32
    %c0_i32_0 = arith.constant 0 : i32
    %c0_i32_1 = arith.constant 0 : i32
    return %c0_i32, %c0_i32_0 : i32, i32
  }
  func.func @transform_6(%arg0: i32) -> (i32, i32) {
    %c0_i32 = arith.constant 0 : i32
    %c0_i32_0 = arith.constant 0 : i32
    %c0_i32_1 = arith.constant 0 : i32
    return %c0_i32, %c0_i32_0 : i32, i32
  }
  func.func @transform_7(%arg0: i32) -> (i32, i32) {
    %c0_i32 = arith.constant 0 : i32
    %c0_i32_0 = arith.constant 0 : i32
    %c0_i32_1 = arith.constant 0 : i32
    return %c0_i32, %c0_i32_0 : i32, i32
  }
  func.func @transform_8(%arg0: i32) -> (i32, i32) {
    %c0_i32 = arith.constant 0 : i32
    %c0_i32_0 = arith.constant 0 : i32
    %c0_i32_1 = arith.constant 0 : i32
    return %c0_i32, %c0_i32_0 : i32, i32
  }
  func.func @transform_9(%arg0: i32) -> (i32, i32) {
    %c0_i32 = arith.constant 0 : i32
    %c0_i32_0 = arith.constant 0 : i32
    %c0_i32_1 = arith.constant 0 : i32
    return %c0_i32, %c0_i32_0 : i32, i32
  }
  func.func @transform_10(%arg0: i32) -> (i32, i32) {
    %c0_i32 = arith.constant 0 : i32
    %c0_i32_0 = arith.constant 0 : i32
    %c0_i32_1 = arith.constant 0 : i32
    return %c0_i32, %c0_i32_0 : i32, i32
  }
  func.func @transform_11(%arg0: i32) -> (i32, i32) {
    %c0_i32 = arith.constant 0 : i32
    %c0_i32_0 = arith.constant 0 : i32
    %c0_i32_1 = arith.constant 0 : i32
    return %c0_i32, %c0_i32_0 : i32, i32
  }
  func.func @transform_12(%arg0: i32) -> (i32, i32) {
    %c0_i32 = arith.constant 0 : i32
    %c0_i32_0 = arith.constant 0 : i32
    %c0_i32_1 = arith.constant 0 : i32
    return %c0_i32, %c0_i32_0 : i32, i32
  }
  func.func @transform_13(%arg0: i32) -> (i32, i32) {
    %c0_i32 = arith.constant 0 : i32
    %c0_i32_0 = arith.constant 0 : i32
    %c0_i32_1 = arith.constant 0 : i32
    return %c0_i32, %c0_i32_0 : i32, i32
  }
  func.func @transform_14(%arg0: i32) -> (i32, i32) {
    %c0_i32 = arith.constant 0 : i32
    %c0_i32_0 = arith.constant 0 : i32
    %c0_i32_1 = arith.constant 0 : i32
    return %c0_i32, %c0_i32_0 : i32, i32
  }
  func.func @transform_15(%arg0: i32) -> (i32, i32) {
    %c0_i32 = arith.constant 0 : i32
    %c0_i32_0 = arith.constant 0 : i32
    %c0_i32_1 = arith.constant 0 : i32
    return %c0_i32, %c0_i32_0 : i32, i32
  }
  func.func @transform_16(%arg0: i32) -> (i32, i32) {
    %c0_i32 = arith.constant 0 : i32
    %c0_i32_0 = arith.constant 0 : i32
    %c0_i32_1 = arith.constant 0 : i32
    return %c0_i32, %c0_i32_0 : i32, i32
  }
  func.func @transform_17(%arg0: i32) -> (i32, i32, i32) {
    %c0_i32 = arith.constant 0 : i32
    %c0_i32_0 = arith.constant 0 : i32
    %c0_i32_1 = arith.constant 0 : i32
    return %arg0, %c0_i32, %c0_i32_0 : i32, i32, i32
  }
  func.func @transform_18(%arg0: i32) -> (i32, i32, i32, i32) {
    %c0_i32 = arith.constant 0 : i32
    %c0_i32_0 = arith.constant 0 : i32
    %c0_i32_1 = arith.constant 0 : i32
    %c0_i32_2 = arith.constant 0 : i32
    return %arg0, %c0_i32, %c0_i32_0, %c0_i32_1 : i32, i32, i32, i32
  }
}

</mosaic_0001>

<llo_original>
// kernel: tpu_custom_call.1
$region0: #{tpu_custom_call.1}
  #allocation0 [shape = 'u32[]', space=smem, size = 0x4, offset = 0x4, fixed_abs, tag = 'smem constant byte address 0x4 - core index']
  #allocation1 [shape = 'u32[144,128]{1,0:T(1,128)}', space=vmem, size = 0x12000, scoped, tag = 'internal scratch']
  %s0 = inlined_call_operand.vmem [shape: f32[2,8,64], index: 0, kind: input, shape index: {}]
  %s1 = inlined_call_operand.vmem [shape: bf16[64,32], index: 1, kind: input, shape index: {}]
  %s2 = inlined_call_operand.vmem [shape: f32[1,32], index: 2, kind: input, shape index: {}]
  %s3 = inlined_call_operand.vmem [shape: bf16[64,32], index: 3, kind: input, shape index: {}]
  %s4 = inlined_call_operand.vmem [shape: f32[1,32], index: 4, kind: input, shape index: {}]
  %s5 = inlined_call_operand.vmem [shape: bf16[32,32], index: 5, kind: input, shape index: {}]
  %s6 = inlined_call_operand.vmem [shape: f32[1,32], index: 6, kind: input, shape index: {}]
  %s7 = inlined_call_operand.vmem [shape: bf16[32,32], index: 7, kind: input, shape index: {}]
  %s8 = inlined_call_operand.vmem [shape: f32[1,32], index: 8, kind: input, shape index: {}]
  %s9 = inlined_call_operand.vmem [shape: f32[1,32], index: 9, kind: input, shape index: {}]
  %s10 = inlined_call_operand.vmem [shape: f32[1,32], index: 10, kind: input, shape index: {}]
  %s11 = inlined_call_operand.vmem [shape: f32[1,32], index: 11, kind: input, shape index: {}]
  %s12 = inlined_call_operand.vmem [shape: f32[1,32], index: 12, kind: input, shape index: {}]
  %s13 = inlined_call_operand.vmem [shape: bf16[32,128], index: 13, kind: input, shape index: {}]
  %s14 = inlined_call_operand.vmem [shape: f32[1,128], index: 14, kind: input, shape index: {}]
  %s15 = inlined_call_operand.vmem [shape: bf16[128,32], index: 15, kind: input, shape index: {}]
  %s16 = inlined_call_operand.vmem [shape: f32[1,32], index: 16, kind: input, shape index: {}]
  %s17 = inlined_call_operand.hbm [shape: f32[2,8,32], index: 17, kind: output, shape index: {0}]
  %s18 = inlined_call_operand.hbm [shape: f32[2,4,8,8], index: 18, kind: output, shape index: {1}]
  %19 = xla_tuple %s17, %s18
  %s20 = sld [smem:[#allocation0]]
  $region86: #{tpu_custom_call.1} parent=0
    _
  %s22 = ssub.s32 1, %s20
  %s23 = scalar_select 0, %s22, %s20
  $region1: #{tpu_custom_call.1} parent=0
    #allocation2 [shape = 'u8[8192]{0}', space=vmem, size = 0x2000, scoped, tag = 'output window, operand 0, single buffered']
    #allocation3 [shape = 's32[1]{0}', space=sflag, size = 0x4, scoped, tag = 'scoped memory for tpu_custom_call.1']
    #allocation4 [shape = 'u8[32768]{0}', space=vmem, size = 0x8000, scoped, tag = 'output window, operand 1, single buffered']
    #allocation5 [shape = 's32[1]{0}', space=sflag, size = 0x4, scoped, tag = 'scoped memory for tpu_custom_call.1']
    %24 = vsyncpa [#allocation3], 0
    %25 = vsyncpa [#allocation5], 0
    // Predicated region
    $region2: #{tpu_custom_call.1} parent=1 // pred_check
      _
    $region3: #{tpu_custom_call.1} parent=1 // pred_check_branch
      %27 = sbr.rel (0) target = $region5
    $region4: #{tpu_custom_call.1} parent=1 // pred_region
      _
    $region5: #{tpu_custom_call.1} parent=1 // pred_fallthru
      _
    // Predicated region
    $region6: #{tpu_custom_call.1} parent=1 // pred_check
      _
    $region7: #{tpu_custom_call.1} parent=1 // pred_check_branch
      %29 = sbr.rel (0) target = $region9
    $region8: #{tpu_custom_call.1} parent=1 // pred_region
      _
    $region9: #{tpu_custom_call.1} parent=1 // pred_fallthru
      _
    // Predicated region
    $region10: #{tpu_custom_call.1} parent=1 // pred_check
      _
    $region11: #{tpu_custom_call.1} parent=1 // pred_check_branch
      %31 = sbr.rel (0) target = $region13
    $region12: #{tpu_custom_call.1} parent=1 // pred_region
      _
    $region13: #{tpu_custom_call.1} parent=1 // pred_fallthru
      _
    // Predicated region
    $region14: #{tpu_custom_call.1} parent=1 // pred_check
      _
    $region15: #{tpu_custom_call.1} parent=1 // pred_check_branch
      %33 = sbr.rel (0) target = $region17
    $region16: #{tpu_custom_call.1} parent=1 // pred_region
      _
    $region17: #{tpu_custom_call.1} parent=1 // pred_fallthru
      _
    // Predicated region
    $region18: #{tpu_custom_call.1} parent=1 // pred_check
      _
    $region19: #{tpu_custom_call.1} parent=1 // pred_check_branch
      %35 = sbr.rel (0) target = $region21
    $region20: #{tpu_custom_call.1} parent=1 // pred_region
      _
    $region21: #{tpu_custom_call.1} parent=1 // pred_fallthru
      _
    // Predicated region
    $region22: #{tpu_custom_call.1} parent=1 // pred_check
      _
    $region23: #{tpu_custom_call.1} parent=1 // pred_check_branch
      %37 = sbr.rel (0) target = $region25
    $region24: #{tpu_custom_call.1} parent=1 // pred_region
      _
    $region25: #{tpu_custom_call.1} parent=1 // pred_fallthru
      _
    // Predicated region
    $region26: #{tpu_custom_call.1} parent=1 // pred_check
      _
    $region27: #{tpu_custom_call.1} parent=1 // pred_check_branch
      %39 = sbr.rel (0) target = $region29
    $region28: #{tpu_custom_call.1} parent=1 // pred_region
      _
    $region29: #{tpu_custom_call.1} parent=1 // pred_fallthru
      _
    // Predicated region
    $region30: #{tpu_custom_call.1} parent=1 // pred_check
      _
    $region31: #{tpu_custom_call.1} parent=1 // pred_check_branch
      %41 = sbr.rel (0) target = $region33
    $region32: #{tpu_custom_call.1} parent=1 // pred_region
      _
    $region33: #{tpu_custom_call.1} parent=1 // pred_fallthru
      _
    // Predicated region
    $region34: #{tpu_custom_call.1} parent=1 // pred_check
      _
    $region35: #{tpu_custom_call.1} parent=1 // pred_check_branch
      %43 = sbr.rel (0) target = $region37
    $region36: #{tpu_custom_call.1} parent=1 // pred_region
      _
    $region37: #{tpu_custom_call.1} parent=1 // pred_fallthru
      _
    // Predicated region
    $region38: #{tpu_custom_call.1} parent=1 // pred_check
      _
    $region39: #{tpu_custom_call.1} parent=1 // pred_check_branch
      %45 = sbr.rel (0) target = $region41
    $region40: #{tpu_custom_call.1} parent=1 // pred_region
      _
    $region41: #{tpu_custom_call.1} parent=1 // pred_fallthru
      _
    // Predicated region
    $region42: #{tpu_custom_call.1} parent=1 // pred_check
      _
    $region43: #{tpu_custom_call.1} parent=1 // pred_check_branch
      %47 = sbr.rel (0) target = $region45
    $region44: #{tpu_custom_call.1} parent=1 // pred_region
      _
    $region45: #{tpu_custom_call.1} parent=1 // pred_fallthru
      _
    // Predicated region
    $region46: #{tpu_custom_call.1} parent=1 // pred_check
      _
    $region47: #{tpu_custom_call.1} parent=1 // pred_check_branch
      %49 = sbr.rel (0) target = $region49
    $region48: #{tpu_custom_call.1} parent=1 // pred_region
      _
    $region49: #{tpu_custom_call.1} parent=1 // pred_fallthru
      _
    // Predicated region
    $region50: #{tpu_custom_call.1} parent=1 // pred_check
      _
    $region51: #{tpu_custom_call.1} parent=1 // pred_check_branch
      %51 = sbr.rel (0) target = $region53
    $region52: #{tpu_custom_call.1} parent=1 // pred_region
      _
    $region53: #{tpu_custom_call.1} parent=1 // pred_fallthru
      _
    // Predicated region
    $region54: #{tpu_custom_call.1} parent=1 // pred_check
      _
    $region55: #{tpu_custom_call.1} parent=1 // pred_check_branch
      %53 = sbr.rel (0) target = $region57
    $region56: #{tpu_custom_call.1} parent=1 // pred_region
      _
    $region57: #{tpu_custom_call.1} parent=1 // pred_fallthru
      _
    // Predicated region
    $region58: #{tpu_custom_call.1} parent=1 // pred_check
      _
    $region59: #{tpu_custom_call.1} parent=1 // pred_check_branch
      %55 = sbr.rel (0) target = $region61
    $region60: #{tpu_custom_call.1} parent=1 // pred_region
      _
    $region61: #{tpu_custom_call.1} parent=1 // pred_fallthru
      _
    // Predicated region
    $region62: #{tpu_custom_call.1} parent=1 // pred_check
      _
    $region63: #{tpu_custom_call.1} parent=1 // pred_check_branch
      %57 = sbr.rel (0) target = $region65
    $region64: #{tpu_custom_call.1} parent=1 // pred_region
      _
    $region65: #{tpu_custom_call.1} parent=1 // pred_fallthru
      _
    // Predicated region
    $region66: #{tpu_custom_call.1} parent=1 // pred_check
      _
    $region67: #{tpu_custom_call.1} parent=1 // pred_check_branch
      %59 = sbr.rel (0) target = $region69
    $region68: #{tpu_custom_call.1} parent=1 // pred_region
      _
    $region69: #{tpu_custom_call.1} parent=1 // pred_fallthru
      _
    %v61 = vld [vmem:[%s0] sm:$0xff]
    %v62 = vld [vmem:[%s0 + $0x8] sm:$0xff]
    %v63 = vpack.c.bf16 %v62, %v61
    %v64 = vld [vmem:[%s1] sm:$0xf]
    %v65 = vld [vmem:[%s1 + $0x4] sm:$0xf]
    %v66 = vld [vmem:[%s1 + $0x8] sm:$0xf]
    %v67 = vld [vmem:[%s1 + $0xc] sm:$0xf]
    %v68 = vld [vmem:[%s1 + $0x10] sm:$0xf]
    %v69 = vld [vmem:[%s1 + $0x14] sm:$0xf]
    %v70 = vld [vmem:[%s1 + $0x18] sm:$0xf]
    %v71 = vld [vmem:[%s1 + $0x1c] sm:$0xf]
    %v72 = vld [vmem:[%s2] sm:$0x1]
    %v74 = vlaneseq
    %v75 = vshrl.u32 %v74, 7
    %v76 = vsub.s32 0, %v75
    %v77 = vrot.slane %v72, %v76
    %v87 = vunpack.c.l.b16 %v64
    %v88 = vunpack.c.l.b16 %v65
    %v89 = vunpack.c.l.b16 %v66
    %v90 = vunpack.c.l.b16 %v67
    %v91 = vunpack.c.l.b16 %v68
    %v92 = vunpack.c.l.b16 %v69
    %v93 = vunpack.c.l.b16 %v70
    %v94 = vunpack.c.l.b16 %v71
    %v95 = vpack.c.b16 %v88, %v87
    %v96 = vpack.c.b16 %v90, %v89
    %v97 = vpack.c.b16 %v92, %v91
    %v98 = vpack.c.b16 %v94, %v93
    %vm103 = vcmask 523264
    %v105 = vsel %vm103, %v63, 0
    %107 = vmatprep.subr.bf16.mxu0 0
    %108 = vmatpush1.bf16.msra.mxu0 0
    %109 = vmatprep.subr.bf16.mxu0 0
    %110 = vmatpush1.bf16.msra.mxu0 0
    %111 = vmatprep.subr.bf16.mxu0 0
    %112 = vmatpush1.bf16.msra.mxu0 0
    %113 = vmatprep.subr.bf16.mxu0 0
    %114 = vmatpush1.bf16.msra.mxu0 0
    %115 = vmatprep.subr.bf16.mxu0 0
    %116 = vmatpush1.bf16.msra.mxu0 %v98
    %117 = vmatprep.subr.bf16.mxu0 0
    %118 = vmatpush1.bf16.msra.mxu0 %v97
    %119 = vmatprep.subr.bf16.mxu0 0
    %120 = vmatpush1.bf16.msra.mxu0 %v96
    %121 = vmatprep.subr.bf16.mxu0 0
    %122 = vmatpush1.bf16.msra.mxu0 %v95
    %123 = vmatprep.subr.bf16.mxu0 0
    %124 = vmatpush2.bf16.msra.mxu0 0
    %125 = vmatprep.subr.bf16.mxu0 0
    %126 = vmatpush2.bf16.msra.mxu0 0
    %127 = vmatprep.subr.bf16.mxu0 0
    %128 = vmatpush2.bf16.msra.mxu0 0
    %129 = vmatprep.subr.bf16.mxu0 0
    %130 = vmatpush2.bf16.msra.mxu0 0
    %131 = vmatprep.subr.bf16.mxu0 0
    %132 = vmatpush2.bf16.msra.mxu0 0
    %133 = vmatprep.subr.bf16.mxu0 0
    %134 = vmatpush2.bf16.msra.mxu0 0
    %135 = vmatprep.subr.bf16.mxu0 0
    %136 = vmatpush2.bf16.msra.mxu0 0
    %137 = vmatprep.subr.bf16.mxu0 0
    %138 = vmatpush2.bf16.msra.mxu0 0
    %139 = vmatprep.mubr.bf16.mxu0 0
    %140 = vmatmul.mubr.bf16.gmra.mxu0 %v105
    %v141 = vpop.f32.mrf.mxu0
    %v142 = vadd.f32 %v77, %v141
    %v143 = vpop.f32.mrf.mxu0
    %v144 = vpop.f32.mrf.mxu0
    %v145 = vadd.f32 %v77, %v144
    %v146 = vpop.f32.mrf.mxu0
    %147 = vdwg.mxu0
    %v148 = vmul.f32 %v142, 0.35355338
    %v149 = vmul.f32 %v145, 0.35355338
    %v150 = vld [vmem:[%s3] sm:$0xf]
    %v151 = vld [vmem:[%s3 + $0x4] sm:$0xf]
    %v152 = vld [vmem:[%s3 + $0x8] sm:$0xf]
    %v153 = vld [vmem:[%s3 + $0xc] sm:$0xf]
    %v154 = vld [vmem:[%s3 + $0x10] sm:$0xf]
    %v155 = vld [vmem:[%s3 + $0x14] sm:$0xf]
    %v156 = vld [vmem:[%s3 + $0x18] sm:$0xf]
    %v157 = vld [vmem:[%s3 + $0x1c] sm:$0xf]
    %v158 = vld [vmem:[%s4] sm:$0x1]
    %v160 = vlaneseq
    %v161 = vshrl.u32 %v160, 7
    %v162 = vsub.s32 0, %v161
    %v163 = vrot.slane %v158, %v162
    %v173 = vunpack.c.l.b16 %v150
    %v174 = vunpack.c.l.b16 %v151
    %v175 = vunpack.c.l.b16 %v152
    %v176 = vunpack.c.l.b16 %v153
    %v177 = vunpack.c.l.b16 %v154
    %v178 = vunpack.c.l.b16 %v155
    %v179 = vunpack.c.l.b16 %v156
    %v180 = vunpack.c.l.b16 %v157
    %v181 = vpack.c.b16 %v174, %v173
    %v182 = vpack.c.b16 %v176, %v175
    %v183 = vpack.c.b16 %v178, %v177
    %v184 = vpack.c.b16 %v180, %v179
    %189 = vmatprep.subr.bf16.mxu0 0
    %190 = vmatpush1.bf16.msra.mxu0 0
    %191 = vmatprep.subr.bf16.mxu0 0
    %192 = vmatpush1.bf16.msra.mxu0 0
    %193 = vmatprep.subr.bf16.mxu0 0
    %194 = vmatpush1.bf16.msra.mxu0 0
    %195 = vmatprep.subr.bf16.mxu0 0
    %196 = vmatpush1.bf16.msra.mxu0 0
    %197 = vmatprep.subr.bf16.mxu0 0
    %198 = vmatpush1.bf16.msra.mxu0 %v184
    %199 = vmatprep.subr.bf16.mxu0 0
    %200 = vmatpush1.bf16.msra.mxu0 %v183
    %201 = vmatprep.subr.bf16.mxu0 0
    %202 = vmatpush1.bf16.msra.mxu0 %v182
    %203 = vmatprep.subr.bf16.mxu0 0
    %204 = vmatpush1.bf16.msra.mxu0 %v181
    %205 = vmatprep.subr.bf16.mxu0 0
    %206 = vmatpush2.bf16.msra.mxu0 0
    %207 = vmatprep.subr.bf16.mxu0 0
    %208 = vmatpush2.bf16.msra.mxu0 0
    %209 = vmatprep.subr.bf16.mxu0 0
    %210 = vmatpush2.bf16.msra.mxu0 0
    %211 = vmatprep.subr.bf16.mxu0 0
    %212 = vmatpush2.bf16.msra.mxu0 0
    %213 = vmatprep.subr.bf16.mxu0 0
    %214 = vmatpush2.bf16.msra.mxu0 0
    %215 = vmatprep.subr.bf16.mxu0 0
    %216 = vmatpush2.bf16.msra.mxu0 0
    %217 = vmatprep.subr.bf16.mxu0 0
    %218 = vmatpush2.bf16.msra.mxu0 0
    %219 = vmatprep.subr.bf16.mxu0 0
    %220 = vmatpush2.bf16.msra.mxu0 0
    %221 = vmatprep.mubr.bf16.mxu0 0
    %222 = vmatmul.mubr.bf16.gmra.mxu0 %v105
    %v223 = vpop.f32.mrf.mxu0
    %v224 = vadd.f32 %v163, %v223
    %v225 = vpop.f32.mrf.mxu0
    %v226 = vpop.f32.mrf.mxu0
    %v227 = vadd.f32 %v163, %v226
    %v228 = vpop.f32.mrf.mxu0
    %229 = vdwg.mxu0
    %v230 = vld [vmem:[%s5] sm:$0xf]
    %v231 = vld [vmem:[%s5 + $0x4] sm:$0xf]
    %v232 = vld [vmem:[%s5 + $0x8] sm:$0xf]
    %v233 = vld [vmem:[%s5 + $0xc] sm:$0xf]
    %v234 = vld [vmem:[%s6] sm:$0x1]
    %v236 = vlaneseq
    %v237 = vshrl.u32 %v236, 7
    %v238 = vsub.s32 0, %v237
    %v239 = vrot.slane %v234, %v238
    %v245 = vunpack.c.l.b16 %v230
    %v246 = vunpack.c.l.b16 %v231
    %v247 = vunpack.c.l.b16 %v232
    %v248 = vunpack.c.l.b16 %v233
    %v249 = vpack.c.b16 %v246, %v245
    %v250 = vpack.c.b16 %v248, %v247
    %vm253 = vcmask 261120
    %v254 = vsel %vm253, %v63, 0
    %256 = vmatprep.subr.bf16.mxu0 0
    %257 = vmatpush1.bf16.msra.mxu0 0
    %258 = vmatprep.subr.bf16.mxu0 0
    %259 = vmatpush1.bf16.msra.mxu0 0
    %260 = vmatprep.subr.bf16.mxu0 0
    %261 = vmatpush1.bf16.msra.mxu0 0
    %262 = vmatprep.subr.bf16.mxu0 0
    %263 = vmatpush1.bf16.msra.mxu0 0
    %264 = vmatprep.subr.bf16.mxu0 0
    %265 = vmatpush1.bf16.msra.mxu0 0
    %266 = vmatprep.subr.bf16.mxu0 0
    %267 = vmatpush1.bf16.msra.mxu0 0
    %268 = vmatprep.subr.bf16.mxu0 0
    %269 = vmatpush1.bf16.msra.mxu0 %v250
    %270 = vmatprep.subr.bf16.mxu0 0
    %271 = vmatpush1.bf16.msra.mxu0 %v249
    %272 = vmatprep.subr.bf16.mxu0 0
    %273 = vmatpush2.bf16.msra.mxu0 0
    %274 = vmatprep.subr.bf16.mxu0 0
    %275 = vmatpush2.bf16.msra.mxu0 0
    %276 = vmatprep.subr.bf16.mxu0 0
    %277 = vmatpush2.bf16.msra.mxu0 0
    %278 = vmatprep.subr.bf16.mxu0 0
    %279 = vmatpush2.bf16.msra.mxu0 0
    %280 = vmatprep.subr.bf16.mxu0 0
    %281 = vmatpush2.bf16.msra.mxu0 0
    %282 = vmatprep.subr.bf16.mxu0 0
    %283 = vmatpush2.bf16.msra.mxu0 0
    %284 = vmatprep.subr.bf16.mxu0 0
    %285 = vmatpush2.bf16.msra.mxu0 0
    %286 = vmatprep.subr.bf16.mxu0 0
    %287 = vmatpush2.bf16.msra.mxu0 0
    %288 = vmatprep.mubr.bf16.mxu0 0
    %289 = vmatmul.mubr.bf16.gmra.mxu0 %v254
    %v290 = vpop.f32.mrf.mxu0
    %v291 = vadd.f32 %v239, %v290
    %v292 = vpop.f32.mrf.mxu0
    %v293 = vpop.f32.mrf.mxu0
    %v294 = vadd.f32 %v239, %v293
    %v295 = vpop.f32.mrf.mxu0
    %296 = vdwg.mxu0
    %v297 = vpack.c.bf16 %v149, %v148
    %v299 = vunpack.c.l.b16 %v297
    %v300 = vunpack.c.h.b16 %v297
    %v301 = vpack.c.b16 %v299, %v299
    %v302 = vpack.c.b16 %v300, %v300
    %v303 = vpack.c.bf16 %v227, %v224
    %v305 = vunpack.c.l.b16 %v303
    %v306 = vunpack.c.h.b16 %v303
    %v307 = vpack.c.b16 %v305, %v305
    %v308 = vpack.c.b16 %v306, %v306
    %v309 = vpack.c.bf16 %v294, %v291
    %v311 = vunpack.c.l.b16 %v309
    %v312 = vunpack.c.h.b16 %v309
    %v313 = vpack.c.b16 %v311, %v311
    %v314 = vpack.c.b16 %v312, %v312
    %vm315 = vcmask 64512
    %v317 = vsel %vm315, %v301, 0
    %v320 = vsel %vm315, %v307, 0
    %322 = vmatprep.subr.bf16.mxu0 0
    %323 = vmatpush1.bf16.xpose.msra.mxu0 0
    %324 = vmatprep.subr.bf16.mxu0 0
    %325 = vmatpush1.bf16.xpose.msra.mxu0 0
    %326 = vmatprep.subr.bf16.mxu0 0
    %327 = vmatpush1.bf16.xpose.msra.mxu0 0
    %328 = vmatprep.subr.bf16.mxu0 0
    %329 = vmatpush1.bf16.xpose.msra.mxu0 0
    %330 = vmatprep.subr.bf16.mxu0 0
    %331 = vmatpush1.bf16.xpose.msra.mxu0 0
    %332 = vmatprep.subr.bf16.mxu0 0
    %333 = vmatpush1.bf16.xpose.msra.mxu0 0
    %334 = vmatprep.subr.bf16.mxu0 0
    %335 = vmatpush1.bf16.xpose.msra.mxu0 0
    %336 = vmatprep.subr.bf16.mxu0 0
    %337 = vmatpush1.bf16.xpose.msra.mxu0 %v320
    %338 = vmatprep.subr.bf16.mxu0 0
    %339 = vmatpush2.bf16.xpose.msra.mxu0 0
    %340 = vmatprep.subr.bf16.mxu0 0
    %341 = vmatpush2.bf16.xpose.msra.mxu0 0
    %342 = vmatprep.subr.bf16.mxu0 0
    %343 = vmatpush2.bf16.xpose.msra.mxu0 0
    %344 = vmatprep.subr.bf16.mxu0 0
    %345 = vmatpush2.bf16.xpose.msra.mxu0 0
    %346 = vmatprep.subr.bf16.mxu0 0
    %347 = vmatpush2.bf16.xpose.msra.mxu0 0
    %348 = vmatprep.subr.bf16.mxu0 0
    %349 = vmatpush2.bf16.xpose.msra.mxu0 0
    %350 = vmatprep.subr.bf16.mxu0 0
    %351 = vmatpush2.bf16.xpose.msra.mxu0 0
    %352 = vmatprep.subr.bf16.mxu0 0
    %353 = vmatpush2.bf16.xpose.msra.mxu0 0
    %354 = vmatprep.mubr.bf16.mxu0 0
    %355 = vmatmul.mubr.bf16.gmra.mxu0 %v317
    %v356 = vpop.f32.mrf.mxu0
    %v357 = vadd.f32 0.0, %v356
    %v358 = vpop.f32.mrf.mxu0
    %v359 = vpop.f32.mrf.mxu0
    %v360 = vpop.f32.mrf.mxu0
    %361 = vdwg.mxu0
    %v362 = vsel %vm315, %v357, -inf
    %363 = vmax.xlane.f32.xlu0 %v362
    %v364 = vpop.xlane.xlu0 %363
    %v365 = vsub.f32 %v357, %v364
    %v366 = vmul.f32 %v365, 1.442695
    %v367 = vpow.pop %v366
    %v368 = vsel %vm315, %v367, 0.0
    %369 = vadd.xlane.f32.xlu0 %v368
    %v370 = vpop.xlane.xlu0 %369
    %v371 = vrcp.pop %v370
    %v372 = vmul.f32 %v367, %v371
    %373 = vst.msk [vmem:[#allocation4] sm:$0xff] %vm315, %v372
    %v374 = vpack.c.bf16 %v372, %v372
    %v376 = vsel %vm315, %v374, 0
    %vm378 = vcmask 1043456
    %v380 = vsel %vm378, %v313, 0
    %382 = vmatprep.subr.bf16.mxu0 0
    %383 = vmatpush1.bf16.msra.mxu0 0
    %384 = vmatprep.subr.bf16.mxu0 0
    %385 = vmatpush1.bf16.msra.mxu0 0
    %386 = vmatprep.subr.bf16.mxu0 0
    %387 = vmatpush1.bf16.msra.mxu0 0
    %388 = vmatprep.subr.bf16.mxu0 0
    %389 = vmatpush1.bf16.msra.mxu0 0
    %390 = vmatprep.subr.bf16.mxu0 0
    %391 = vmatpush1.bf16.msra.mxu0 0
    %392 = vmatprep.subr.bf16.mxu0 0
    %393 = vmatpush1.bf16.msra.mxu0 0
    %394 = vmatprep.subr.bf16.mxu0 0
    %395 = vmatpush1.bf16.msra.mxu0 0
    %396 = vmatprep.subr.bf16.mxu0 0
    %397 = vmatpush1.bf16.msra.mxu0 %v380
    %398 = vmatprep.subr.bf16.mxu0 0
    %399 = vmatpush2.bf16.msra.mxu0 0
    %400 = vmatprep.subr.bf16.mxu0 0
    %401 = vmatpush2.bf16.msra.mxu0 0
    %402 = vmatprep.subr.bf16.mxu0 0
    %403 = vmatpush2.bf16.msra.mxu0 0
    %404 = vmatprep.subr.bf16.mxu0 0
    %405 = vmatpush2.bf16.msra.mxu0 0
    %406 = vmatprep.subr.bf16.mxu0 0
    %407 = vmatpush2.bf16.msra.mxu0 0
    %408 = vmatprep.subr.bf16.mxu0 0
    %409 = vmatpush2.bf16.msra.mxu0 0
    %410 = vmatprep.subr.bf16.mxu0 0
    %411 = vmatpush2.bf16.msra.mxu0 0
    %412 = vmatprep.subr.bf16.mxu0 0
    %413 = vmatpush2.bf16.msra.mxu0 0
    %414 = vmatprep.mubr.bf16.mxu0 0
    %415 = vmatmul.mubr.bf16.gmra.mxu0 %v376
    %v416 = vpop.f32.mrf.mxu0
    %v417 = vadd.f32 0.0, %v416
    %v418 = vpop.f32.mrf.mxu0
    %v419 = vpop.f32.mrf.mxu0
    %v420 = vpop.f32.mrf.mxu0
    %421 = vdwg.mxu0
    %v422 = vpack.c.bf16 %v417, %v417
    %v423 = vld [vmem:[%s7] sm:$0xf]
    %424 = vrot.lane.b32.xlu0 %v301, 120
    %v425 = vpop.permute.xlu0 %424
    %426 = vrot.lane.b32.xlu0 %v307, 120
    %v427 = vpop.permute.xlu0 %426
    %v429 = vsel %vm315, %v425, 0
    %v432 = vsel %vm315, %v427, 0
    %434 = vmatprep.subr.bf16.mxu0 0
    %435 = vmatpush1.bf16.xpose.msra.mxu0 0
    %436 = vmatprep.subr.bf16.mxu0 0
    %437 = vmatpush1.bf16.xpose.msra.mxu0 0
    %438 = vmatprep.subr.bf16.mxu0 0
    %439 = vmatpush1.bf16.xpose.msra.mxu0 0
    %440 = vmatprep.subr.bf16.mxu0 0
    %441 = vmatpush1.bf16.xpose.msra.mxu0 0
    %442 = vmatprep.subr.bf16.mxu0 0
    %443 = vmatpush1.bf16.xpose.msra.mxu0 0
    %444 = vmatprep.subr.bf16.mxu0 0
    %445 = vmatpush1.bf16.xpose.msra.mxu0 0
    %446 = vmatprep.subr.bf16.mxu0 0
    %447 = vmatpush1.bf16.xpose.msra.mxu0 0
    %448 = vmatprep.subr.bf16.mxu0 0
    %449 = vmatpush1.bf16.xpose.msra.mxu0 %v432
    %450 = vmatprep.subr.bf16.mxu0 0
    %451 = vmatpush2.bf16.xpose.msra.mxu0 0
    %452 = vmatprep.subr.bf16.mxu0 0
    %453 = vmatpush2.bf16.xpose.msra.mxu0 0
    %454 = vmatprep.subr.bf16.mxu0 0
    %455 = vmatpush2.bf16.xpose.msra.mxu0 0
    %456 = vmatprep.subr.bf16.mxu0 0
    %457 = vmatpush2.bf16.xpose.msra.mxu0 0
    %458 = vmatprep.subr.bf16.mxu0 0
    %459 = vmatpush2.bf16.xpose.msra.mxu0 0
    %460 = vmatprep.subr.bf16.mxu0 0
    %461 = vmatpush2.bf16.xpose.msra.mxu0 0
    %462 = vmatprep.subr.bf16.mxu0 0
    %463 = vmatpush2.bf16.xpose.msra.mxu0 0
    %464 = vmatprep.subr.bf16.mxu0 0
    %465 = vmatpush2.bf16.xpose.msra.mxu0 0
    %466 = vmatprep.mubr.bf16.mxu0 0
    %467 = vmatmul.mubr.bf16.gmra.mxu0 %v429
    %v468 = vpop.f32.mrf.mxu0
    %v469 = vadd.f32 0.0, %v468
    %v470 = vpop.f32.mrf.mxu0
    %v471 = vpop.f32.mrf.mxu0
    %v472 = vpop.f32.mrf.mxu0
    %473 = vdwg.mxu0
    %v474 = vsel %vm315, %v469, -inf
    %475 = vmax.xlane.f32.xlu0 %v474
    %v476 = vpop.xlane.xlu0 %475
    %v477 = vsub.f32 %v469, %v476
    %v478 = vmul.f32 %v477, 1.442695
    %v479 = vpow.pop %v478
    %v480 = vsel %vm315, %v479, 0.0
    %481 = vadd.xlane.f32.xlu0 %v480
    %v482 = vpop.xlane.xlu0 %481
    %v483 = vrcp.pop %v482
    %v484 = vmul.f32 %v479, %v483
    %s485 = scalar_lea.vmem [#allocation4], 8
    %486 = vst.msk [vmem:[%s485] sm:$0xff] %vm315, %v484
    %v487 = vpack.c.bf16 %v484, %v484
    %488 = vrot.lane.b32.xlu0 %v313, 120
    %v489 = vpop.permute.xlu0 %488
    %v491 = vsel %vm315, %v487, 0
    %v494 = vsel %vm378, %v489, 0
    %496 = vmatprep.subr.bf16.mxu0 0
    %497 = vmatpush1.bf16.msra.mxu0 0
    %498 = vmatprep.subr.bf16.mxu0 0
    %499 = vmatpush1.bf16.msra.mxu0 0
    %500 = vmatprep.subr.bf16.mxu0 0
    %501 = vmatpush1.bf16.msra.mxu0 0
    %502 = vmatprep.subr.bf16.mxu0 0
    %503 = vmatpush1.bf16.msra.mxu0 0
    %504 = vmatprep.subr.bf16.mxu0 0
    %505 = vmatpush1.bf16.msra.mxu0 0
    %506 = vmatprep.subr.bf16.mxu0 0
    %507 = vmatpush1.bf16.msra.mxu0 0
    %508 = vmatprep.subr.bf16.mxu0 0
    %509 = vmatpush1.bf16.msra.mxu0 0
    %510 = vmatprep.subr.bf16.mxu0 0
    %511 = vmatpush1.bf16.msra.mxu0 %v494
    %512 = vmatprep.subr.bf16.mxu0 0
    %513 = vmatpush2.bf16.msra.mxu0 0
    %514 = vmatprep.subr.bf16.mxu0 0
    %515 = vmatpush2.bf16.msra.mxu0 0
    %516 = vmatprep.subr.bf16.mxu0 0
    %517 = vmatpush2.bf16.msra.mxu0 0
    %518 = vmatprep.subr.bf16.mxu0 0
    %519 = vmatpush2.bf16.msra.mxu0 0
    %520 = vmatprep.subr.bf16.mxu0 0
    %521 = vmatpush2.bf16.msra.mxu0 0
    %522 = vmatprep.subr.bf16.mxu0 0
    %523 = vmatpush2.bf16.msra.mxu0 0
    %524 = vmatprep.subr.bf16.mxu0 0
    %525 = vmatpush2.bf16.msra.mxu0 0
    %526 = vmatprep.subr.bf16.mxu0 0
    %527 = vmatpush2.bf16.msra.mxu0 0
    %528 = vmatprep.mubr.bf16.mxu0 0
    %529 = vmatmul.mubr.bf16.gmra.mxu0 %v491
    %v530 = vpop.f32.mrf.mxu0
    %v531 = vadd.f32 0.0, %v530
    %v532 = vpop.f32.mrf.mxu0
    %v533 = vpop.f32.mrf.mxu0
    %v534 = vpop.f32.mrf.mxu0
    %535 = vdwg.mxu0
    %v536 = vpack.c.bf16 %v531, %v531
    %v537 = vld [vmem:[%s7 + $0x4] sm:$0xf]
    %v539 = vsel %vm315, %v536, 0
    %v542 = vsel %vm378, %v537, 0
    %544 = vmatprep.subr.bf16.mxu0 0
    %545 = vmatpush1.bf16.msra.mxu0 0
    %546 = vmatprep.subr.bf16.mxu0 0
    %547 = vmatpush1.bf16.msra.mxu0 0
    %548 = vmatprep.subr.bf16.mxu0 0
    %549 = vmatpush1.bf16.msra.mxu0 0
    %550 = vmatprep.subr.bf16.mxu0 0
    %551 = vmatpush1.bf16.msra.mxu0 0
    %552 = vmatprep.subr.bf16.mxu0 0
    %553 = vmatpush1.bf16.msra.mxu0 0
    %554 = vmatprep.subr.bf16.mxu0 0
    %555 = vmatpush1.bf16.msra.mxu0 0
    %556 = vmatprep.subr.bf16.mxu0 0
    %557 = vmatpush1.bf16.msra.mxu0 0
    %558 = vmatprep.subr.bf16.mxu0 0
    %559 = vmatpush1.bf16.msra.mxu0 %v542
    %560 = vmatprep.subr.bf16.mxu0 0
    %561 = vmatpush2.bf16.msra.mxu0 0
    %562 = vmatprep.subr.bf16.mxu0 0
    %563 = vmatpush2.bf16.msra.mxu0 0
    %564 = vmatprep.subr.bf16.mxu0 0
    %565 = vmatpush2.bf16.msra.mxu0 0
    %566 = vmatprep.subr.bf16.mxu0 0
    %567 = vmatpush2.bf16.msra.mxu0 0
    %568 = vmatprep.subr.bf16.mxu0 0
    %569 = vmatpush2.bf16.msra.mxu0 0
    %570 = vmatprep.subr.bf16.mxu0 0
    %571 = vmatpush2.bf16.msra.mxu0 0
    %572 = vmatprep.subr.bf16.mxu0 0
    %573 = vmatpush2.bf16.msra.mxu0 0
    %574 = vmatprep.subr.bf16.mxu0 0
    %575 = vmatpush2.bf16.msra.mxu0 0
    %576 = vmatprep.mubr.bf16.mxu0 0
    %577 = vmatmul.mubr.bf16.gmra.mxu0 %v539
    %v578 = vpop.f32.mrf.mxu0
    %v579 = vadd.f32 0.0, %v578
    %v580 = vpop.f32.mrf.mxu0
    %v581 = vpop.f32.mrf.mxu0
    %v582 = vpop.f32.mrf.mxu0
    %583 = vdwg.mxu0
    %v585 = vsel %vm315, %v422, 0
    %v588 = vsel %vm378, %v423, 0
    %590 = vmatprep.subr.bf16.mxu0 0
    %591 = vmatpush1.bf16.msra.mxu0 0
    %592 = vmatprep.subr.bf16.mxu0 0
    %593 = vmatpush1.bf16.msra.mxu0 0
    %594 = vmatprep.subr.bf16.mxu0 0
    %595 = vmatpush1.bf16.msra.mxu0 0
    %596 = vmatprep.subr.bf16.mxu0 0
    %597 = vmatpush1.bf16.msra.mxu0 0
    %598 = vmatprep.subr.bf16.mxu0 0
    %599 = vmatpush1.bf16.msra.mxu0 0
    %600 = vmatprep.subr.bf16.mxu0 0
    %601 = vmatpush1.bf16.msra.mxu0 0
    %602 = vmatprep.subr.bf16.mxu0 0
    %603 = vmatpush1.bf16.msra.mxu0 0
    %604 = vmatprep.subr.bf16.mxu0 0
    %605 = vmatpush1.bf16.msra.mxu0 %v588
    %606 = vmatprep.subr.bf16.mxu0 0
    %607 = vmatpush2.bf16.msra.mxu0 0
    %608 = vmatprep.subr.bf16.mxu0 0
    %609 = vmatpush2.bf16.msra.mxu0 0
    %610 = vmatprep.subr.bf16.mxu0 0
    %611 = vmatpush2.bf16.msra.mxu0 0
    %612 = vmatprep.subr.bf16.mxu0 0
    %613 = vmatpush2.bf16.msra.mxu0 0
    %614 = vmatprep.subr.bf16.mxu0 0
    %615 = vmatpush2.bf16.msra.mxu0 0
    %616 = vmatprep.subr.bf16.mxu0 0
    %617 = vmatpush2.bf16.msra.mxu0 0
    %618 = vmatprep.subr.bf16.mxu0 0
    %619 = vmatpush2.bf16.msra.mxu0 0
    %620 = vmatprep.subr.bf16.mxu0 0
    %621 = vmatpush2.bf16.msra.mxu0 0
    %622 = vmatprep.mubr.bf16.mxu0 0
    %623 = vmatmul.mubr.bf16.gmra.mxu0 %v585
    %v624 = vpop.f32.mrf.mxu0
    %v625 = vadd.f32 %v579, %v624
    %v626 = vpop.f32.mrf.mxu0
    %v627 = vpop.f32.mrf.mxu0
    %v628 = vpop.f32.mrf.mxu0
    %629 = vdwg.mxu0
    %630 = vrot.lane.b32.xlu0 %v301, 112
    %v631 = vpop.permute.xlu0 %630
    %632 = vrot.lane.b32.xlu0 %v307, 112
    %v633 = vpop.permute.xlu0 %632
    %v635 = vsel %vm315, %v631, 0
    %v638 = vsel %vm315, %v633, 0
    %640 = vmatprep.subr.bf16.mxu0 0
    %641 = vmatpush1.bf16.xpose.msra.mxu0 0
    %642 = vmatprep.subr.bf16.mxu0 0
    %643 = vmatpush1.bf16.xpose.msra.mxu0 0
    %644 = vmatprep.subr.bf16.mxu0 0
    %645 = vmatpush1.bf16.xpose.msra.mxu0 0
    %646 = vmatprep.subr.bf16.mxu0 0
    %647 = vmatpush1.bf16.xpose.msra.mxu0 0
    %648 = vmatprep.subr.bf16.mxu0 0
    %649 = vmatpush1.bf16.xpose.msra.mxu0 0
    %650 = vmatprep.subr.bf16.mxu0 0
    %651 = vmatpush1.bf16.xpose.msra.mxu0 0
    %652 = vmatprep.subr.bf16.mxu0 0
    %653 = vmatpush1.bf16.xpose.msra.mxu0 0
    %654 = vmatprep.subr.bf16.mxu0 0
    %655 = vmatpush1.bf16.xpose.msra.mxu0 %v638
    %656 = vmatprep.subr.bf16.mxu0 0
    %657 = vmatpush2.bf16.xpose.msra.mxu0 0
    %658 = vmatprep.subr.bf16.mxu0 0
    %659 = vmatpush2.bf16.xpose.msra.mxu0 0
    %660 = vmatprep.subr.bf16.mxu0 0
    %661 = vmatpush2.bf16.xpose.msra.mxu0 0
    %662 = vmatprep.subr.bf16.mxu0 0
    %663 = vmatpush2.bf16.xpose.msra.mxu0 0
    %664 = vmatprep.subr.bf16.mxu0 0
    %665 = vmatpush2.bf16.xpose.msra.mxu0 0
    %666 = vmatprep.subr.bf16.mxu0 0
    %667 = vmatpush2.bf16.xpose.msra.mxu0 0
    %668 = vmatprep.subr.bf16.mxu0 0
    %669 = vmatpush2.bf16.xpose.msra.mxu0 0
    %670 = vmatprep.subr.bf16.mxu0 0
    %671 = vmatpush2.bf16.xpose.msra.mxu0 0
    %672 = vmatprep.mubr.bf16.mxu0 0
    %673 = vmatmul.mubr.bf16.gmra.mxu0 %v635
    %v674 = vpop.f32.mrf.mxu0
    %v675 = vadd.f32 0.0, %v674
    %v676 = vpop.f32.mrf.mxu0
    %v677 = vpop.f32.mrf.mxu0
    %v678 = vpop.f32.mrf.mxu0
    %679 = vdwg.mxu0
    %v680 = vsel %vm315, %v675, -inf
    %681 = vmax.xlane.f32.xlu0 %v680
    %v682 = vpop.xlane.xlu0 %681
    %v683 = vsub.f32 %v675, %v682
    %v684 = vmul.f32 %v683, 1.442695
    %v685 = vpow.pop %v684
    %v686 = vsel %vm315, %v685, 0.0
    %687 = vadd.xlane.f32.xlu0 %v686
    %v688 = vpop.xlane.xlu0 %687
    %v689 = vrcp.pop %v688
    %v690 = vmul.f32 %v685, %v689
    %s691 = scalar_lea.vmem [#allocation4], 16
    %692 = vst.msk [vmem:[%s691] sm:$0xff] %vm315, %v690
    %v693 = vpack.c.bf16 %v690, %v690
    %694 = vrot.lane.b32.xlu0 %v313, 112
    %v695 = vpop.permute.xlu0 %694
    %v697 = vsel %vm315, %v693, 0
    %v700 = vsel %vm378, %v695, 0
    %702 = vmatprep.subr.bf16.mxu0 0
    %703 = vmatpush1.bf16.msra.mxu0 0
    %704 = vmatprep.subr.bf16.mxu0 0
    %705 = vmatpush1.bf16.msra.mxu0 0
    %706 = vmatprep.subr.bf16.mxu0 0
    %707 = vmatpush1.bf16.msra.mxu0 0
    %708 = vmatprep.subr.bf16.mxu0 0
    %709 = vmatpush1.bf16.msra.mxu0 0
    %710 = vmatprep.subr.bf16.mxu0 0
    %711 = vmatpush1.bf16.msra.mxu0 0
    %712 = vmatprep.subr.bf16.mxu0 0
    %713 = vmatpush1.bf16.msra.mxu0 0
    %714 = vmatprep.subr.bf16.mxu0 0
    %715 = vmatpush1.bf16.msra.mxu0 0
    %716 = vmatprep.subr.bf16.mxu0 0
    %717 = vmatpush1.bf16.msra.mxu0 %v700
    %718 = vmatprep.subr.bf16.mxu0 0
    %719 = vmatpush2.bf16.msra.mxu0 0
    %720 = vmatprep.subr.bf16.mxu0 0
    %721 = vmatpush2.bf16.msra.mxu0 0
    %722 = vmatprep.subr.bf16.mxu0 0
    %723 = vmatpush2.bf16.msra.mxu0 0
    %724 = vmatprep.subr.bf16.mxu0 0
    %725 = vmatpush2.bf16.msra.mxu0 0
    %726 = vmatprep.subr.bf16.mxu0 0
    %727 = vmatpush2.bf16.msra.mxu0 0
    %728 = vmatprep.subr.bf16.mxu0 0
    %729 = vmatpush2.bf16.msra.mxu0 0
    %730 = vmatprep.subr.bf16.mxu0 0
    %731 = vmatpush2.bf16.msra.mxu0 0
    %732 = vmatprep.subr.bf16.mxu0 0
    %733 = vmatpush2.bf16.msra.mxu0 0
    %734 = vmatprep.mubr.bf16.mxu0 0
    %735 = vmatmul.mubr.bf16.gmra.mxu0 %v697
    %v736 = vpop.f32.mrf.mxu0
    %v737 = vadd.f32 0.0, %v736
    %v738 = vpop.f32.mrf.mxu0
    %v739 = vpop.f32.mrf.mxu0
    %v740 = vpop.f32.mrf.mxu0
    %741 = vdwg.mxu0
    %v742 = vpack.c.bf16 %v737, %v737
    %v743 = vld [vmem:[%s7 + $0x8] sm:$0xf]
    %v745 = vsel %vm315, %v742, 0
    %v748 = vsel %vm378, %v743, 0
    %750 = vmatprep.subr.bf16.mxu0 0
    %751 = vmatpush1.bf16.msra.mxu0 0
    %752 = vmatprep.subr.bf16.mxu0 0
    %753 = vmatpush1.bf16.msra.mxu0 0
    %754 = vmatprep.subr.bf16.mxu0 0
    %755 = vmatpush1.bf16.msra.mxu0 0
    %756 = vmatprep.subr.bf16.mxu0 0
    %757 = vmatpush1.bf16.msra.mxu0 0
    %758 = vmatprep.subr.bf16.mxu0 0
    %759 = vmatpush1.bf16.msra.mxu0 0
    %760 = vmatprep.subr.bf16.mxu0 0
    %761 = vmatpush1.bf16.msra.mxu0 0
    %762 = vmatprep.subr.bf16.mxu0 0
    %763 = vmatpush1.bf16.msra.mxu0 0
    %764 = vmatprep.subr.bf16.mxu0 0
    %765 = vmatpush1.bf16.msra.mxu0 %v748
    %766 = vmatprep.subr.bf16.mxu0 0
    %767 = vmatpush2.bf16.msra.mxu0 0
    %768 = vmatprep.subr.bf16.mxu0 0
    %769 = vmatpush2.bf16.msra.mxu0 0
    %770 = vmatprep.subr.bf16.mxu0 0
    %771 = vmatpush2.bf16.msra.mxu0 0
    %772 = vmatprep.subr.bf16.mxu0 0
    %773 = vmatpush2.bf16.msra.mxu0 0
    %774 = vmatprep.subr.bf16.mxu0 0
    %775 = vmatpush2.bf16.msra.mxu0 0
    %776 = vmatprep.subr.bf16.mxu0 0
    %777 = vmatpush2.bf16.msra.mxu0 0
    %778 = vmatprep.subr.bf16.mxu0 0
    %779 = vmatpush2.bf16.msra.mxu0 0
    %780 = vmatprep.subr.bf16.mxu0 0
    %781 = vmatpush2.bf16.msra.mxu0 0
    %782 = vmatprep.mubr.bf16.mxu0 0
    %783 = vmatmul.mubr.bf16.gmra.mxu0 %v745
    %v784 = vpop.f32.mrf.mxu0
    %v785 = vadd.f32 0.0, %v784
    %v786 = vpop.f32.mrf.mxu0
    %v787 = vpop.f32.mrf.mxu0
    %v788 = vpop.f32.mrf.mxu0
    %789 = vdwg.mxu0
    %v790 = vadd.f32 %v625, %v785
    %791 = vrot.lane.b32.xlu0 %v301, 104
    %v792 = vpop.permute.xlu0 %791
    %793 = vrot.lane.b32.xlu0 %v307, 104
    %v794 = vpop.permute.xlu0 %793
    %v796 = vsel %vm315, %v792, 0
    %v799 = vsel %vm315, %v794, 0
    %801 = vmatprep.subr.bf16.mxu0 0
    %802 = vmatpush1.bf16.xpose.msra.mxu0 0
    %803 = vmatprep.subr.bf16.mxu0 0
    %804 = vmatpush1.bf16.xpose.msra.mxu0 0
    %805 = vmatprep.subr.bf16.mxu0 0
    %806 = vmatpush1.bf16.xpose.msra.mxu0 0
    %807 = vmatprep.subr.bf16.mxu0 0
    %808 = vmatpush1.bf16.xpose.msra.mxu0 0
    %809 = vmatprep.subr.bf16.mxu0 0
    %810 = vmatpush1.bf16.xpose.msra.mxu0 0
    %811 = vmatprep.subr.bf16.mxu0 0
    %812 = vmatpush1.bf16.xpose.msra.mxu0 0
    %813 = vmatprep.subr.bf16.mxu0 0
    %814 = vmatpush1.bf16.xpose.msra.mxu0 0
    %815 = vmatprep.subr.bf16.mxu0 0
    %816 = vmatpush1.bf16.xpose.msra.mxu0 %v799
    %817 = vmatprep.subr.bf16.mxu0 0
    %818 = vmatpush2.bf16.xpose.msra.mxu0 0
    %819 = vmatprep.subr.bf16.mxu0 0
    %820 = vmatpush2.bf16.xpose.msra.mxu0 0
    %821 = vmatprep.subr.bf16.mxu0 0
    %822 = vmatpush2.bf16.xpose.msra.mxu0 0
    %823 = vmatprep.subr.bf16.mxu0 0
    %824 = vmatpush2.bf16.xpose.msra.mxu0 0
    %825 = vmatprep.subr.bf16.mxu0 0
    %826 = vmatpush2.bf16.xpose.msra.mxu0 0
    %827 = vmatprep.subr.bf16.mxu0 0
    %828 = vmatpush2.bf16.xpose.msra.mxu0 0
    %829 = vmatprep.subr.bf16.mxu0 0
    %830 = vmatpush2.bf16.xpose.msra.mxu0 0
    %831 = vmatprep.subr.bf16.mxu0 0
    %832 = vmatpush2.bf16.xpose.msra.mxu0 0
    %833 = vmatprep.mubr.bf16.mxu0 0
    %834 = vmatmul.mubr.bf16.gmra.mxu0 %v796
    %v835 = vpop.f32.mrf.mxu0
    %v836 = vadd.f32 0.0, %v835
    %v837 = vpop.f32.mrf.mxu0
    %v838 = vpop.f32.mrf.mxu0
    %v839 = vpop.f32.mrf.mxu0
    %840 = vdwg.mxu0
    %v841 = vsel %vm315, %v836, -inf
    %842 = vmax.xlane.f32.xlu0 %v841
    %v843 = vpop.xlane.xlu0 %842
    %v844 = vsub.f32 %v836, %v843
    %v845 = vmul.f32 %v844, 1.442695
    %v846 = vpow.pop %v845
    %v847 = vsel %vm315, %v846, 0.0
    %848 = vadd.xlane.f32.xlu0 %v847
    %v849 = vpop.xlane.xlu0 %848
    %v850 = vrcp.pop %v849
    %v851 = vmul.f32 %v846, %v850
    %s852 = scalar_lea.vmem [#allocation4], 24
    %853 = vst.msk [vmem:[%s852] sm:$0xff] %vm315, %v851
    %v854 = vpack.c.bf16 %v851, %v851
    %855 = vrot.lane.b32.xlu0 %v313, 104
    %v856 = vpop.permute.xlu0 %855
    %v858 = vsel %vm315, %v854, 0
    %v861 = vsel %vm378, %v856, 0
    %863 = vmatprep.subr.bf16.mxu0 0
    %864 = vmatpush1.bf16.msra.mxu0 0
    %865 = vmatprep.subr.bf16.mxu0 0
    %866 = vmatpush1.bf16.msra.mxu0 0
    %867 = vmatprep.subr.bf16.mxu0 0
    %868 = vmatpush1.bf16.msra.mxu0 0
    %869 = vmatprep.subr.bf16.mxu0 0
    %870 = vmatpush1.bf16.msra.mxu0 0
    %871 = vmatprep.subr.bf16.mxu0 0
    %872 = vmatpush1.bf16.msra.mxu0 0
    %873 = vmatprep.subr.bf16.mxu0 0
    %874 = vmatpush1.bf16.msra.mxu0 0
    %875 = vmatprep.subr.bf16.mxu0 0
    %876 = vmatpush1.bf16.msra.mxu0 0
    %877 = vmatprep.subr.bf16.mxu0 0
    %878 = vmatpush1.bf16.msra.mxu0 %v861
    %879 = vmatprep.subr.bf16.mxu0 0
    %880 = vmatpush2.bf16.msra.mxu0 0
    %881 = vmatprep.subr.bf16.mxu0 0
    %882 = vmatpush2.bf16.msra.mxu0 0
    %883 = vmatprep.subr.bf16.mxu0 0
    %884 = vmatpush2.bf16.msra.mxu0 0
    %885 = vmatprep.subr.bf16.mxu0 0
    %886 = vmatpush2.bf16.msra.mxu0 0
    %887 = vmatprep.subr.bf16.mxu0 0
    %888 = vmatpush2.bf16.msra.mxu0 0
    %889 = vmatprep.subr.bf16.mxu0 0
    %890 = vmatpush2.bf16.msra.mxu0 0
    %891 = vmatprep.subr.bf16.mxu0 0
    %892 = vmatpush2.bf16.msra.mxu0 0
    %893 = vmatprep.subr.bf16.mxu0 0
    %894 = vmatpush2.bf16.msra.mxu0 0
    %895 = vmatprep.mubr.bf16.mxu0 0
    %896 = vmatmul.mubr.bf16.gmra.mxu0 %v858
    %v897 = vpop.f32.mrf.mxu0
    %v898 = vadd.f32 0.0, %v897
    %v899 = vpop.f32.mrf.mxu0
    %v900 = vpop.f32.mrf.mxu0
    %v901 = vpop.f32.mrf.mxu0
    %902 = vdwg.mxu0
    %v903 = vpack.c.bf16 %v898, %v898
    %v904 = vld [vmem:[%s7 + $0xc] sm:$0xf]
    %v906 = vsel %vm315, %v903, 0
    %v909 = vsel %vm378, %v904, 0
    %911 = vmatprep.subr.bf16.mxu0 0
    %912 = vmatpush1.bf16.msra.mxu0 0
    %913 = vmatprep.subr.bf16.mxu0 0
    %914 = vmatpush1.bf16.msra.mxu0 0
    %915 = vmatprep.subr.bf16.mxu0 0
    %916 = vmatpush1.bf16.msra.mxu0 0
    %917 = vmatprep.subr.bf16.mxu0 0
    %918 = vmatpush1.bf16.msra.mxu0 0
    %919 = vmatprep.subr.bf16.mxu0 0
    %920 = vmatpush1.bf16.msra.mxu0 0
    %921 = vmatprep.subr.bf16.mxu0 0
    %922 = vmatpush1.bf16.msra.mxu0 0
    %923 = vmatprep.subr.bf16.mxu0 0
    %924 = vmatpush1.bf16.msra.mxu0 0
    %925 = vmatprep.subr.bf16.mxu0 0
    %926 = vmatpush1.bf16.msra.mxu0 %v909
    %927 = vmatprep.subr.bf16.mxu0 0
    %928 = vmatpush2.bf16.msra.mxu0 0
    %929 = vmatprep.subr.bf16.mxu0 0
    %930 = vmatpush2.bf16.msra.mxu0 0
    %931 = vmatprep.subr.bf16.mxu0 0
    %932 = vmatpush2.bf16.msra.mxu0 0
    %933 = vmatprep.subr.bf16.mxu0 0
    %934 = vmatpush2.bf16.msra.mxu0 0
    %935 = vmatprep.subr.bf16.mxu0 0
    %936 = vmatpush2.bf16.msra.mxu0 0
    %937 = vmatprep.subr.bf16.mxu0 0
    %938 = vmatpush2.bf16.msra.mxu0 0
    %939 = vmatprep.subr.bf16.mxu0 0
    %940 = vmatpush2.bf16.msra.mxu0 0
    %941 = vmatprep.subr.bf16.mxu0 0
    %942 = vmatpush2.bf16.msra.mxu0 0
    %943 = vmatprep.mubr.bf16.mxu0 0
    %944 = vmatmul.mubr.bf16.gmra.mxu0 %v906
    %v945 = vpop.f32.mrf.mxu0
    %v946 = vadd.f32 0.0, %v945
    %v947 = vpop.f32.mrf.mxu0
    %v948 = vpop.f32.mrf.mxu0
    %v949 = vpop.f32.mrf.mxu0
    %950 = vdwg.mxu0
    %v951 = vadd.f32 %v790, %v946
    %v953 = vsel %vm315, %v302, 0
    %v956 = vsel %vm315, %v308, 0
    %958 = vmatprep.subr.bf16.mxu0 0
    %959 = vmatpush1.bf16.xpose.msra.mxu0 0
    %960 = vmatprep.subr.bf16.mxu0 0
    %961 = vmatpush1.bf16.xpose.msra.mxu0 0
    %962 = vmatprep.subr.bf16.mxu0 0
    %963 = vmatpush1.bf16.xpose.msra.mxu0 0
    %964 = vmatprep.subr.bf16.mxu0 0
    %965 = vmatpush1.bf16.xpose.msra.mxu0 0
    %966 = vmatprep.subr.bf16.mxu0 0
    %967 = vmatpush1.bf16.xpose.msra.mxu0 0
    %968 = vmatprep.subr.bf16.mxu0 0
    %969 = vmatpush1.bf16.xpose.msra.mxu0 0
    %970 = vmatprep.subr.bf16.mxu0 0
    %971 = vmatpush1.bf16.xpose.msra.mxu0 0
    %972 = vmatprep.subr.bf16.mxu0 0
    %973 = vmatpush1.bf16.xpose.msra.mxu0 %v956
    %974 = vmatprep.subr.bf16.mxu0 0
    %975 = vmatpush2.bf16.xpose.msra.mxu0 0
    %976 = vmatprep.subr.bf16.mxu0 0
    %977 = vmatpush2.bf16.xpose.msra.mxu0 0
    %978 = vmatprep.subr.bf16.mxu0 0
    %979 = vmatpush2.bf16.xpose.msra.mxu0 0
    %980 = vmatprep.subr.bf16.mxu0 0
    %981 = vmatpush2.bf16.xpose.msra.mxu0 0
    %982 = vmatprep.subr.bf16.mxu0 0
    %983 = vmatpush2.bf16.xpose.msra.mxu0 0
    %984 = vmatprep.subr.bf16.mxu0 0
    %985 = vmatpush2.bf16.xpose.msra.mxu0 0
    %986 = vmatprep.subr.bf16.mxu0 0
    %987 = vmatpush2.bf16.xpose.msra.mxu0 0
    %988 = vmatprep.subr.bf16.mxu0 0
    %989 = vmatpush2.bf16.xpose.msra.mxu0 0
    %990 = vmatprep.mubr.bf16.mxu0 0
    %991 = vmatmul.mubr.bf16.gmra.mxu0 %v953
    %v992 = vpop.f32.mrf.mxu0
    %v993 = vadd.f32 0.0, %v992
    %v994 = vpop.f32.mrf.mxu0
    %v995 = vpop.f32.mrf.mxu0
    %v996 = vpop.f32.mrf.mxu0
    %997 = vdwg.mxu0
    %v998 = vsel %vm315, %v993, -inf
    %999 = vmax.xlane.f32.xlu0 %v998
    %v1000 = vpop.xlane.xlu0 %999
    %v1001 = vsub.f32 %v993, %v1000
    %v1002 = vmul.f32 %v1001, 1.442695
    %v1003 = vpow.pop %v1002
    %v1004 = vsel %vm315, %v1003, 0.0
    %1005 = vadd.xlane.f32.xlu0 %v1004
    %v1006 = vpop.xlane.xlu0 %1005
    %v1007 = vrcp.pop %v1006
    %v1008 = vmul.f32 %v1003, %v1007
    %s1009 = scalar_lea.vmem [#allocation4], 32
    %1010 = vst.msk [vmem:[%s1009] sm:$0xff] %vm315, %v1008
    %v1011 = vpack.c.bf16 %v1008, %v1008
    %v1013 = vsel %vm315, %v1011, 0
    %v1016 = vsel %vm378, %v314, 0
    %1018 = vmatprep.subr.bf16.mxu0 0
    %1019 = vmatpush1.bf16.msra.mxu0 0
    %1020 = vmatprep.subr.bf16.mxu0 0
    %1021 = vmatpush1.bf16.msra.mxu0 0
    %1022 = vmatprep.subr.bf16.mxu0 0
    %1023 = vmatpush1.bf16.msra.mxu0 0
    %1024 = vmatprep.subr.bf16.mxu0 0
    %1025 = vmatpush1.bf16.msra.mxu0 0
    %1026 = vmatprep.subr.bf16.mxu0 0
    %1027 = vmatpush1.bf16.msra.mxu0 0
    %1028 = vmatprep.subr.bf16.mxu0 0
    %1029 = vmatpush1.bf16.msra.mxu0 0
    %1030 = vmatprep.subr.bf16.mxu0 0
    %1031 = vmatpush1.bf16.msra.mxu0 0
    %1032 = vmatprep.subr.bf16.mxu0 0
    %1033 = vmatpush1.bf16.msra.mxu0 %v1016
    %1034 = vmatprep.subr.bf16.mxu0 0
    %1035 = vmatpush2.bf16.msra.mxu0 0
    %1036 = vmatprep.subr.bf16.mxu0 0
    %1037 = vmatpush2.bf16.msra.mxu0 0
    %1038 = vmatprep.subr.bf16.mxu0 0
    %1039 = vmatpush2.bf16.msra.mxu0 0
    %1040 = vmatprep.subr.bf16.mxu0 0
    %1041 = vmatpush2.bf16.msra.mxu0 0
    %1042 = vmatprep.subr.bf16.mxu0 0
    %1043 = vmatpush2.bf16.msra.mxu0 0
    %1044 = vmatprep.subr.bf16.mxu0 0
    %1045 = vmatpush2.bf16.msra.mxu0 0
    %1046 = vmatprep.subr.bf16.mxu0 0
    %1047 = vmatpush2.bf16.msra.mxu0 0
    %1048 = vmatprep.subr.bf16.mxu0 0
    %1049 = vmatpush2.bf16.msra.mxu0 0
    %1050 = vmatprep.mubr.bf16.mxu0 0
    %1051 = vmatmul.mubr.bf16.gmra.mxu0 %v1013
    %v1052 = vpop.f32.mrf.mxu0
    %v1053 = vadd.f32 0.0, %v1052
    %v1054 = vpop.f32.mrf.mxu0
    %v1055 = vpop.f32.mrf.mxu0
    %v1056 = vpop.f32.mrf.mxu0
    %1057 = vdwg.mxu0
    %v1058 = vpack.c.bf16 %v1053, %v1053
    %v1059 = vld [vmem:[%s7] sm:$0xf]
    %1060 = vrot.lane.b32.xlu0 %v302, 120
    %v1061 = vpop.permute.xlu0 %1060
    %1062 = vrot.lane.b32.xlu0 %v308, 120
    %v1063 = vpop.permute.xlu0 %1062
    %v1065 = vsel %vm315, %v1061, 0
    %v1068 = vsel %vm315, %v1063, 0
    %1070 = vmatprep.subr.bf16.mxu0 0
    %1071 = vmatpush1.bf16.xpose.msra.mxu0 0
    %1072 = vmatprep.subr.bf16.mxu0 0
    %1073 = vmatpush1.bf16.xpose.msra.mxu0 0
    %1074 = vmatprep.subr.bf16.mxu0 0
    %1075 = vmatpush1.bf16.xpose.msra.mxu0 0
    %1076 = vmatprep.subr.bf16.mxu0 0
    %1077 = vmatpush1.bf16.xpose.msra.mxu0 0
    %1078 = vmatprep.subr.bf16.mxu0 0
    %1079 = vmatpush1.bf16.xpose.msra.mxu0 0
    %1080 = vmatprep.subr.bf16.mxu0 0
    %1081 = vmatpush1.bf16.xpose.msra.mxu0 0
    %1082 = vmatprep.subr.bf16.mxu0 0
    %1083 = vmatpush1.bf16.xpose.msra.mxu0 0
    %1084 = vmatprep.subr.bf16.mxu0 0
    %1085 = vmatpush1.bf16.xpose.msra.mxu0 %v1068
    %1086 = vmatprep.subr.bf16.mxu0 0
    %1087 = vmatpush2.bf16.xpose.msra.mxu0 0
    %1088 = vmatprep.subr.bf16.mxu0 0
    %1089 = vmatpush2.bf16.xpose.msra.mxu0 0
    %1090 = vmatprep.subr.bf16.mxu0 0
    %1091 = vmatpush2.bf16.xpose.msra.mxu0 0
    %1092 = vmatprep.subr.bf16.mxu0 0
    %1093 = vmatpush2.bf16.xpose.msra.mxu0 0
    %1094 = vmatprep.subr.bf16.mxu0 0
    %1095 = vmatpush2.bf16.xpose.msra.mxu0 0
    %1096 = vmatprep.subr.bf16.mxu0 0
    %1097 = vmatpush2.bf16.xpose.msra.mxu0 0
    %1098 = vmatprep.subr.bf16.mxu0 0
    %1099 = vmatpush2.bf16.xpose.msra.mxu0 0
    %1100 = vmatprep.subr.bf16.mxu0 0
    %1101 = vmatpush2.bf16.xpose.msra.mxu0 0
    %1102 = vmatprep.mubr.bf16.mxu0 0
    %1103 = vmatmul.mubr.bf16.gmra.mxu0 %v1065
    %v1104 = vpop.f32.mrf.mxu0
    %v1105 = vadd.f32 0.0, %v1104
    %v1106 = vpop.f32.mrf.mxu0
    %v1107 = vpop.f32.mrf.mxu0
    %v1108 = vpop.f32.mrf.mxu0
    %1109 = vdwg.mxu0
    %v1110 = vsel %vm315, %v1105, -inf
    %1111 = vmax.xlane.f32.xlu0 %v1110
    %v1112 = vpop.xlane.xlu0 %1111
    %v1113 = vsub.f32 %v1105, %v1112
    %v1114 = vmul.f32 %v1113, 1.442695
    %v1115 = vpow.pop %v1114
    %v1116 = vsel %vm315, %v1115, 0.0
    %1117 = vadd.xlane.f32.xlu0 %v1116
    %v1118 = vpop.xlane.xlu0 %1117
    %v1119 = vrcp.pop %v1118
    %v1120 = vmul.f32 %v1115, %v1119
    %s1121 = scalar_lea.vmem [#allocation4], 40
    %1122 = vst.msk [vmem:[%s1121] sm:$0xff] %vm315, %v1120
    %v1123 = vpack.c.bf16 %v1120, %v1120
    %1124 = vrot.lane.b32.xlu0 %v314, 120
    %v1125 = vpop.permute.xlu0 %1124
    %v1127 = vsel %vm315, %v1123, 0
    %v1130 = vsel %vm378, %v1125, 0
    %1132 = vmatprep.subr.bf16.mxu0 0
    %1133 = vmatpush1.bf16.msra.mxu0 0
    %1134 = vmatprep.subr.bf16.mxu0 0
    %1135 = vmatpush1.bf16.msra.mxu0 0
    %1136 = vmatprep.subr.bf16.mxu0 0
    %1137 = vmatpush1.bf16.msra.mxu0 0
    %1138 = vmatprep.subr.bf16.mxu0 0
    %1139 = vmatpush1.bf16.msra.mxu0 0
    %1140 = vmatprep.subr.bf16.mxu0 0
    %1141 = vmatpush1.bf16.msra.mxu0 0
    %1142 = vmatprep.subr.bf16.mxu0 0
    %1143 = vmatpush1.bf16.msra.mxu0 0
    %1144 = vmatprep.subr.bf16.mxu0 0
    %1145 = vmatpush1.bf16.msra.mxu0 0
    %1146 = vmatprep.subr.bf16.mxu0 0
    %1147 = vmatpush1.bf16.msra.mxu0 %v1130
    %1148 = vmatprep.subr.bf16.mxu0 0
    %1149 = vmatpush2.bf16.msra.mxu0 0
    %1150 = vmatprep.subr.bf16.mxu0 0
    %1151 = vmatpush2.bf16.msra.mxu0 0
    %1152 = vmatprep.subr.bf16.mxu0 0
    %1153 = vmatpush2.bf16.msra.mxu0 0
    %1154 = vmatprep.subr.bf16.mxu0 0
    %1155 = vmatpush2.bf16.msra.mxu0 0
    %1156 = vmatprep.subr.bf16.mxu0 0
    %1157 = vmatpush2.bf16.msra.mxu0 0
    %1158 = vmatprep.subr.bf16.mxu0 0
    %1159 = vmatpush2.bf16.msra.mxu0 0
    %1160 = vmatprep.subr.bf16.mxu0 0
    %1161 = vmatpush2.bf16.msra.mxu0 0
    %1162 = vmatprep.subr.bf16.mxu0 0
    %1163 = vmatpush2.bf16.msra.mxu0 0
    %1164 = vmatprep.mubr.bf16.mxu0 0
    %1165 = vmatmul.mubr.bf16.gmra.mxu0 %v1127
    %v1166 = vpop.f32.mrf.mxu0
    %v1167 = vadd.f32 0.0, %v1166
    %v1168 = vpop.f32.mrf.mxu0
    %v1169 = vpop.f32.mrf.mxu0
    %v1170 = vpop.f32.mrf.mxu0
    %1171 = vdwg.mxu0
    %v1172 = vpack.c.bf16 %v1167, %v1167
    %v1173 = vld [vmem:[%s7 + $0x4] sm:$0xf]
    %v1175 = vsel %vm315, %v1172, 0
    %v1178 = vsel %vm378, %v1173, 0
    %1180 = vmatprep.subr.bf16.mxu0 0
    %1181 = vmatpush1.bf16.msra.mxu0 0
    %1182 = vmatprep.subr.bf16.mxu0 0
    %1183 = vmatpush1.bf16.msra.mxu0 0
    %1184 = vmatprep.subr.bf16.mxu0 0
    %1185 = vmatpush1.bf16.msra.mxu0 0
    %1186 = vmatprep.subr.bf16.mxu0 0
    %1187 = vmatpush1.bf16.msra.mxu0 0
    %1188 = vmatprep.subr.bf16.mxu0 0
    %1189 = vmatpush1.bf16.msra.mxu0 0
    %1190 = vmatprep.subr.bf16.mxu0 0
    %1191 = vmatpush1.bf16.msra.mxu0 0
    %1192 = vmatprep.subr.bf16.mxu0 0
    %1193 = vmatpush1.bf16.msra.mxu0 0
    %1194 = vmatprep.subr.bf16.mxu0 0
    %1195 = vmatpush1.bf16.msra.mxu0 %v1178
    %1196 = vmatprep.subr.bf16.mxu0 0
    %1197 = vmatpush2.bf16.msra.mxu0 0
    %1198 = vmatprep.subr.bf16.mxu0 0
    %1199 = vmatpush2.bf16.msra.mxu0 0
    %1200 = vmatprep.subr.bf16.mxu0 0
    %1201 = vmatpush2.bf16.msra.mxu0 0
    %1202 = vmatprep.subr.bf16.mxu0 0
    %1203 = vmatpush2.bf16.msra.mxu0 0
    %1204 = vmatprep.subr.bf16.mxu0 0
    %1205 = vmatpush2.bf16.msra.mxu0 0
    %1206 = vmatprep.subr.bf16.mxu0 0
    %1207 = vmatpush2.bf16.msra.mxu0 0
    %1208 = vmatprep.subr.bf16.mxu0 0
    %1209 = vmatpush2.bf16.msra.mxu0 0
    %1210 = vmatprep.subr.bf16.mxu0 0
    %1211 = vmatpush2.bf16.msra.mxu0 0
    %1212 = vmatprep.mubr.bf16.mxu0 0
    %1213 = vmatmul.mubr.bf16.gmra.mxu0 %v1175
    %v1214 = vpop.f32.mrf.mxu0
    %v1215 = vadd.f32 0.0, %v1214
    %v1216 = vpop.f32.mrf.mxu0
    %v1217 = vpop.f32.mrf.mxu0
    %v1218 = vpop.f32.mrf.mxu0
    %1219 = vdwg.mxu0
    %v1221 = vsel %vm315, %v1058, 0
    %v1224 = vsel %vm378, %v1059, 0
    %1226 = vmatprep.subr.bf16.mxu0 0
    %1227 = vmatpush1.bf16.msra.mxu0 0
    %1228 = vmatprep.subr.bf16.mxu0 0
    %1229 = vmatpush1.bf16.msra.mxu0 0
    %1230 = vmatprep.subr.bf16.mxu0 0
    %1231 = vmatpush1.bf16.msra.mxu0 0
    %1232 = vmatprep.subr.bf16.mxu0 0
    %1233 = vmatpush1.bf16.msra.mxu0 0
    %1234 = vmatprep.subr.bf16.mxu0 0
    %1235 = vmatpush1.bf16.msra.mxu0 0
    %1236 = vmatprep.subr.bf16.mxu0 0
    %1237 = vmatpush1.bf16.msra.mxu0 0
    %1238 = vmatprep.subr.bf16.mxu0 0
    %1239 = vmatpush1.bf16.msra.mxu0 0
    %1240 = vmatprep.subr.bf16.mxu0 0
    %1241 = vmatpush1.bf16.msra.mxu0 %v1224
    %1242 = vmatprep.subr.bf16.mxu0 0
    %1243 = vmatpush2.bf16.msra.mxu0 0
    %1244 = vmatprep.subr.bf16.mxu0 0
    %1245 = vmatpush2.bf16.msra.mxu0 0
    %1246 = vmatprep.subr.bf16.mxu0 0
    %1247 = vmatpush2.bf16.msra.mxu0 0
    %1248 = vmatprep.subr.bf16.mxu0 0
    %1249 = vmatpush2.bf16.msra.mxu0 0
    %1250 = vmatprep.subr.bf16.mxu0 0
    %1251 = vmatpush2.bf16.msra.mxu0 0
    %1252 = vmatprep.subr.bf16.mxu0 0
    %1253 = vmatpush2.bf16.msra.mxu0 0
    %1254 = vmatprep.subr.bf16.mxu0 0
    %1255 = vmatpush2.bf16.msra.mxu0 0
    %1256 = vmatprep.subr.bf16.mxu0 0
    %1257 = vmatpush2.bf16.msra.mxu0 0
    %1258 = vmatprep.mubr.bf16.mxu0 0
    %1259 = vmatmul.mubr.bf16.gmra.mxu0 %v1221
    %v1260 = vpop.f32.mrf.mxu0
    %v1261 = vadd.f32 %v1215, %v1260
    %v1262 = vpop.f32.mrf.mxu0
    %v1263 = vpop.f32.mrf.mxu0
    %v1264 = vpop.f32.mrf.mxu0
    %1265 = vdwg.mxu0
    %1266 = vrot.lane.b32.xlu0 %v302, 112
    %v1267 = vpop.permute.xlu0 %1266
    %1268 = vrot.lane.b32.xlu0 %v308, 112
    %v1269 = vpop.permute.xlu0 %1268
    %v1271 = vsel %vm315, %v1267, 0
    %v1274 = vsel %vm315, %v1269, 0
    %1276 = vmatprep.subr.bf16.mxu0 0
    %1277 = vmatpush1.bf16.xpose.msra.mxu0 0
    %1278 = vmatprep.subr.bf16.mxu0 0
    %1279 = vmatpush1.bf16.xpose.msra.mxu0 0
    %1280 = vmatprep.subr.bf16.mxu0 0
    %1281 = vmatpush1.bf16.xpose.msra.mxu0 0
    %1282 = vmatprep.subr.bf16.mxu0 0
    %1283 = vmatpush1.bf16.xpose.msra.mxu0 0
    %1284 = vmatprep.subr.bf16.mxu0 0
    %1285 = vmatpush1.bf16.xpose.msra.mxu0 0
    %1286 = vmatprep.subr.bf16.mxu0 0
    %1287 = vmatpush1.bf16.xpose.msra.mxu0 0
    %1288 = vmatprep.subr.bf16.mxu0 0
    %1289 = vmatpush1.bf16.xpose.msra.mxu0 0
    %1290 = vmatprep.subr.bf16.mxu0 0
    %1291 = vmatpush1.bf16.xpose.msra.mxu0 %v1274
    %1292 = vmatprep.subr.bf16.mxu0 0
    %1293 = vmatpush2.bf16.xpose.msra.mxu0 0
    %1294 = vmatprep.subr.bf16.mxu0 0
    %1295 = vmatpush2.bf16.xpose.msra.mxu0 0
    %1296 = vmatprep.subr.bf16.mxu0 0
    %1297 = vmatpush2.bf16.xpose.msra.mxu0 0
    %1298 = vmatprep.subr.bf16.mxu0 0
    %1299 = vmatpush2.bf16.xpose.msra.mxu0 0
    %1300 = vmatprep.subr.bf16.mxu0 0
    %1301 = vmatpush2.bf16.xpose.msra.mxu0 0
    %1302 = vmatprep.subr.bf16.mxu0 0
    %1303 = vmatpush2.bf16.xpose.msra.mxu0 0
    %1304 = vmatprep.subr.bf16.mxu0 0
    %1305 = vmatpush2.bf16.xpose.msra.mxu0 0
    %1306 = vmatprep.subr.bf16.mxu0 0
    %1307 = vmatpush2.bf16.xpose.msra.mxu0 0
    %1308 = vmatprep.mubr.bf16.mxu0 0
    %1309 = vmatmul.mubr.bf16.gmra.mxu0 %v1271
    %v1310 = vpop.f32.mrf.mxu0
    %v1311 = vadd.f32 0.0, %v1310
    %v1312 = vpop.f32.mrf.mxu0
    %v1313 = vpop.f32.mrf.mxu0
    %v1314 = vpop.f32.mrf.mxu0
    %1315 = vdwg.mxu0
    %v1316 = vsel %vm315, %v1311, -inf
    %1317 = vmax.xlane.f32.xlu0 %v1316
    %v1318 = vpop.xlane.xlu0 %1317
    %v1319 = vsub.f32 %v1311, %v1318
    %v1320 = vmul.f32 %v1319, 1.442695
    %v1321 = vpow.pop %v1320
    %v1322 = vsel %vm315, %v1321, 0.0
    %1323 = vadd.xlane.f32.xlu0 %v1322
    %v1324 = vpop.xlane.xlu0 %1323
    %v1325 = vrcp.pop %v1324
    %v1326 = vmul.f32 %v1321, %v1325
    %s1327 = scalar_lea.vmem [#allocation4], 48
    %1328 = vst.msk [vmem:[%s1327] sm:$0xff] %vm315, %v1326
    %v1329 = vpack.c.bf16 %v1326, %v1326
    %1330 = vrot.lane.b32.xlu0 %v314, 112
    %v1331 = vpop.permute.xlu0 %1330
    %v1333 = vsel %vm315, %v1329, 0
    %v1336 = vsel %vm378, %v1331, 0
    %1338 = vmatprep.subr.bf16.mxu0 0
    %1339 = vmatpush1.bf16.msra.mxu0 0
    %1340 = vmatprep.subr.bf16.mxu0 0
    %1341 = vmatpush1.bf16.msra.mxu0 0
    %1342 = vmatprep.subr.bf16.mxu0 0
    %1343 = vmatpush1.bf16.msra.mxu0 0
    %1344 = vmatprep.subr.bf16.mxu0 0
    %1345 = vmatpush1.bf16.msra.mxu0 0
    %1346 = vmatprep.subr.bf16.mxu0 0
    %1347 = vmatpush1.bf16.msra.mxu0 0
    %1348 = vmatprep.subr.bf16.mxu0 0
    %1349 = vmatpush1.bf16.msra.mxu0 0
    %1350 = vmatprep.subr.bf16.mxu0 0
    %1351 = vmatpush1.bf16.msra.mxu0 0
    %1352 = vmatprep.subr.bf16.mxu0 0
    %1353 = vmatpush1.bf16.msra.mxu0 %v1336
    %1354 = vmatprep.subr.bf16.mxu0 0
    %1355 = vmatpush2.bf16.msra.mxu0 0
    %1356 = vmatprep.subr.bf16.mxu0 0
    %1357 = vmatpush2.bf16.msra.mxu0 0
    %1358 = vmatprep.subr.bf16.mxu0 0
    %1359 = vmatpush2.bf16.msra.mxu0 0
    %1360 = vmatprep.subr.bf16.mxu0 0
    %1361 = vmatpush2.bf16.msra.mxu0 0
    %1362 = vmatprep.subr.bf16.mxu0 0
    %1363 = vmatpush2.bf16.msra.mxu0 0
    %1364 = vmatprep.subr.bf16.mxu0 0
    %1365 = vmatpush2.bf16.msra.mxu0 0
    %1366 = vmatprep.subr.bf16.mxu0 0
    %1367 = vmatpush2.bf16.msra.mxu0 0
    %1368 = vmatprep.subr.bf16.mxu0 0
    %1369 = vmatpush2.bf16.msra.mxu0 0
    %1370 = vmatprep.mubr.bf16.mxu0 0
    %1371 = vmatmul.mubr.bf16.gmra.mxu0 %v1333
    %v1372 = vpop.f32.mrf.mxu0
    %v1373 = vadd.f32 0.0, %v1372
    %v1374 = vpop.f32.mrf.mxu0
    %v1375 = vpop.f32.mrf.mxu0
    %v1376 = vpop.f32.mrf.mxu0
    %1377 = vdwg.mxu0
    %v1378 = vpack.c.bf16 %v1373, %v1373
    %v1379 = vld [vmem:[%s7 + $0x8] sm:$0xf]
    %v1381 = vsel %vm315, %v1378, 0
    %v1384 = vsel %vm378, %v1379, 0
    %1386 = vmatprep.subr.bf16.mxu0 0
    %1387 = vmatpush1.bf16.msra.mxu0 0
    %1388 = vmatprep.subr.bf16.mxu0 0
    %1389 = vmatpush1.bf16.msra.mxu0 0
    %1390 = vmatprep.subr.bf16.mxu0 0
    %1391 = vmatpush1.bf16.msra.mxu0 0
    %1392 = vmatprep.subr.bf16.mxu0 0
    %1393 = vmatpush1.bf16.msra.mxu0 0
    %1394 = vmatprep.subr.bf16.mxu0 0
    %1395 = vmatpush1.bf16.msra.mxu0 0
    %1396 = vmatprep.subr.bf16.mxu0 0
    %1397 = vmatpush1.bf16.msra.mxu0 0
    %1398 = vmatprep.subr.bf16.mxu0 0
    %1399 = vmatpush1.bf16.msra.mxu0 0
    %1400 = vmatprep.subr.bf16.mxu0 0
    %1401 = vmatpush1.bf16.msra.mxu0 %v1384
    %1402 = vmatprep.subr.bf16.mxu0 0
    %1403 = vmatpush2.bf16.msra.mxu0 0
    %1404 = vmatprep.subr.bf16.mxu0 0
    %1405 = vmatpush2.bf16.msra.mxu0 0
    %1406 = vmatprep.subr.bf16.mxu0 0
    %1407 = vmatpush2.bf16.msra.mxu0 0
    %1408 = vmatprep.subr.bf16.mxu0 0
    %1409 = vmatpush2.bf16.msra.mxu0 0
    %1410 = vmatprep.subr.bf16.mxu0 0
    %1411 = vmatpush2.bf16.msra.mxu0 0
    %1412 = vmatprep.subr.bf16.mxu0 0
    %1413 = vmatpush2.bf16.msra.mxu0 0
    %1414 = vmatprep.subr.bf16.mxu0 0
    %1415 = vmatpush2.bf16.msra.mxu0 0
    %1416 = vmatprep.subr.bf16.mxu0 0
    %1417 = vmatpush2.bf16.msra.mxu0 0
    %1418 = vmatprep.mubr.bf16.mxu0 0
    %1419 = vmatmul.mubr.bf16.gmra.mxu0 %v1381
    %v1420 = vpop.f32.mrf.mxu0
    %v1421 = vadd.f32 0.0, %v1420
    %v1422 = vpop.f32.mrf.mxu0
    %v1423 = vpop.f32.mrf.mxu0
    %v1424 = vpop.f32.mrf.mxu0
    %1425 = vdwg.mxu0
    %v1426 = vadd.f32 %v1261, %v1421
    %1427 = vrot.lane.b32.xlu0 %v302, 104
    %v1428 = vpop.permute.xlu0 %1427
    %1429 = vrot.lane.b32.xlu0 %v308, 104
    %v1430 = vpop.permute.xlu0 %1429
    %v1432 = vsel %vm315, %v1428, 0
    %v1435 = vsel %vm315, %v1430, 0
    %1437 = vmatprep.subr.bf16.mxu0 0
    %1438 = vmatpush1.bf16.xpose.msra.mxu0 0
    %1439 = vmatprep.subr.bf16.mxu0 0
    %1440 = vmatpush1.bf16.xpose.msra.mxu0 0
    %1441 = vmatprep.subr.bf16.mxu0 0
    %1442 = vmatpush1.bf16.xpose.msra.mxu0 0
    %1443 = vmatprep.subr.bf16.mxu0 0
    %1444 = vmatpush1.bf16.xpose.msra.mxu0 0
    %1445 = vmatprep.subr.bf16.mxu0 0
    %1446 = vmatpush1.bf16.xpose.msra.mxu0 0
    %1447 = vmatprep.subr.bf16.mxu0 0
    %1448 = vmatpush1.bf16.xpose.msra.mxu0 0
    %1449 = vmatprep.subr.bf16.mxu0 0
    %1450 = vmatpush1.bf16.xpose.msra.mxu0 0
    %1451 = vmatprep.subr.bf16.mxu0 0
    %1452 = vmatpush1.bf16.xpose.msra.mxu0 %v1435
    %1453 = vmatprep.subr.bf16.mxu0 0
    %1454 = vmatpush2.bf16.xpose.msra.mxu0 0
    %1455 = vmatprep.subr.bf16.mxu0 0
    %1456 = vmatpush2.bf16.xpose.msra.mxu0 0
    %1457 = vmatprep.subr.bf16.mxu0 0
    %1458 = vmatpush2.bf16.xpose.msra.mxu0 0
    %1459 = vmatprep.subr.bf16.mxu0 0
    %1460 = vmatpush2.bf16.xpose.msra.mxu0 0
    %1461 = vmatprep.subr.bf16.mxu0 0
    %1462 = vmatpush2.bf16.xpose.msra.mxu0 0
    %1463 = vmatprep.subr.bf16.mxu0 0
    %1464 = vmatpush2.bf16.xpose.msra.mxu0 0
    %1465 = vmatprep.subr.bf16.mxu0 0
    %1466 = vmatpush2.bf16.xpose.msra.mxu0 0
    %1467 = vmatprep.subr.bf16.mxu0 0
    %1468 = vmatpush2.bf16.xpose.msra.mxu0 0
    %1469 = vmatprep.mubr.bf16.mxu0 0
    %1470 = vmatmul.mubr.bf16.gmra.mxu0 %v1432
    %v1471 = vpop.f32.mrf.mxu0
    %v1472 = vadd.f32 0.0, %v1471
    %v1473 = vpop.f32.mrf.mxu0
    %v1474 = vpop.f32.mrf.mxu0
    %v1475 = vpop.f32.mrf.mxu0
    %1476 = vdwg.mxu0
    %v1477 = vsel %vm315, %v1472, -inf
    %1478 = vmax.xlane.f32.xlu0 %v1477
    %v1479 = vpop.xlane.xlu0 %1478
    %v1480 = vsub.f32 %v1472, %v1479
    %v1481 = vmul.f32 %v1480, 1.442695
    %v1482 = vpow.pop %v1481
    %v1483 = vsel %vm315, %v1482, 0.0
    %1484 = vadd.xlane.f32.xlu0 %v1483
    %v1485 = vpop.xlane.xlu0 %1484
    %v1486 = vrcp.pop %v1485
    %v1487 = vmul.f32 %v1482, %v1486
    %s1488 = scalar_lea.vmem [#allocation4], 56
    %1489 = vst.msk [vmem:[%s1488] sm:$0xff] %vm315, %v1487
    %v1490 = vpack.c.bf16 %v1487, %v1487
    %1491 = vrot.lane.b32.xlu0 %v314, 104
    %v1492 = vpop.permute.xlu0 %1491
    %v1494 = vsel %vm315, %v1490, 0
    %v1497 = vsel %vm378, %v1492, 0
    %1499 = vmatprep.subr.bf16.mxu0 0
    %1500 = vmatpush1.bf16.msra.mxu0 0
    %1501 = vmatprep.subr.bf16.mxu0 0
    %1502 = vmatpush1.bf16.msra.mxu0 0
    %1503 = vmatprep.subr.bf16.mxu0 0
    %1504 = vmatpush1.bf16.msra.mxu0 0
    %1505 = vmatprep.subr.bf16.mxu0 0
    %1506 = vmatpush1.bf16.msra.mxu0 0
    %1507 = vmatprep.subr.bf16.mxu0 0
    %1508 = vmatpush1.bf16.msra.mxu0 0
    %1509 = vmatprep.subr.bf16.mxu0 0
    %1510 = vmatpush1.bf16.msra.mxu0 0
    %1511 = vmatprep.subr.bf16.mxu0 0
    %1512 = vmatpush1.bf16.msra.mxu0 0
    %1513 = vmatprep.subr.bf16.mxu0 0
    %1514 = vmatpush1.bf16.msra.mxu0 %v1497
    %1515 = vmatprep.subr.bf16.mxu0 0
    %1516 = vmatpush2.bf16.msra.mxu0 0
    %1517 = vmatprep.subr.bf16.mxu0 0
    %1518 = vmatpush2.bf16.msra.mxu0 0
    %1519 = vmatprep.subr.bf16.mxu0 0
    %1520 = vmatpush2.bf16.msra.mxu0 0
    %1521 = vmatprep.subr.bf16.mxu0 0
    %1522 = vmatpush2.bf16.msra.mxu0 0
    %1523 = vmatprep.subr.bf16.mxu0 0
    %1524 = vmatpush2.bf16.msra.mxu0 0
    %1525 = vmatprep.subr.bf16.mxu0 0
    %1526 = vmatpush2.bf16.msra.mxu0 0
    %1527 = vmatprep.subr.bf16.mxu0 0
    %1528 = vmatpush2.bf16.msra.mxu0 0
    %1529 = vmatprep.subr.bf16.mxu0 0
    %1530 = vmatpush2.bf16.msra.mxu0 0
    %1531 = vmatprep.mubr.bf16.mxu0 0
    %1532 = vmatmul.mubr.bf16.gmra.mxu0 %v1494
    %v1533 = vpop.f32.mrf.mxu0
    %v1534 = vadd.f32 0.0, %v1533
    %v1535 = vpop.f32.mrf.mxu0
    %v1536 = vpop.f32.mrf.mxu0
    %v1537 = vpop.f32.mrf.mxu0
    %1538 = vdwg.mxu0
    %v1539 = vpack.c.bf16 %v1534, %v1534
    %v1540 = vld [vmem:[%s7 + $0xc] sm:$0xf]
    %v1542 = vsel %vm315, %v1539, 0
    %v1545 = vsel %vm378, %v1540, 0
    %1547 = vmatprep.subr.bf16.mxu0 0
    %1548 = vmatpush1.bf16.msra.mxu0 0
    %1549 = vmatprep.subr.bf16.mxu0 0
    %1550 = vmatpush1.bf16.msra.mxu0 0
    %1551 = vmatprep.subr.bf16.mxu0 0
    %1552 = vmatpush1.bf16.msra.mxu0 0
    %1553 = vmatprep.subr.bf16.mxu0 0
    %1554 = vmatpush1.bf16.msra.mxu0 0
    %1555 = vmatprep.subr.bf16.mxu0 0
    %1556 = vmatpush1.bf16.msra.mxu0 0
    %1557 = vmatprep.subr.bf16.mxu0 0
    %1558 = vmatpush1.bf16.msra.mxu0 0
    %1559 = vmatprep.subr.bf16.mxu0 0
    %1560 = vmatpush1.bf16.msra.mxu0 0
    %1561 = vmatprep.subr.bf16.mxu0 0
    %1562 = vmatpush1.bf16.msra.mxu0 %v1545
    %1563 = vmatprep.subr.bf16.mxu0 0
    %1564 = vmatpush2.bf16.msra.mxu0 0
    %1565 = vmatprep.subr.bf16.mxu0 0
    %1566 = vmatpush2.bf16.msra.mxu0 0
    %1567 = vmatprep.subr.bf16.mxu0 0
    %1568 = vmatpush2.bf16.msra.mxu0 0
    %1569 = vmatprep.subr.bf16.mxu0 0
    %1570 = vmatpush2.bf16.msra.mxu0 0
    %1571 = vmatprep.subr.bf16.mxu0 0
    %1572 = vmatpush2.bf16.msra.mxu0 0
    %1573 = vmatprep.subr.bf16.mxu0 0
    %1574 = vmatpush2.bf16.msra.mxu0 0
    %1575 = vmatprep.subr.bf16.mxu0 0
    %1576 = vmatpush2.bf16.msra.mxu0 0
    %1577 = vmatprep.subr.bf16.mxu0 0
    %1578 = vmatpush2.bf16.msra.mxu0 0
    %1579 = vmatprep.mubr.bf16.mxu0 0
    %1580 = vmatmul.mubr.bf16.gmra.mxu0 %v1542
    %v1581 = vpop.f32.mrf.mxu0
    %v1582 = vadd.f32 0.0, %v1581
    %v1583 = vpop.f32.mrf.mxu0
    %v1584 = vpop.f32.mrf.mxu0
    %v1585 = vpop.f32.mrf.mxu0
    %1586 = vdwg.mxu0
    %v1587 = vadd.f32 %v1426, %v1582
    %v1588 = vld [vmem:[%s8] sm:$0x1]
    %v1590 = vlaneseq
    %v1591 = vshrl.u32 %v1590, 7
    %v1592 = vsub.s32 0, %v1591
    %v1593 = vrot.slane %v1588, %v1592
    %v1595 = vadd.f32 %v951, %v1593
    %v1596 = vadd.f32 %v1587, %v1593
    %v1597 = vadd.f32 %v61, %v1595
    %v1598 = vadd.f32 %v62, %v1596
    %v1599 = vsel %vm253, %v1597, 0.0
    %1600 = vadd.xlane.f32.xlu0 %v1599
    %v1601 = vpop.xlane.xlu0 %1600
    %v1602 = vsel %vm253, %v1598, 0.0
    %1603 = vadd.xlane.f32.xlu0 %v1602
    %v1604 = vpop.xlane.xlu0 %1603
    %v1605 = vrcp.pop 32.0
    %v1606 = vmul.f32 %v1601, %v1605
    %v1607 = vmul.f32 %v1604, %v1605
    %v1608 = vsub.f32 %v1597, %v1606
    %v1609 = vsub.f32 %v1598, %v1607
    %v1610 = vmul.f32 %v1608, %v1608
    %v1611 = vmul.f32 %v1609, %v1609
    %v1612 = vsel %vm253, %v1610, 0.0
    %1613 = vadd.xlane.f32.xlu0 %v1612
    %v1614 = vpop.xlane.xlu0 %1613
    %v1615 = vsel %vm253, %v1611, 0.0
    %1616 = vadd.xlane.f32.xlu0 %v1615
    %v1617 = vpop.xlane.xlu0 %1616
    %v1618 = vmul.f32 %v1614, %v1605
    %v1619 = vmul.f32 %v1617, %v1605
    %v1620 = vadd.f32 %v1618, 1e-05
    %v1621 = vadd.f32 %v1619, 1e-05
    %v1622 = vrsqrt.pop %v1620
    %v1623 = vrsqrt.pop %v1621
    %v1624 = vmul.f32 %v1608, %v1622
    %v1625 = vmul.f32 %v1609, %v1623
    %v1626 = vld [vmem:[%s9] sm:$0x1]
    %v1628 = vlaneseq
    %v1629 = vshrl.u32 %v1628, 7
    %v1630 = vsub.s32 0, %v1629
    %v1631 = vrot.slane %v1626, %v1630
    %v1633 = vmul.f32 %v1624, %v1631
    %v1634 = vmul.f32 %v1625, %v1631
    %v1635 = vld [vmem:[%s10] sm:$0x1]
    %v1637 = vlaneseq
    %v1638 = vshrl.u32 %v1637, 7
    %v1639 = vsub.s32 0, %v1638
    %v1640 = vrot.slane %v1635, %v1639
    %v1642 = vadd.f32 %v1633, %v1640
    %v1643 = vadd.f32 %v1634, %v1640
    %v1644 = vpack.c.bf16 %v1643, %v1642
    %v1645 = vld [vmem:[%s13] sm:$0xf]
    %v1646 = vld [vmem:[%s13 + $0x4] sm:$0xf]
    %v1647 = vld [vmem:[%s13 + $0x8] sm:$0xf]
    %v1648 = vld [vmem:[%s13 + $0xc] sm:$0xf]
    %v1649 = vld [vmem:[%s14] sm:$0x1]
    %v1651 = vlaneseq
    %v1652 = vshrl.u32 %v1651, 7
    %v1653 = vsub.s32 0, %v1652
    %v1654 = vrot.slane %v1649, %v1653
    %v1660 = vunpack.c.l.b16 %v1645
    %v1661 = vunpack.c.l.b16 %v1646
    %v1662 = vunpack.c.l.b16 %v1647
    %v1663 = vunpack.c.l.b16 %v1648
    %v1664 = vpack.c.b16 %v1661, %v1660
    %v1665 = vpack.c.b16 %v1663, %v1662
    %v1669 = vsel %vm253, %v1644, 0
    %1671 = vmatprep.subr.bf16.mxu0 0
    %1672 = vmatpush1.bf16.msra.mxu0 0
    %1673 = vmatprep.subr.bf16.mxu0 0
    %1674 = vmatpush1.bf16.msra.mxu0 0
    %1675 = vmatprep.subr.bf16.mxu0 0
    %1676 = vmatpush1.bf16.msra.mxu0 0
    %1677 = vmatprep.subr.bf16.mxu0 0
    %1678 = vmatpush1.bf16.msra.mxu0 0
    %1679 = vmatprep.subr.bf16.mxu0 0
    %1680 = vmatpush1.bf16.msra.mxu0 0
    %1681 = vmatprep.subr.bf16.mxu0 0
    %1682 = vmatpush1.bf16.msra.mxu0 0
    %1683 = vmatprep.subr.bf16.mxu0 0
    %1684 = vmatpush1.bf16.msra.mxu0 %v1665
    %1685 = vmatprep.subr.bf16.mxu0 0
    %1686 = vmatpush1.bf16.msra.mxu0 %v1664
    %1687 = vmatprep.subr.bf16.mxu0 0
    %1688 = vmatpush2.bf16.msra.mxu0 0
    %1689 = vmatprep.subr.bf16.mxu0 0
    %1690 = vmatpush2.bf16.msra.mxu0 0
    %1691 = vmatprep.subr.bf16.mxu0 0
    %1692 = vmatpush2.bf16.msra.mxu0 0
    %1693 = vmatprep.subr.bf16.mxu0 0
    %1694 = vmatpush2.bf16.msra.mxu0 0
    %1695 = vmatprep.subr.bf16.mxu0 0
    %1696 = vmatpush2.bf16.msra.mxu0 0
    %1697 = vmatprep.subr.bf16.mxu0 0
    %1698 = vmatpush2.bf16.msra.mxu0 0
    %1699 = vmatprep.subr.bf16.mxu0 0
    %1700 = vmatpush2.bf16.msra.mxu0 0
    %1701 = vmatprep.subr.bf16.mxu0 0
    %1702 = vmatpush2.bf16.msra.mxu0 0
    %1703 = vmatprep.mubr.bf16.mxu0 0
    %1704 = vmatmul.mubr.bf16.gmra.mxu0 %v1669
    %v1705 = vpop.f32.mrf.mxu0
    %v1706 = vadd.f32 %v1654, %v1705
    %v1707 = vpop.f32.mrf.mxu0
    %v1708 = vpop.f32.mrf.mxu0
    %v1709 = vadd.f32 %v1654, %v1708
    %v1710 = vpop.f32.mrf.mxu0
    %1711 = vdwg.mxu0
    %v1712 = vmax.f32 %v1706, 0.0
    %v1713 = vmax.f32 %v1709, 0.0
    %v1714 = vpack.c.bf16 %v1713, %v1712
    %v1715 = vld [vmem:[%s15] sm:$0xf]
    %v1716 = vld [vmem:[%s15 + $0x4] sm:$0xf]
    %v1717 = vld [vmem:[%s15 + $0x8] sm:$0xf]
    %v1718 = vld [vmem:[%s15 + $0xc] sm:$0xf]
    %v1719 = vld [vmem:[%s15 + $0x10] sm:$0xf]
    %v1720 = vld [vmem:[%s15 + $0x14] sm:$0xf]
    %v1721 = vld [vmem:[%s15 + $0x18] sm:$0xf]
    %v1722 = vld [vmem:[%s15 + $0x1c] sm:$0xf]
    %v1723 = vld [vmem:[%s15 + $0x20] sm:$0xf]
    %v1724 = vld [vmem:[%s15 + $0x24] sm:$0xf]
    %v1725 = vld [vmem:[%s15 + $0x28] sm:$0xf]
    %v1726 = vld [vmem:[%s15 + $0x2c] sm:$0xf]
    %v1727 = vld [vmem:[%s15 + $0x30] sm:$0xf]
    %v1728 = vld [vmem:[%s15 + $0x34] sm:$0xf]
    %v1729 = vld [vmem:[%s15 + $0x38] sm:$0xf]
    %v1730 = vld [vmem:[%s15 + $0x3c] sm:$0xf]
    %v1731 = vld [vmem:[%s16] sm:$0x1]
    %v1733 = vlaneseq
    %v1734 = vshrl.u32 %v1733, 7
    %v1735 = vsub.s32 0, %v1734
    %v1736 = vrot.slane %v1731, %v1735
    %v1754 = vunpack.c.l.b16 %v1715
    %v1755 = vunpack.c.l.b16 %v1716
    %v1756 = vunpack.c.l.b16 %v1717
    %v1757 = vunpack.c.l.b16 %v1718
    %v1758 = vunpack.c.l.b16 %v1719
    %v1759 = vunpack.c.l.b16 %v1720
    %v1760 = vunpack.c.l.b16 %v1721
    %v1761 = vunpack.c.l.b16 %v1722
    %v1762 = vunpack.c.l.b16 %v1723
    %v1763 = vunpack.c.l.b16 %v1724
    %v1764 = vunpack.c.l.b16 %v1725
    %v1765 = vunpack.c.l.b16 %v1726
    %v1766 = vunpack.c.l.b16 %v1727
    %v1767 = vunpack.c.l.b16 %v1728
    %v1768 = vunpack.c.l.b16 %v1729
    %v1769 = vunpack.c.l.b16 %v1730
    %v1770 = vpack.c.b16 %v1755, %v1754
    %v1771 = vpack.c.b16 %v1757, %v1756
    %v1772 = vpack.c.b16 %v1759, %v1758
    %v1773 = vpack.c.b16 %v1761, %v1760
    %v1774 = vpack.c.b16 %v1763, %v1762
    %v1775 = vpack.c.b16 %v1765, %v1764
    %v1776 = vpack.c.b16 %v1767, %v1766
    %v1777 = vpack.c.b16 %v1769, %v1768
    %1786 = vmatprep.subr.bf16.mxu0 0
    %1787 = vmatpush1.bf16.msra.mxu0 %v1777
    %1788 = vmatprep.subr.bf16.mxu0 0
    %1789 = vmatpush1.bf16.msra.mxu0 %v1776
    %1790 = vmatprep.subr.bf16.mxu0 0
    %1791 = vmatpush1.bf16.msra.mxu0 %v1775
    %1792 = vmatprep.subr.bf16.mxu0 0
    %1793 = vmatpush1.bf16.msra.mxu0 %v1774
    %1794 = vmatprep.subr.bf16.mxu0 0
    %1795 = vmatpush1.bf16.msra.mxu0 %v1773
    %1796 = vmatprep.subr.bf16.mxu0 0
    %1797 = vmatpush1.bf16.msra.mxu0 %v1772
    %1798 = vmatprep.subr.bf16.mxu0 0
    %1799 = vmatpush1.bf16.msra.mxu0 %v1771
    %1800 = vmatprep.subr.bf16.mxu0 0
    %1801 = vmatpush1.bf16.msra.mxu0 %v1770
    %1802 = vmatprep.subr.bf16.mxu0 0
    %1803 = vmatpush2.bf16.msra.mxu0 0
    %1804 = vmatprep.subr.bf16.mxu0 0
    %1805 = vmatpush2.bf16.msra.mxu0 0
    %1806 = vmatprep.subr.bf16.mxu0 0
    %1807 = vmatpush2.bf16.msra.mxu0 0
    %1808 = vmatprep.subr.bf16.mxu0 0
    %1809 = vmatpush2.bf16.msra.mxu0 0
    %1810 = vmatprep.subr.bf16.mxu0 0
    %1811 = vmatpush2.bf16.msra.mxu0 0
    %1812 = vmatprep.subr.bf16.mxu0 0
    %1813 = vmatpush2.bf16.msra.mxu0 0
    %1814 = vmatprep.subr.bf16.mxu0 0
    %1815 = vmatpush2.bf16.msra.mxu0 0
    %1816 = vmatprep.subr.bf16.mxu0 0
    %1817 = vmatpush2.bf16.msra.mxu0 0
    %1818 = vmatprep.mubr.bf16.mxu0 0
    %1819 = vmatmul.mubr.bf16.gmra.mxu0 %v1714
    %v1820 = vpop.f32.mrf.mxu0
    %v1821 = vadd.f32 %v1736, %v1820
    %v1822 = vpop.f32.mrf.mxu0
    %v1823 = vpop.f32.mrf.mxu0
    %v1824 = vadd.f32 %v1736, %v1823
    %v1825 = vpop.f32.mrf.mxu0
    %1826 = vdwg.mxu0
    %v1827 = vadd.f32 %v1642, %v1821
    %v1828 = vadd.f32 %v1643, %v1824
    %v1829 = vsel %vm253, %v1827, 0.0
    %1830 = vadd.xlane.f32.xlu0 %v1829
    %v1831 = vpop.xlane.xlu0 %1830
    %v1832 = vsel %vm253, %v1828, 0.0
    %1833 = vadd.xlane.f32.xlu0 %v1832
    %v1834 = vpop.xlane.xlu0 %1833
    %v1835 = vmul.f32 %v1831, %v1605
    %v1836 = vmul.f32 %v1834, %v1605
    %v1837 = vsub.f32 %v1827, %v1835
    %v1838 = vsub.f32 %v1828, %v1836
    %v1839 = vmul.f32 %v1837, %v1837
    %v1840 = vmul.f32 %v1838, %v1838
    %v1841 = vsel %vm253, %v1839, 0.0
    %1842 = vadd.xlane.f32.xlu0 %v1841
    %v1843 = vpop.xlane.xlu0 %1842
    %v1844 = vsel %vm253, %v1840, 0.0
    %1845 = vadd.xlane.f32.xlu0 %v1844
    %v1846 = vpop.xlane.xlu0 %1845
    %v1847 = vmul.f32 %v1843, %v1605
    %v1848 = vmul.f32 %v1846, %v1605
    %v1849 = vadd.f32 %v1847, 1e-05
    %v1850 = vadd.f32 %v1848, 1e-05
    %v1851 = vrsqrt.pop %v1849
    %v1852 = vrsqrt.pop %v1850
    %v1853 = vmul.f32 %v1837, %v1851
    %v1854 = vmul.f32 %v1838, %v1852
    %v1855 = vld [vmem:[%s11] sm:$0x1]
    %v1857 = vlaneseq
    %v1858 = vshrl.u32 %v1857, 7
    %v1859 = vsub.s32 0, %v1858
    %v1860 = vrot.slane %v1855, %v1859
    %v1862 = vmul.f32 %v1853, %v1860
    %v1863 = vmul.f32 %v1854, %v1860
    %v1864 = vld [vmem:[%s12] sm:$0x1]
    %v1866 = vlaneseq
    %v1867 = vshrl.u32 %v1866, 7
    %v1868 = vsub.s32 0, %v1867
    %v1869 = vrot.slane %v1864, %v1868
    %v1871 = vadd.f32 %v1862, %v1869
    %v1872 = vadd.f32 %v1863, %v1869
    %1873 = vst.msk [vmem:[#allocation2] sm:$0xff] %vm253, %v1871
    %1874 = vst.msk [vmem:[#allocation2 + $0x8] sm:$0xff] %vm253, %v1872
    // Predicated region
    $region70: #{tpu_custom_call.1} parent=1 // pred_check
      _
    $region71: #{tpu_custom_call.1} parent=1 // pred_check_branch
      %1876 = sbr.rel (0) target = $region73
    $region72: #{tpu_custom_call.1} parent=1 // pred_region
      %s1878 = ssub.s32 256, 256
      %1879 = vsyncadd [#allocation3], %s1878
      %s1880 = sshll.u32 [#allocation2], 4
      %s1881 = int_to_ptr.vmem [resolvable:$true] %s1880
      %1886 = dma.vmem_to_hbm [thread:$0]  %s1881, 256, %s17, [#allocation3], 128, 128, 8
    $region73: #{tpu_custom_call.1} parent=1 // pred_fallthru
      _
    // Predicated region
    $region74: #{tpu_custom_call.1} parent=1 // pred_check
      _
    $region75: #{tpu_custom_call.1} parent=1 // pred_check_branch
      %1888 = sbr.rel (0) target = $region77
    $region76: #{tpu_custom_call.1} parent=1 // pred_region
      %s1890 = ssub.s32 1024, 1024
      %1891 = vsyncadd [#allocation5], %s1890
      %s1892 = sshll.u32 [#allocation4], 4
      %s1893 = int_to_ptr.vmem [resolvable:$true] %s1892
      %1898 = dma.vmem_to_hbm [thread:$0]  %s1893, 1024, %s18, [#allocation5], 128, 128, 8
    $region77: #{tpu_custom_call.1} parent=1 // pred_fallthru
      _
    // Predicated region
    $region78: #{tpu_custom_call.1} parent=1 // pred_check
      _
    $region79: #{tpu_custom_call.1} parent=1 // pred_check_branch
      %1900 = sbr.rel (0) target = $region81
    $region80: #{tpu_custom_call.1} parent=1 // pred_region
      %1901 = dma.done [#allocation3], 256
    $region81: #{tpu_custom_call.1} parent=1 // pred_fallthru
      _
    // Predicated region
    $region82: #{tpu_custom_call.1} parent=1 // pred_check
      _
    $region83: #{tpu_custom_call.1} parent=1 // pred_check_branch
      %1903 = sbr.rel (0) target = $region85
    $region84: #{tpu_custom_call.1} parent=1 // pred_region
      %1904 = dma.done [#allocation5], 1024
    $region85: #{tpu_custom_call.1} parent=1 // pred_fallthru
      _
    %1905 = vsyncpa [#allocation3], 1
    %1906 = vsyncpa [#allocation5], 1

// kernel: tpu_custom_call.1
$region0: #{tpu_custom_call.1}
  #allocation0 [shape = 'u32[]', space=smem, size = 0x4, offset = 0x4, fixed_abs, tag = 'smem constant byte address 0x4 - core index']
  #allocation1 [shape = 'u32[144,128]{1,0:T(1,128)}', space=vmem, size = 0x12000, scoped, tag = 'internal scratch']
  %s0 = inlined_call_operand.vmem [shape: f32[2,8,64], index: 0, kind: input, shape index: {}]
  %s1 = inlined_call_operand.vmem [shape: bf16[64,32], index: 1, kind: input, shape index: {}]
  %s2 = inlined_call_operand.vmem [shape: f32[1,32], index: 2, kind: input, shape index: {}]
  %s3 = inlined_call_operand.vmem [shape: bf16[64,32], index: 3, kind: input, shape index: {}]
  %s4 = inlined_call_operand.vmem [shape: f32[1,32], index: 4, kind: input, shape index: {}]
  %s5 = inlined_call_operand.vmem [shape: bf16[32,32], index: 5, kind: input, shape index: {}]
  %s6 = inlined_call_operand.vmem [shape: f32[1,32], index: 6, kind: input, shape index: {}]
  %s7 = inlined_call_operand.vmem [shape: bf16[32,32], index: 7, kind: input, shape index: {}]
  %s8 = inlined_call_operand.vmem [shape: f32[1,32], index: 8, kind: input, shape index: {}]
  %s9 = inlined_call_operand.vmem [shape: f32[1,32], index: 9, kind: input, shape index: {}]
  %s10 = inlined_call_operand.vmem [shape: f32[1,32], index: 10, kind: input, shape index: {}]
  %s11 = inlined_call_operand.vmem [shape: f32[1,32], index: 11, kind: input, shape index: {}]
  %s12 = inlined_call_operand.vmem [shape: f32[1,32], index: 12, kind: input, shape index: {}]
  %s13 = inlined_call_operand.vmem [shape: bf16[32,128], index: 13, kind: input, shape index: {}]
  %s14 = inlined_call_operand.vmem [shape: f32[1,128], index: 14, kind: input, shape index: {}]
  %s15 = inlined_call_operand.vmem [shape: bf16[128,32], index: 15, kind: input, shape index: {}]
  %s16 = inlined_call_operand.vmem [shape: f32[1,32], index: 16, kind: input, shape index: {}]
  %s17 = inlined_call_operand.hbm [shape: f32[2,8,32], index: 17, kind: output, shape index: {0}]
  %s18 = inlined_call_operand.hbm [shape: f32[2,4,8,8], index: 18, kind: output, shape index: {1}]
  %19 = xla_tuple %s17, %s18
  %s20 = sld [smem:[#allocation0]]
  $region86: #{tpu_custom_call.1} parent=0
    _
  %s22 = ssub.s32 1, %s20
  %s23 = scalar_select 0, %s22, %s20
  $region1: #{tpu_custom_call.1} parent=0
    #allocation2 [shape = 'u8[8192]{0}', space=vmem, size = 0x2000, scoped, tag = 'output window, operand 0, single buffered']
    #allocation3 [shape = 's32[1]{0}', space=sflag, size = 0x4, scoped, tag = 'scoped memory for tpu_custom_call.1']
    #allocation4 [shape = 'u8[32768]{0}', space=vmem, size = 0x8000, scoped, tag = 'output window, operand 1, single buffered']
    #allocation5 [shape = 's32[1]{0}', space=sflag, size = 0x4, scoped, tag = 'scoped memory for tpu_custom_call.1']
    %24 = vsyncpa [#allocation3], 0
    %25 = vsyncpa [#allocation5], 0
    // Predicated region
    $region2: #{tpu_custom_call.1} parent=1 // pred_check
      _
    $region3: #{tpu_custom_call.1} parent=1 // pred_check_branch
      %27 = sbr.rel (0) target = $region5
    $region4: #{tpu_custom_call.1} parent=1 // pred_region
      _
    $region5: #{tpu_custom_call.1} parent=1 // pred_fallthru
      _
    // Predicated region
    $region6: #{tpu_custom_call.1} parent=1 // pred_check
      _
    $region7: #{tpu_custom_call.1} parent=1 // pred_check_branch
      %29 = sbr.rel (0) target = $region9
    $region8: #{tpu_custom_call.1} parent=1 // pred_region
      _
    $region9: #{tpu_custom_call.1} parent=1 // pred_fallthru
      _
    // Predicated region
    $region10: #{tpu_custom_call.1} parent=1 // pred_check
      _
    $region11: #{tpu_custom_call.1} parent=1 // pred_check_branch
      %31 = sbr.rel (0) target = $region13
    $region12: #{tpu_custom_call.1} parent=1 // pred_region
      _
    $region13: #{tpu_custom_call.1} parent=1 // pred_fallthru
      _
    // Predicated region
    $region14: #{tpu_custom_call.1} parent=1 // pred_check
      _
    $region15: #{tpu_custom_call.1} parent=1 // pred_check_branch
      %33 = sbr.rel (0) target = $region17
    $region16: #{tpu_custom_call.1} parent=1 // pred_region
      _
    $region17: #{tpu_custom_call.1} parent=1 // pred_fallthru
      _
    // Predicated region
    $region18: #{tpu_custom_call.1} parent=1 // pred_check
      _
    $region19: #{tpu_custom_call.1} parent=1 // pred_check_branch
      %35 = sbr.rel (0) target = $region21
    $region20: #{tpu_custom_call.1} parent=1 // pred_region
      _
    $region21: #{tpu_custom_call.1} parent=1 // pred_fallthru
      _
    // Predicated region
    $region22: #{tpu_custom_call.1} parent=1 // pred_check
      _
    $region23: #{tpu_custom_call.1} parent=1 // pred_check_branch
      %37 = sbr.rel (0) target = $region25
    $region24: #{tpu_custom_call.1} parent=1 // pred_region
      _
    $region25: #{tpu_custom_call.1} parent=1 // pred_fallthru
      _
    // Predicated region
    $region26: #{tpu_custom_call.1} parent=1 // pred_check
      _
    $region27: #{tpu_custom_call.1} parent=1 // pred_check_branch
      %39 = sbr.rel (0) target = $region29
    $region28: #{tpu_custom_call.1} parent=1 // pred_region
      _
    $region29: #{tpu_custom_call.1} parent=1 // pred_fallthru
      _
    // Predicated region
    $region30: #{tpu_custom_call.1} parent=1 // pred_check
      _
    $region31: #{tpu_custom_call.1} parent=1 // pred_check_branch
      %41 = sbr.rel (0) target = $region33
    $region32: #{tpu_custom_call.1} parent=1 // pred_region
      _
    $region33: #{tpu_custom_call.1} parent=1 // pred_fallthru
      _
    // Predicated region
    $region34: #{tpu_custom_call.1} parent=1 // pred_check
      _
    $region35: #{tpu_custom_call.1} parent=1 // pred_check_branch
      %43 = sbr.rel (0) target = $region37
    $region36: #{tpu_custom_call.1} parent=1 // pred_region
      _
    $region37: #{tpu_custom_call.1} parent=1 // pred_fallthru
      _
    // Predicated region
    $region38: #{tpu_custom_call.1} parent=1 // pred_check
      _
    $region39: #{tpu_custom_call.1} parent=1 // pred_check_branch
      %45 = sbr.rel (0) target = $region41
    $region40: #{tpu_custom_call.1} parent=1 // pred_region
      _
    $region41: #{tpu_custom_call.1} parent=1 // pred_fallthru
      _
    // Predicated region
    $region42: #{tpu_custom_call.1} parent=1 // pred_check
      _
    $region43: #{tpu_custom_call.1} parent=1 // pred_check_branch
      %47 = sbr.rel (0) target = $region45
    $region44: #{tpu_custom_call.1} parent=1 // pred_region
      _
    $region45: #{tpu_custom_call.1} parent=1 // pred_fallthru
      _
    // Predicated region
    $region46: #{tpu_custom_call.1} parent=1 // pred_check
      _
    $region47: #{tpu_custom_call.1} parent=1 // pred_check_branch
      %49 = sbr.rel (0) target = $region49
    $region48: #{tpu_custom_call.1} parent=1 // pred_region
      _
    $region49: #{tpu_custom_call.1} parent=1 // pred_fallthru
      _
    // Predicated region
    $region50: #{tpu_custom_call.1} parent=1 // pred_check
      _
    $region51: #{tpu_custom_call.1} parent=1 // pred_check_branch
      %51 = sbr.rel (0) target = $region53
    $region52: #{tpu_custom_call.1} parent=1 // pred_region
      _
    $region53: #{tpu_custom_call.1} parent=1 // pred_fallthru
      _
    // Predicated region
    $region54: #{tpu_custom_call.1} parent=1 // pred_check
      _
    $region55: #{tpu_custom_call.1} parent=1 // pred_check_branch
      %53 = sbr.rel (0) target = $region57
    $region56: #{tpu_custom_call.1} parent=1 // pred_region
      _
    $region57: #{tpu_custom_call.1} parent=1 // pred_fallthru
      _
    // Predicated region
    $region58: #{tpu_custom_call.1} parent=1 // pred_check
      _
    $region59: #{tpu_custom_call.1} parent=1 // pred_check_branch
      %55 = sbr.rel (0) target = $region61
    $region60: #{tpu_custom_call.1} parent=1 // pred_region
      _
    $region61: #{tpu_custom_call.1} parent=1 // pred_fallthru
      _
    // Predicated region
    $region62: #{tpu_custom_call.1} parent=1 // pred_check
      _
    $region63: #{tpu_custom_call.1} parent=1 // pred_check_branch
      %57 = sbr.rel (0) target = $region65
    $region64: #{tpu_custom_call.1} parent=1 // pred_region
      _
    $region65: #{tpu_custom_call.1} parent=1 // pred_fallthru
      _
    // Predicated region
    $region66: #{tpu_custom_call.1} parent=1 // pred_check
      _
    $region67: #{tpu_custom_call.1} parent=1 // pred_check_branch
      %59 = sbr.rel (0) target = $region69
    $region68: #{tpu_custom_call.1} parent=1 // pred_region
      _
    $region69: #{tpu_custom_call.1} parent=1 // pred_fallthru
      _
    %v61 = vld [vmem:[%s0] sm:$0xff]
    %v62 = vld [vmem:[%s0 + $0x8] sm:$0xff]
    %v63 = vpack.c.bf16 %v62, %v61
    %v64 = vld [vmem:[%s1] sm:$0xf]
    %v65 = vld [vmem:[%s1 + $0x4] sm:$0xf]
    %v66 = vld [vmem:[%s1 + $0x8] sm:$0xf]
    %v67 = vld [vmem:[%s1 + $0xc] sm:$0xf]
    %v68 = vld [vmem:[%s1 + $0x10] sm:$0xf]
    %v69 = vld [vmem:[%s1 + $0x14] sm:$0xf]
    %v70 = vld [vmem:[%s1 + $0x18] sm:$0xf]
    %v71 = vld [vmem:[%s1 + $0x1c] sm:$0xf]
    %v72 = vld [vmem:[%s2] sm:$0x1]
    %v74 = vlaneseq
    %v75 = vshrl.u32 %v74, 7
    %v76 = vsub.s32 0, %v75
    %v77 = vrot.slane %v72, %v76
    %v87 = vunpack.c.l.b16 %v64
    %v88 = vunpack.c.l.b16 %v65
    %v89 = vunpack.c.l.b16 %v66
    %v90 = vunpack.c.l.b16 %v67
    %v91 = vunpack.c.l.b16 %v68
    %v92 = vunpack.c.l.b16 %v69
    %v93 = vunpack.c.l.b16 %v70
    %v94 = vunpack.c.l.b16 %v71
    %v95 = vpack.c.b16 %v88, %v87
    %v96 = vpack.c.b16 %v90, %v89
    %v97 = vpack.c.b16 %v92, %v91
    %v98 = vpack.c.b16 %v94, %v93
    %vm103 = vcmask 523264
    %v105 = vsel %vm103, %v63, 0
    %107 = vmatprep.subr.bf16.mxu0 0
    %108 = vmatpush1.bf16.msra.mxu0 0
    %109 = vmatprep.subr.bf16.mxu0 0
    %110 = vmatpush1.bf16.msra.mxu0 0
    %111 = vmatprep.subr.bf16.mxu0 0
    %112 = vmatpush1.bf16.msra.mxu0 0
    %113 = vmatprep.subr.bf16.mxu0 0
    %114 = vmatpush1.bf16.msra.mxu0 0
    %115 = vmatprep.subr.bf16.mxu0 0
    %116 = vmatpush1.bf16.msra.mxu0 %v98
    %117 = vmatprep.subr.bf16.mxu0 0
    %118 = vmatpush1.bf16.msra.mxu0 %v97
    %119 = vmatprep.subr.bf16.mxu0 0
    %120 = vmatpush1.bf16.msra.mxu0 %v96
    %121 = vmatprep.subr.bf16.mxu0 0
    %122 = vmatpush1.bf16.msra.mxu0 %v95
    %123 = vmatprep.subr.bf16.mxu0 0
    %124 = vmatpush2.bf16.msra.mxu0 0
    %125 = vmatprep.subr.bf16.mxu0 0
    %126 = vmatpush2.bf16.msra.mxu0 0
    %127 = vmatprep.subr.bf16.mxu0 0
    %128 = vmatpush2.bf16.msra.mxu0 0
    %129 = vmatprep.subr.bf16.mxu0 0
    %130 = vmatpush2.bf16.msra.mxu0 0
    %131 = vmatprep.subr.bf16.mxu0 0
    %132 = vmatpush2.bf16.msra.mxu0 0
    %133 = vmatprep.subr.bf16.mxu0 0
    %134 = vmatpush2.bf16.msra.mxu0 0
    %135 = vmatprep.subr.bf16.mxu0 0
    %136 = vmatpush2.bf16.msra.mxu0 0
    %137 = vmatprep.subr.bf16.mxu0 0
    %138 = vmatpush2.bf16.msra.mxu0 0
    %139 = vmatprep.mubr.bf16.mxu0 0
    %140 = vmatmul.mubr.bf16.gmra.mxu0 %v105
    %v141 = vpop.f32.mrf.mxu0
    %v142 = vadd.f32 %v77, %v141
    %v143 = vpop.f32.mrf.mxu0
    %v144 = vpop.f32.mrf.mxu0
    %v145 = vadd.f32 %v77, %v144
    %v146 = vpop.f32.mrf.mxu0
    %147 = vdwg.mxu0
    %v148 = vmul.f32 %v142, 0.35355338
    %v149 = vmul.f32 %v145, 0.35355338
    %v150 = vld [vmem:[%s3] sm:$0xf]
    %v151 = vld [vmem:[%s3 + $0x4] sm:$0xf]
    %v152 = vld [vmem:[%s3 + $0x8] sm:$0xf]
    %v153 = vld [vmem:[%s3 + $0xc] sm:$0xf]
    %v154 = vld [vmem:[%s3 + $0x10] sm:$0xf]
    %v155 = vld [vmem:[%s3 + $0x14] sm:$0xf]
    %v156 = vld [vmem:[%s3 + $0x18] sm:$0xf]
    %v157 = vld [vmem:[%s3 + $0x1c] sm:$0xf]
    %v158 = vld [vmem:[%s4] sm:$0x1]
    %v160 = vlaneseq
    %v161 = vshrl.u32 %v160, 7
    %v162 = vsub.s32 0, %v161
    %v163 = vrot.slane %v158, %v162
    %v173 = vunpack.c.l.b16 %v150
    %v174 = vunpack.c.l.b16 %v151
    %v175 = vunpack.c.l.b16 %v152
    %v176 = vunpack.c.l.b16 %v153
    %v177 = vunpack.c.l.b16 %v154
    %v178 = vunpack.c.l.b16 %v155
    %v179 = vunpack.c.l.b16 %v156
    %v180 = vunpack.c.l.b16 %v157
    %v181 = vpack.c.b16 %v174, %v173
    %v182 = vpack.c.b16 %v176, %v175
    %v183 = vpack.c.b16 %v178, %v177
    %v184 = vpack.c.b16 %v180, %v179
    %189 = vmatprep.subr.bf16.mxu0 0
    %190 = vmatpush1.bf16.msra.mxu0 0
    %191 = vmatprep.subr.bf16.mxu0 0
    %192 = vmatpush1.bf16.msra.mxu0 0
    %193 = vmatprep.subr.bf16.mxu0 0
    %194 = vmatpush1.bf16.msra.mxu0 0
    %195 = vmatprep.subr.bf16.mxu0 0
    %196 = vmatpush1.bf16.msra.mxu0 0
    %197 = vmatprep.subr.bf16.mxu0 0
    %198 = vmatpush1.bf16.msra.mxu0 %v184
    %199 = vmatprep.subr.bf16.mxu0 0
    %200 = vmatpush1.bf16.msra.mxu0 %v183
    %201 = vmatprep.subr.bf16.mxu0 0
    %202 = vmatpush1.bf16.msra.mxu0 %v182
    %203 = vmatprep.subr.bf16.mxu0 0
    %204 = vmatpush1.bf16.msra.mxu0 %v181
    %205 = vmatprep.subr.bf16.mxu0 0
    %206 = vmatpush2.bf16.msra.mxu0 0
    %207 = vmatprep.subr.bf16.mxu0 0
    %208 = vmatpush2.bf16.msra.mxu0 0
    %209 = vmatprep.subr.bf16.mxu0 0
    %210 = vmatpush2.bf16.msra.mxu0 0
    %211 = vmatprep.subr.bf16.mxu0 0
    %212 = vmatpush2.bf16.msra.mxu0 0
    %213 = vmatprep.subr.bf16.mxu0 0
    %214 = vmatpush2.bf16.msra.mxu0 0
    %215 = vmatprep.subr.bf16.mxu0 0
    %216 = vmatpush2.bf16.msra.mxu0 0
    %217 = vmatprep.subr.bf16.mxu0 0
    %218 = vmatpush2.bf16.msra.mxu0 0
    %219 = vmatprep.subr.bf16.mxu0 0
    %220 = vmatpush2.bf16.msra.mxu0 0
    %221 = vmatprep.mubr.bf16.mxu0 0
    %222 = vmatmul.mubr.bf16.gmra.mxu0 %v105
    %v223 = vpop.f32.mrf.mxu0
    %v224 = vadd.f32 %v163, %v223
    %v225 = vpop.f32.mrf.mxu0
    %v226 = vpop.f32.mrf.mxu0
    %v227 = vadd.f32 %v163, %v226
    %v228 = vpop.f32.mrf.mxu0
    %229 = vdwg.mxu0
    %v230 = vld [vmem:[%s5] sm:$0xf]
    %v231 = vld [vmem:[%s5 + $0x4] sm:$0xf]
    %v232 = vld [vmem:[%s5 + $0x8] sm:$0xf]
    %v233 = vld [vmem:[%s5 + $0xc] sm:$0xf]
    %v234 = vld [vmem:[%s6] sm:$0x1]
    %v236 = vlaneseq
    %v237 = vshrl.u32 %v236, 7
    %v238 = vsub.s32 0, %v237
    %v239 = vrot.slane %v234, %v238
    %v245 = vunpack.c.l.b16 %v230
    %v246 = vunpack.c.l.b16 %v231
    %v247 = vunpack.c.l.b16 %v232
    %v248 = vunpack.c.l.b16 %v233
    %v249 = vpack.c.b16 %v246, %v245
    %v250 = vpack.c.b16 %v248, %v247
    %vm253 = vcmask 261120
    %v254 = vsel %vm253, %v63, 0
    %256 = vmatprep.subr.bf16.mxu0 0
    %257 = vmatpush1.bf16.msra.mxu0 0
    %258 = vmatprep.subr.bf16.mxu0 0
    %259 = vmatpush1.bf16.msra.mxu0 0
    %260 = vmatprep.subr.bf16.mxu0 0
    %261 = vmatpush1.bf16.msra.mxu0 0
    %262 = vmatprep.subr.bf16.mxu0 0
    %263 = vmatpush1.bf16.msra.mxu0 0
    %264 = vmatprep.subr.bf16.mxu0 0
    %265 = vmatpush1.bf16.msra.mxu0 0
    %266 = vmatprep.subr.bf16.mxu0 0
    %267 = vmatpush1.bf16.msra.mxu0 0
    %268 = vmatprep.subr.bf16.mxu0 0
    %269 = vmatpush1.bf16.msra.mxu0 %v250
    %270 = vmatprep.subr.bf16.mxu0 0
    %271 = vmatpush1.bf16.msra.mxu0 %v249
    %272 = vmatprep.subr.bf16.mxu0 0
    %273 = vmatpush2.bf16.msra.mxu0 0
    %274 = vmatprep.subr.bf16.mxu0 0
    %275 = vmatpush2.bf16.msra.mxu0 0
    %276 = vmatprep.subr.bf16.mxu0 0
    %277 = vmatpush2.bf16.msra.mxu0 0
    %278 = vmatprep.subr.bf16.mxu0 0
    %279 = vmatpush2.bf16.msra.mxu0 0
    %280 = vmatprep.subr.bf16.mxu0 0
    %281 = vmatpush2.bf16.msra.mxu0 0
    %282 = vmatprep.subr.bf16.mxu0 0
    %283 = vmatpush2.bf16.msra.mxu0 0
    %284 = vmatprep.subr.bf16.mxu0 0
    %285 = vmatpush2.bf16.msra.mxu0 0
    %286 = vmatprep.subr.bf16.mxu0 0
    %287 = vmatpush2.bf16.msra.mxu0 0
    %288 = vmatprep.mubr.bf16.mxu0 0
    %289 = vmatmul.mubr.bf16.gmra.mxu0 %v254
    %v290 = vpop.f32.mrf.mxu0
    %v291 = vadd.f32 %v239, %v290
    %v292 = vpop.f32.mrf.mxu0
    %v293 = vpop.f32.mrf.mxu0
    %v294 = vadd.f32 %v239, %v293
    %v295 = vpop.f32.mrf.mxu0
    %296 = vdwg.mxu0
    %v297 = vpack.c.bf16 %v149, %v148
    %v299 = vunpack.c.l.b16 %v297
    %v300 = vunpack.c.h.b16 %v297
    %v301 = vpack.c.b16 %v299, %v299
    %v302 = vpack.c.b16 %v300, %v300
    %v303 = vpack.c.bf16 %v227, %v224
    %v305 = vunpack.c.l.b16 %v303
    %v306 = vunpack.c.h.b16 %v303
    %v307 = vpack.c.b16 %v305, %v305
    %v308 = vpack.c.b16 %v306, %v306
    %v309 = vpack.c.bf16 %v294, %v291
    %v311 = vunpack.c.l.b16 %v309
    %v312 = vunpack.c.h.b16 %v309
    %v313 = vpack.c.b16 %v311, %v311
    %v314 = vpack.c.b16 %v312, %v312
    %vm315 = vcmask 64512
    %v317 = vsel %vm315, %v301, 0
    %v320 = vsel %vm315, %v307, 0
    %322 = vmatprep.subr.bf16.mxu0 0
    %323 = vmatpush1.bf16.xpose.msra.mxu0 0
    %324 = vmatprep.subr.bf16.mxu0 0
    %325 = vmatpush1.bf16.xpose.msra.mxu0 0
    %326 = vmatprep.subr.bf16.mxu0 0
    %327 = vmatpush1.bf16.xpose.msra.mxu0 0
    %328 = vmatprep.subr.bf16.mxu0 0
    %329 = vmatpush1.bf16.xpose.msra.mxu0 0
    %330 = vmatprep.subr.bf16.mxu0 0
    %331 = vmatpush1.bf16.xpose.msra.mxu0 0
    %332 = vmatprep.subr.bf16.mxu0 0
    %333 = vmatpush1.bf16.xpose.msra.mxu0 0
    %334 = vmatprep.subr.bf16.mxu0 0
    %335 = vmatpush1.bf16.xpose.msra.mxu0 0
    %336 = vmatprep.subr.bf16.mxu0 0
    %337 = vmatpush1.bf16.xpose.msra.mxu0 %v320
    %338 = vmatprep.subr.bf16.mxu0 0
    %339 = vmatpush2.bf16.xpose.msra.mxu0 0
    %340 = vmatprep.subr.bf16.mxu0 0
    %341 = vmatpush2.bf16.xpose.msra.mxu0 0
    %342 = vmatprep.subr.bf16.mxu0 0
    %343 = vmatpush2.bf16.xpose.msra.mxu0 0
    %344 = vmatprep.subr.bf16.mxu0 0
    %345 = vmatpush2.bf16.xpose.msra.mxu0 0
    %346 = vmatprep.subr.bf16.mxu0 0
    %347 = vmatpush2.bf16.xpose.msra.mxu0 0
    %348 = vmatprep.subr.bf16.mxu0 0
    %349 = vmatpush2.bf16.xpose.msra.mxu0 0
    %350 = vmatprep.subr.bf16.mxu0 0
    %351 = vmatpush2.bf16.xpose.msra.mxu0 0
    %352 = vmatprep.subr.bf16.mxu0 0
    %353 = vmatpush2.bf16.xpose.msra.mxu0 0
    %354 = vmatprep.mubr.bf16.mxu0 0
    %355 = vmatmul.mubr.bf16.gmra.mxu0 %v317
    %v356 = vpop.f32.mrf.mxu0
    %v357 = vadd.f32 0.0, %v356
    %v358 = vpop.f32.mrf.mxu0
    %v359 = vpop.f32.mrf.mxu0
    %v360 = vpop.f32.mrf.mxu0
    %361 = vdwg.mxu0
    %v362 = vsel %vm315, %v357, -inf
    %363 = vmax.xlane.f32.xlu0 %v362
    %v364 = vpop.xlane.xlu0 %363
    %v365 = vsub.f32 %v357, %v364
    %v366 = vmul.f32 %v365, 1.442695
    %v367 = vpow.pop %v366
    %v368 = vsel %vm315, %v367, 0.0
    %369 = vadd.xlane.f32.xlu0 %v368
    %v370 = vpop.xlane.xlu0 %369
    %v371 = vrcp.pop %v370
    %v372 = vmul.f32 %v367, %v371
    %373 = vst.msk [vmem:[#allocation4] sm:$0xff] %vm315, %v372
    %v374 = vpack.c.bf16 %v372, %v372
    %v376 = vsel %vm315, %v374, 0
    %vm378 = vcmask 1043456
    %v380 = vsel %vm378, %v313, 0
    %382 = vmatprep.subr.bf16.mxu0 0
    %383 = vmatpush1.bf16.msra.mxu0 0
    %384 = vmatprep.subr.bf16.mxu0 0
    %385 = vmatpush1.bf16.msra.mxu0 0
    %386 = vmatprep.subr.bf16.mxu0 0
    %387 = vmatpush1.bf16.msra.mxu0 0
    %388 = vmatprep.subr.bf16.mxu0 0
    %389 = vmatpush1.bf16.msra.mxu0 0
    %390 = vmatprep.subr.bf16.mxu0 0
    %391 = vmatpush1.bf16.msra.mxu0 0
    %392 = vmatprep.subr.bf16.mxu0 0
    %393 = vmatpush1.bf16.msra.mxu0 0
    %394 = vmatprep.subr.bf16.mxu0 0
    %395 = vmatpush1.bf16.msra.mxu0 0
    %396 = vmatprep.subr.bf16.mxu0 0
    %397 = vmatpush1.bf16.msra.mxu0 %v380
    %398 = vmatprep.subr.bf16.mxu0 0
    %399 = vmatpush2.bf16.msra.mxu0 0
    %400 = vmatprep.subr.bf16.mxu0 0
    %401 = vmatpush2.bf16.msra.mxu0 0
    %402 = vmatprep.subr.bf16.mxu0 0
    %403 = vmatpush2.bf16.msra.mxu0 0
    %404 = vmatprep.subr.bf16.mxu0 0
    %405 = vmatpush2.bf16.msra.mxu0 0
    %406 = vmatprep.subr.bf16.mxu0 0
    %407 = vmatpush2.bf16.msra.mxu0 0
    %408 = vmatprep.subr.bf16.mxu0 0
    %409 = vmatpush2.bf16.msra.mxu0 0
    %410 = vmatprep.subr.bf16.mxu0 0
    %411 = vmatpush2.bf16.msra.mxu0 0
    %412 = vmatprep.subr.bf16.mxu0 0
    %413 = vmatpush2.bf16.msra.mxu0 0
    %414 = vmatprep.mubr.bf16.mxu0 0
    %415 = vmatmul.mubr.bf16.gmra.mxu0 %v376
    %v416 = vpop.f32.mrf.mxu0
    %v417 = vadd.f32 0.0, %v416
    %v418 = vpop.f32.mrf.mxu0
    %v419 = vpop.f32.mrf.mxu0
    %v420 = vpop.f32.mrf.mxu0
    %421 = vdwg.mxu0
    %v422 = vpack.c.bf16 %v417, %v417
    %v423 = vld [vmem:[%s7] sm:$0xf]
    %424 = vrot.lane.b32.xlu0 %v301, 120
    %v425 = vpop.permute.xlu0 %424
    %426 = vrot.lane.b32.xlu0 %v307, 120
    %v427 = vpop.permute.xlu0 %426
    %v429 = vsel %vm315, %v425, 0
    %v432 = vsel %vm315, %v427, 0
    %434 = vmatprep.subr.bf16.mxu0 0
    %435 = vmatpush1.bf16.xpose.msra.mxu0 0
    %436 = vmatprep.subr.bf16.mxu0 0
    %437 = vmatpush1.bf16.xpose.msra.mxu0 0
    %438 = vmatprep.subr.bf16.mxu0 0
    %439 = vmatpush1.bf16.xpose.msra.mxu0 0
    %440 = vmatprep.subr.bf16.mxu0 0
    %441 = vmatpush1.bf16.xpose.msra.mxu0 0
    %442 = vmatprep.subr.bf16.mxu0 0
    %443 = vmatpush1.bf16.xpose.msra.mxu0 0
    %444 = vmatprep.subr.bf16.mxu0 0
    %445 = vmatpush1.bf16.xpose.msra.mxu0 0
    %446 = vmatprep.subr.bf16.mxu0 0
    %447 = vmatpush1.bf16.xpose.msra.mxu0 0
    %448 = vmatprep.subr.bf16.mxu0 0
    %449 = vmatpush1.bf16.xpose.msra.mxu0 %v432
    %450 = vmatprep.subr.bf16.mxu0 0
    %451 = vmatpush2.bf16.xpose.msra.mxu0 0
    %452 = vmatprep.subr.bf16.mxu0 0
    %453 = vmatpush2.bf16.xpose.msra.mxu0 0
    %454 = vmatprep.subr.bf16.mxu0 0
    %455 = vmatpush2.bf16.xpose.msra.mxu0 0
    %456 = vmatprep.subr.bf16.mxu0 0
    %457 = vmatpush2.bf16.xpose.msra.mxu0 0
    %458 = vmatprep.subr.bf16.mxu0 0
    %459 = vmatpush2.bf16.xpose.msra.mxu0 0
    %460 = vmatprep.subr.bf16.mxu0 0
    %461 = vmatpush2.bf16.xpose.msra.mxu0 0
    %462 = vmatprep.subr.bf16.mxu0 0
    %463 = vmatpush2.bf16.xpose.msra.mxu0 0
    %464 = vmatprep.subr.bf16.mxu0 0
    %465 = vmatpush2.bf16.xpose.msra.mxu0 0
    %466 = vmatprep.mubr.bf16.mxu0 0
    %467 = vmatmul.mubr.bf16.gmra.mxu0 %v429
    %v468 = vpop.f32.mrf.mxu0
    %v469 = vadd.f32 0.0, %v468
    %v470 = vpop.f32.mrf.mxu0
    %v471 = vpop.f32.mrf.mxu0
    %v472 = vpop.f32.mrf.mxu0
    %473 = vdwg.mxu0
    %v474 = vsel %vm315, %v469, -inf
    %475 = vmax.xlane.f32.xlu0 %v474
    %v476 = vpop.xlane.xlu0 %475
    %v477 = vsub.f32 %v469, %v476
    %v478 = vmul.f32 %v477, 1.442695
    %v479 = vpow.pop %v478
    %v480 = vsel %vm315, %v479, 0.0
    %481 = vadd.xlane.f32.xlu0 %v480
    %v482 = vpop.xlane.xlu0 %481
    %v483 = vrcp.pop %v482
    %v484 = vmul.f32 %v479, %v483
    %s485 = scalar_lea.vmem [#allocation4], 8
    %486 = vst.msk [vmem:[%s485] sm:$0xff] %vm315, %v484
    %v487 = vpack.c.bf16 %v484, %v484
    %488 = vrot.lane.b32.xlu0 %v313, 120
    %v489 = vpop.permute.xlu0 %488
    %v491 = vsel %vm315, %v487, 0
    %v494 = vsel %vm378, %v489, 0
    %496 = vmatprep.subr.bf16.mxu0 0
    %497 = vmatpush1.bf16.msra.mxu0 0
    %498 = vmatprep.subr.bf16.mxu0 0
    %499 = vmatpush1.bf16.msra.mxu0 0
    %500 = vmatprep.subr.bf16.mxu0 0
    %501 = vmatpush1.bf16.msra.mxu0 0
    %502 = vmatprep.subr.bf16.mxu0 0
    %503 = vmatpush1.bf16.msra.mxu0 0
    %504 = vmatprep.subr.bf16.mxu0 0
    %505 = vmatpush1.bf16.msra.mxu0 0
    %506 = vmatprep.subr.bf16.mxu0 0
    %507 = vmatpush1.bf16.msra.mxu0 0
    %508 = vmatprep.subr.bf16.mxu0 0
    %509 = vmatpush1.bf16.msra.mxu0 0
    %510 = vmatprep.subr.bf16.mxu0 0
    %511 = vmatpush1.bf16.msra.mxu0 %v494
    %512 = vmatprep.subr.bf16.mxu0 0
    %513 = vmatpush2.bf16.msra.mxu0 0
    %514 = vmatprep.subr.bf16.mxu0 0
    %515 = vmatpush2.bf16.msra.mxu0 0
    %516 = vmatprep.subr.bf16.mxu0 0
    %517 = vmatpush2.bf16.msra.mxu0 0
    %518 = vmatprep.subr.bf16.mxu0 0
    %519 = vmatpush2.bf16.msra.mxu0 0
    %520 = vmatprep.subr.bf16.mxu0 0
    %521 = vmatpush2.bf16.msra.mxu0 0
    %522 = vmatprep.subr.bf16.mxu0 0
    %523 = vmatpush2.bf16.msra.mxu0 0
    %524 = vmatprep.subr.bf16.mxu0 0
    %525 = vmatpush2.bf16.msra.mxu0 0
    %526 = vmatprep.subr.bf16.mxu0 0
    %527 = vmatpush2.bf16.msra.mxu0 0
    %528 = vmatprep.mubr.bf16.mxu0 0
    %529 = vmatmul.mubr.bf16.gmra.mxu0 %v491
    %v530 = vpop.f32.mrf.mxu0
    %v531 = vadd.f32 0.0, %v530
    %v532 = vpop.f32.mrf.mxu0
    %v533 = vpop.f32.mrf.mxu0
    %v534 = vpop.f32.mrf.mxu0
    %535 = vdwg.mxu0
    %v536 = vpack.c.bf16 %v531, %v531
    %v537 = vld [vmem:[%s7 + $0x4] sm:$0xf]
    %v539 = vsel %vm315, %v536, 0
    %v542 = vsel %vm378, %v537, 0
    %544 = vmatprep.subr.bf16.mxu0 0
    %545 = vmatpush1.bf16.msra.mxu0 0
    %546 = vmatprep.subr.bf16.mxu0 0
    %547 = vmatpush1.bf16.msra.mxu0 0
    %548 = vmatprep.subr.bf16.mxu0 0
    %549 = vmatpush1.bf16.msra.mxu0 0
    %550 = vmatprep.subr.bf16.mxu0 0
    %551 = vmatpush1.bf16.msra.mxu0 0
    %552 = vmatprep.subr.bf16.mxu0 0
    %553 = vmatpush1.bf16.msra.mxu0 0
    %554 = vmatprep.subr.bf16.mxu0 0
    %555 = vmatpush1.bf16.msra.mxu0 0
    %556 = vmatprep.subr.bf16.mxu0 0
    %557 = vmatpush1.bf16.msra.mxu0 0
    %558 = vmatprep.subr.bf16.mxu0 0
    %559 = vmatpush1.bf16.msra.mxu0 %v542
    %560 = vmatprep.subr.bf16.mxu0 0
    %561 = vmatpush2.bf16.msra.mxu0 0
    %562 = vmatprep.subr.bf16.mxu0 0
    %563 = vmatpush2.bf16.msra.mxu0 0
    %564 = vmatprep.subr.bf16.mxu0 0
    %565 = vmatpush2.bf16.msra.mxu0 0
    %566 = vmatprep.subr.bf16.mxu0 0
    %567 = vmatpush2.bf16.msra.mxu0 0
    %568 = vmatprep.subr.bf16.mxu0 0
    %569 = vmatpush2.bf16.msra.mxu0 0
    %570 = vmatprep.subr.bf16.mxu0 0
    %571 = vmatpush2.bf16.msra.mxu0 0
    %572 = vmatprep.subr.bf16.mxu0 0
    %573 = vmatpush2.bf16.msra.mxu0 0
    %574 = vmatprep.subr.bf16.mxu0 0
    %575 = vmatpush2.bf16.msra.mxu0 0
    %576 = vmatprep.mubr.bf16.mxu0 0
    %577 = vmatmul.mubr.bf16.gmra.mxu0 %v539
    %v578 = vpop.f32.mrf.mxu0
    %v579 = vadd.f32 0.0, %v578
    %v580 = vpop.f32.mrf.mxu0
    %v581 = vpop.f32.mrf.mxu0
    %v582 = vpop.f32.mrf.mxu0
    %583 = vdwg.mxu0
    %v585 = vsel %vm315, %v422, 0
    %v588 = vsel %vm378, %v423, 0
    %590 = vmatprep.subr.bf16.mxu0 0
    %591 = vmatpush1.bf16.msra.mxu0 0
    %592 = vmatprep.subr.bf16.mxu0 0
    %593 = vmatpush1.bf16.msra.mxu0 0
    %594 = vmatprep.subr.bf16.mxu0 0
    %595 = vmatpush1.bf16.msra.mxu0 0
    %596 = vmatprep.subr.bf16.mxu0 0
    %597 = vmatpush1.bf16.msra.mxu0 0
    %598 = vmatprep.subr.bf16.mxu0 0
    %599 = vmatpush1.bf16.msra.mxu0 0
    %600 = vmatprep.subr.bf16.mxu0 0
    %601 = vmatpush1.bf16.msra.mxu0 0
    %602 = vmatprep.subr.bf16.mxu0 0
    %603 = vmatpush1.bf16.msra.mxu0 0
    %604 = vmatprep.subr.bf16.mxu0 0
    %605 = vmatpush1.bf16.msra.mxu0 %v588
    %606 = vmatprep.subr.bf16.mxu0 0
    %607 = vmatpush2.bf16.msra.mxu0 0
    %608 = vmatprep.subr.bf16.mxu0 0
    %609 = vmatpush2.bf16.msra.mxu0 0
    %610 = vmatprep.subr.bf16.mxu0 0
    %611 = vmatpush2.bf16.msra.mxu0 0
    %612 = vmatprep.subr.bf16.mxu0 0
    %613 = vmatpush2.bf16.msra.mxu0 0
    %614 = vmatprep.subr.bf16.mxu0 0
    %615 = vmatpush2.bf16.msra.mxu0 0
    %616 = vmatprep.subr.bf16.mxu0 0
    %617 = vmatpush2.bf16.msra.mxu0 0
    %618 = vmatprep.subr.bf16.mxu0 0
    %619 = vmatpush2.bf16.msra.mxu0 0
    %620 = vmatprep.subr.bf16.mxu0 0
    %621 = vmatpush2.bf16.msra.mxu0 0
    %622 = vmatprep.mubr.bf16.mxu0 0
    %623 = vmatmul.mubr.bf16.gmra.mxu0 %v585
    %v624 = vpop.f32.mrf.mxu0
    %v625 = vadd.f32 %v579, %v624
    %v626 = vpop.f32.mrf.mxu0
    %v627 = vpop.f32.mrf.mxu0
    %v628 = vpop.f32.mrf.mxu0
    %629 = vdwg.mxu0
    %630 = vrot.lane.b32.xlu0 %v301, 112
    %v631 = vpop.permute.xlu0 %630
    %632 = vrot.lane.b32.xlu0 %v307, 112
    %v633 = vpop.permute.xlu0 %632
    %v635 = vsel %vm315, %v631, 0
    %v638 = vsel %vm315, %v633, 0
    %640 = vmatprep.subr.bf16.mxu0 0
    %641 = vmatpush1.bf16.xpose.msra.mxu0 0
    %642 = vmatprep.subr.bf16.mxu0 0
    %643 = vmatpush1.bf16.xpose.msra.mxu0 0
    %644 = vmatprep.subr.bf16.mxu0 0
    %645 = vmatpush1.bf16.xpose.msra.mxu0 0
    %646 = vmatprep.subr.bf16.mxu0 0
    %647 = vmatpush1.bf16.xpose.msra.mxu0 0
    %648 = vmatprep.subr.bf16.mxu0 0
    %649 = vmatpush1.bf16.xpose.msra.mxu0 0
    %650 = vmatprep.subr.bf16.mxu0 0
    %651 = vmatpush1.bf16.xpose.msra.mxu0 0
    %652 = vmatprep.subr.bf16.mxu0 0
    %653 = vmatpush1.bf16.xpose.msra.mxu0 0
    %654 = vmatprep.subr.bf16.mxu0 0
    %655 = vmatpush1.bf16.xpose.msra.mxu0 %v638
    %656 = vmatprep.subr.bf16.mxu0 0
    %657 = vmatpush2.bf16.xpose.msra.mxu0 0
    %658 = vmatprep.subr.bf16.mxu0 0
    %659 = vmatpush2.bf16.xpose.msra.mxu0 0
    %660 = vmatprep.subr.bf16.mxu0 0
    %661 = vmatpush2.bf16.xpose.msra.mxu0 0
    %662 = vmatprep.subr.bf16.mxu0 0
    %663 = vmatpush2.bf16.xpose.msra.mxu0 0
    %664 = vmatprep.subr.bf16.mxu0 0
    %665 = vmatpush2.bf16.xpose.msra.mxu0 0
    %666 = vmatprep.subr.bf16.mxu0 0
    %667 = vmatpush2.bf16.xpose.msra.mxu0 0
    %668 = vmatprep.subr.bf16.mxu0 0
    %669 = vmatpush2.bf16.xpose.msra.mxu0 0
    %670 = vmatprep.subr.bf16.mxu0 0
    %671 = vmatpush2.bf16.xpose.msra.mxu0 0
    %672 = vmatprep.mubr.bf16.mxu0 0
    %673 = vmatmul.mubr.bf16.gmra.mxu0 %v635
    %v674 = vpop.f32.mrf.mxu0
    %v675 = vadd.f32 0.0, %v674
    %v676 = vpop.f32.mrf.mxu0
    %v677 = vpop.f32.mrf.mxu0
    %v678 = vpop.f32.mrf.mxu0
    %679 = vdwg.mxu0
    %v680 = vsel %vm315, %v675, -inf
    %681 = vmax.xlane.f32.xlu0 %v680
    %v682 = vpop.xlane.xlu0 %681
    %v683 = vsub.f32 %v675, %v682
    %v684 = vmul.f32 %v683, 1.442695
    %v685 = vpow.pop %v684
    %v686 = vsel %vm315, %v685, 0.0
    %687 = vadd.xlane.f32.xlu0 %v686
    %v688 = vpop.xlane.xlu0 %687
    %v689 = vrcp.pop %v688
    %v690 = vmul.f32 %v685, %v689
    %s691 = scalar_lea.vmem [#allocation4], 16
    %692 = vst.msk [vmem:[%s691] sm:$0xff] %vm315, %v690
    %v693 = vpack.c.bf16 %v690, %v690
    %694 = vrot.lane.b32.xlu0 %v313, 112
    %v695 = vpop.permute.xlu0 %694
    %v697 = vsel %vm315, %v693, 0
    %v700 = vsel %vm378, %v695, 0
    %702 = vmatprep.subr.bf16.mxu0 0
    %703 = vmatpush1.bf16.msra.mxu0 0
    %704 = vmatprep.subr.bf16.mxu0 0
    %705 = vmatpush1.bf16.msra.mxu0 0
    %706 = vmatprep.subr.bf16.mxu0 0
    %707 = vmatpush1.bf16.msra.mxu0 0
    %708 = vmatprep.subr.bf16.mxu0 0
    %709 = vmatpush1.bf16.msra.mxu0 0
    %710 = vmatprep.subr.bf16.mxu0 0
    %711 = vmatpush1.bf16.msra.mxu0 0
    %712 = vmatprep.subr.bf16.mxu0 0
    %713 = vmatpush1.bf16.msra.mxu0 0
    %714 = vmatprep.subr.bf16.mxu0 0
    %715 = vmatpush1.bf16.msra.mxu0 0
    %716 = vmatprep.subr.bf16.mxu0 0
    %717 = vmatpush1.bf16.msra.mxu0 %v700
    %718 = vmatprep.subr.bf16.mxu0 0
    %719 = vmatpush2.bf16.msra.mxu0 0
    %720 = vmatprep.subr.bf16.mxu0 0
    %721 = vmatpush2.bf16.msra.mxu0 0
    %722 = vmatprep.subr.bf16.mxu0 0
    %723 = vmatpush2.bf16.msra.mxu0 0
    %724 = vmatprep.subr.bf16.mxu0 0
    %725 = vmatpush2.bf16.msra.mxu0 0
    %726 = vmatprep.subr.bf16.mxu0 0
    %727 = vmatpush2.bf16.msra.mxu0 0
    %728 = vmatprep.subr.bf16.mxu0 0
    %729 = vmatpush2.bf16.msra.mxu0 0
    %730 = vmatprep.subr.bf16.mxu0 0
    %731 = vmatpush2.bf16.msra.mxu0 0
    %732 = vmatprep.subr.bf16.mxu0 0
    %733 = vmatpush2.bf16.msra.mxu0 0
    %734 = vmatprep.mubr.bf16.mxu0 0
    %735 = vmatmul.mubr.bf16.gmra.mxu0 %v697
    %v736 = vpop.f32.mrf.mxu0
    %v737 = vadd.f32 0.0, %v736
    %v738 = vpop.f32.mrf.mxu0
    %v739 = vpop.f32.mrf.mxu0
    %v740 = vpop.f32.mrf.mxu0
    %741 = vdwg.mxu0
    %v742 = vpack.c.bf16 %v737, %v737
    %v743 = vld [vmem:[%s7 + $0x8] sm:$0xf]
    %v745 = vsel %vm315, %v742, 0
    %v748 = vsel %vm378, %v743, 0
    %750 = vmatprep.subr.bf16.mxu0 0
    %751 = vmatpush1.bf16.msra.mxu0 0
    %752 = vmatprep.subr.bf16.mxu0 0
    %753 = vmatpush1.bf16.msra.mxu0 0
    %754 = vmatprep.subr.bf16.mxu0 0
    %755 = vmatpush1.bf16.msra.mxu0 0
    %756 = vmatprep.subr.bf16.mxu0 0
    %757 = vmatpush1.bf16.msra.mxu0 0
    %758 = vmatprep.subr.bf16.mxu0 0
    %759 = vmatpush1.bf16.msra.mxu0 0
    %760 = vmatprep.subr.bf16.mxu0 0
    %761 = vmatpush1.bf16.msra.mxu0 0
    %762 = vmatprep.subr.bf16.mxu0 0
    %763 = vmatpush1.bf16.msra.mxu0 0
    %764 = vmatprep.subr.bf16.mxu0 0
    %765 = vmatpush1.bf16.msra.mxu0 %v748
    %766 = vmatprep.subr.bf16.mxu0 0
    %767 = vmatpush2.bf16.msra.mxu0 0
    %768 = vmatprep.subr.bf16.mxu0 0
    %769 = vmatpush2.bf16.msra.mxu0 0
    %770 = vmatprep.subr.bf16.mxu0 0
    %771 = vmatpush2.bf16.msra.mxu0 0
    %772 = vmatprep.subr.bf16.mxu0 0
    %773 = vmatpush2.bf16.msra.mxu0 0
    %774 = vmatprep.subr.bf16.mxu0 0
    %775 = vmatpush2.bf16.msra.mxu0 0
    %776 = vmatprep.subr.bf16.mxu0 0
    %777 = vmatpush2.bf16.msra.mxu0 0
    %778 = vmatprep.subr.bf16.mxu0 0
    %779 = vmatpush2.bf16.msra.mxu0 0
    %780 = vmatprep.subr.bf16.mxu0 0
    %781 = vmatpush2.bf16.msra.mxu0 0
    %782 = vmatprep.mubr.bf16.mxu0 0
    %783 = vmatmul.mubr.bf16.gmra.mxu0 %v745
    %v784 = vpop.f32.mrf.mxu0
    %v785 = vadd.f32 0.0, %v784
    %v786 = vpop.f32.mrf.mxu0
    %v787 = vpop.f32.mrf.mxu0
    %v788 = vpop.f32.mrf.mxu0
    %789 = vdwg.mxu0
    %v790 = vadd.f32 %v625, %v785
    %791 = vrot.lane.b32.xlu0 %v301, 104
    %v792 = vpop.permute.xlu0 %791
    %793 = vrot.lane.b32.xlu0 %v307, 104
    %v794 = vpop.permute.xlu0 %793
    %v796 = vsel %vm315, %v792, 0
    %v799 = vsel %vm315, %v794, 0
    %801 = vmatprep.subr.bf16.mxu0 0
    %802 = vmatpush1.bf16.xpose.msra.mxu0 0
    %803 = vmatprep.subr.bf16.mxu0 0
    %804 = vmatpush1.bf16.xpose.msra.mxu0 0
    %805 = vmatprep.subr.bf16.mxu0 0
    %806 = vmatpush1.bf16.xpose.msra.mxu0 0
    %807 = vmatprep.subr.bf16.mxu0 0
    %808 = vmatpush1.bf16.xpose.msra.mxu0 0
    %809 = vmatprep.subr.bf16.mxu0 0
    %810 = vmatpush1.bf16.xpose.msra.mxu0 0
    %811 = vmatprep.subr.bf16.mxu0 0
    %812 = vmatpush1.bf16.xpose.msra.mxu0 0
    %813 = vmatprep.subr.bf16.mxu0 0
    %814 = vmatpush1.bf16.xpose.msra.mxu0 0
    %815 = vmatprep.subr.bf16.mxu0 0
    %816 = vmatpush1.bf16.xpose.msra.mxu0 %v799
    %817 = vmatprep.subr.bf16.mxu0 0
    %818 = vmatpush2.bf16.xpose.msra.mxu0 0
    %819 = vmatprep.subr.bf16.mxu0 0
    %820 = vmatpush2.bf16.xpose.msra.mxu0 0
    %821 = vmatprep.subr.bf16.mxu0 0
    %822 = vmatpush2.bf16.xpose.msra.mxu0 0
    %823 = vmatprep.subr.bf16.mxu0 0
    %824 = vmatpush2.bf16.xpose.msra.mxu0 0
    %825 = vmatprep.subr.bf16.mxu0 0
    %826 = vmatpush2.bf16.xpose.msra.mxu0 0
    %827 = vmatprep.subr.bf16.mxu0 0
    %828 = vmatpush2.bf16.xpose.msra.mxu0 0
    %829 = vmatprep.subr.bf16.mxu0 0
    %830 = vmatpush2.bf16.xpose.msra.mxu0 0
    %831 = vmatprep.subr.bf16.mxu0 0
    %832 = vmatpush2.bf16.xpose.msra.mxu0 0
    %833 = vmatprep.mubr.bf16.mxu0 0
    %834 = vmatmul.mubr.bf16.gmra.mxu0 %v796
    %v835 = vpop.f32.mrf.mxu0
    %v836 = vadd.f32 0.0, %v835
    %v837 = vpop.f32.mrf.mxu0
    %v838 = vpop.f32.mrf.mxu0
    %v839 = vpop.f32.mrf.mxu0
    %840 = vdwg.mxu0
    %v841 = vsel %vm315, %v836, -inf
    %842 = vmax.xlane.f32.xlu0 %v841
    %v843 = vpop.xlane.xlu0 %842
    %v844 = vsub.f32 %v836, %v843
    %v845 = vmul.f32 %v844, 1.442695
    %v846 = vpow.pop %v845
    %v847 = vsel %vm315, %v846, 0.0
    %848 = vadd.xlane.f32.xlu0 %v847
    %v849 = vpop.xlane.xlu0 %848
    %v850 = vrcp.pop %v849
    %v851 = vmul.f32 %v846, %v850
    %s852 = scalar_lea.vmem [#allocation4], 24
    %853 = vst.msk [vmem:[%s852] sm:$0xff] %vm315, %v851
    %v854 = vpack.c.bf16 %v851, %v851
    %855 = vrot.lane.b32.xlu0 %v313, 104
    %v856 = vpop.permute.xlu0 %855
    %v858 = vsel %vm315, %v854, 0
    %v861 = vsel %vm378, %v856, 0
    %863 = vmatprep.subr.bf16.mxu0 0
    %864 = vmatpush1.bf16.msra.mxu0 0
    %865 = vmatprep.subr.bf16.mxu0 0
    %866 = vmatpush1.bf16.msra.mxu0 0
    %867 = vmatprep.subr.bf16.mxu0 0
    %868 = vmatpush1.bf16.msra.mxu0 0
    %869 = vmatprep.subr.bf16.mxu0 0
    %870 = vmatpush1.bf16.msra.mxu0 0
    %871 = vmatprep.subr.bf16.mxu0 0
    %872 = vmatpush1.bf16.msra.mxu0 0
    %873 = vmatprep.subr.bf16.mxu0 0
    %874 = vmatpush1.bf16.msra.mxu0 0
    %875 = vmatprep.subr.bf16.mxu0 0
    %876 = vmatpush1.bf16.msra.mxu0 0
    %877 = vmatprep.subr.bf16.mxu0 0
    %878 = vmatpush1.bf16.msra.mxu0 %v861
    %879 = vmatprep.subr.bf16.mxu0 0
    %880 = vmatpush2.bf16.msra.mxu0 0
    %881 = vmatprep.subr.bf16.mxu0 0
    %882 = vmatpush2.bf16.msra.mxu0 0
    %883 = vmatprep.subr.bf16.mxu0 0
    %884 = vmatpush2.bf16.msra.mxu0 0
    %885 = vmatprep.subr.bf16.mxu0 0
    %886 = vmatpush2.bf16.msra.mxu0 0
    %887 = vmatprep.subr.bf16.mxu0 0
    %888 = vmatpush2.bf16.msra.mxu0 0
    %889 = vmatprep.subr.bf16.mxu0 0
    %890 = vmatpush2.bf16.msra.mxu0 0
    %891 = vmatprep.subr.bf16.mxu0 0
    %892 = vmatpush2.bf16.msra.mxu0 0
    %893 = vmatprep.subr.bf16.mxu0 0
    %894 = vmatpush2.bf16.msra.mxu0 0
    %895 = vmatprep.mubr.bf16.mxu0 0
    %896 = vmatmul.mubr.bf16.gmra.mxu0 %v858
    %v897 = vpop.f32.mrf.mxu0
    %v898 = vadd.f32 0.0, %v897
    %v899 = vpop.f32.mrf.mxu0
    %v900 = vpop.f32.mrf.mxu0
    %v901 = vpop.f32.mrf.mxu0
    %902 = vdwg.mxu0
    %v903 = vpack.c.bf16 %v898, %v898
    %v904 = vld [vmem:[%s7 + $0xc] sm:$0xf]
    %v906 = vsel %vm315, %v903, 0
    %v909 = vsel %vm378, %v904, 0
    %911 = vmatprep.subr.bf16.mxu0 0
    %912 = vmatpush1.bf16.msra.mxu0 0
    %913 = vmatprep.subr.bf16.mxu0 0
    %914 = vmatpush1.bf16.msra.mxu0 0
    %915 = vmatprep.subr.bf16.mxu0 0
    %916 = vmatpush1.bf16.msra.mxu0 0
    %917 = vmatprep.subr.bf16.mxu0 0
    %918 = vmatpush1.bf16.msra.mxu0 0
    %919 = vmatprep.subr.bf16.mxu0 0
    %920 = vmatpush1.bf16.msra.mxu0 0
    %921 = vmatprep.subr.bf16.mxu0 0
    %922 = vmatpush1.bf16.msra.mxu0 0
    %923 = vmatprep.subr.bf16.mxu0 0
    %924 = vmatpush1.bf16.msra.mxu0 0
    %925 = vmatprep.subr.bf16.mxu0 0
    %926 = vmatpush1.bf16.msra.mxu0 %v909
    %927 = vmatprep.subr.bf16.mxu0 0
    %928 = vmatpush2.bf16.msra.mxu0 0
    %929 = vmatprep.subr.bf16.mxu0 0
    %930 = vmatpush2.bf16.msra.mxu0 0
    %931 = vmatprep.subr.bf16.mxu0 0
    %932 = vmatpush2.bf16.msra.mxu0 0
    %933 = vmatprep.subr.bf16.mxu0 0
    %934 = vmatpush2.bf16.msra.mxu0 0
    %935 = vmatprep.subr.bf16.mxu0 0
    %936 = vmatpush2.bf16.msra.mxu0 0
    %937 = vmatprep.subr.bf16.mxu0 0
    %938 = vmatpush2.bf16.msra.mxu0 0
    %939 = vmatprep.subr.bf16.mxu0 0
    %940 = vmatpush2.bf16.msra.mxu0 0
    %941 = vmatprep.subr.bf16.mxu0 0
    %942 = vmatpush2.bf16.msra.mxu0 0
    %943 = vmatprep.mubr.bf16.mxu0 0
    %944 = vmatmul.mubr.bf16.gmra.mxu0 %v906
    %v945 = vpop.f32.mrf.mxu0
    %v946 = vadd.f32 0.0, %v945
    %v947 = vpop.f32.mrf.mxu0
    %v948 = vpop.f32.mrf.mxu0
    %v949 = vpop.f32.mrf.mxu0
    %950 = vdwg.mxu0
    %v951 = vadd.f32 %v790, %v946
    %v953 = vsel %vm315, %v302, 0
    %v956 = vsel %vm315, %v308, 0
    %958 = vmatprep.subr.bf16.mxu0 0
    %959 = vmatpush1.bf16.xpose.msra.mxu0 0
    %960 = vmatprep.subr.bf16.mxu0 0
    %961 = vmatpush1.bf16.xpose.msra.mxu0 0
    %962 = vmatprep.subr.bf16.mxu0 0
    %963 = vmatpush1.bf16.xpose.msra.mxu0 0
    %964 = vmatprep.subr.bf16.mxu0 0
    %965 = vmatpush1.bf16.xpose.msra.mxu0 0
    %966 = vmatprep.subr.bf16.mxu0 0
    %967 = vmatpush1.bf16.xpose.msra.mxu0 0
    %968 = vmatprep.subr.bf16.mxu0 0
    %969 = vmatpush1.bf16.xpose.msra.mxu0 0
    %970 = vmatprep.subr.bf16.mxu0 0
    %971 = vmatpush1.bf16.xpose.msra.mxu0 0
    %972 = vmatprep.subr.bf16.mxu0 0
    %973 = vmatpush1.bf16.xpose.msra.mxu0 %v956
    %974 = vmatprep.subr.bf16.mxu0 0
    %975 = vmatpush2.bf16.xpose.msra.mxu0 0
    %976 = vmatprep.subr.bf16.mxu0 0
    %977 = vmatpush2.bf16.xpose.msra.mxu0 0
    %978 = vmatprep.subr.bf16.mxu0 0
    %979 = vmatpush2.bf16.xpose.msra.mxu0 0
    %980 = vmatprep.subr.bf16.mxu0 0
    %981 = vmatpush2.bf16.xpose.msra.mxu0 0
    %982 = vmatprep.subr.bf16.mxu0 0
    %983 = vmatpush2.bf16.xpose.msra.mxu0 0
    %984 = vmatprep.subr.bf16.mxu0 0
    %985 = vmatpush2.bf16.xpose.msra.mxu0 0
    %986 = vmatprep.subr.bf16.mxu0 0
    %987 = vmatpush2.bf16.xpose.msra.mxu0 0
    %988 = vmatprep.subr.bf16.mxu0 0
    %989 = vmatpush2.bf16.xpose.msra.mxu0 0
    %990 = vmatprep.mubr.bf16.mxu0 0
    %991 = vmatmul.mubr.bf16.gmra.mxu0 %v953
    %v992 = vpop.f32.mrf.mxu0
    %v993 = vadd.f32 0.0, %v992
    %v994 = vpop.f32.mrf.mxu0
    %v995 = vpop.f32.mrf.mxu0
    %v996 = vpop.f32.mrf.mxu0
    %997 = vdwg.mxu0
    %v998 = vsel %vm315, %v993, -inf
    %999 = vmax.xlane.f32.xlu0 %v998
    %v1000 = vpop.xlane.xlu0 %999
    %v1001 = vsub.f32 %v993, %v1000
    %v1002 = vmul.f32 %v1001, 1.442695
    %v1003 = vpow.pop %v1002
    %v1004 = vsel %vm315, %v1003, 0.0
    %1005 = vadd.xlane.f32.xlu0 %v1004
    %v1006 = vpop.xlane.xlu0 %1005
    %v1007 = vrcp.pop %v1006
    %v1008 = vmul.f32 %v1003, %v1007
    %s1009 = scalar_lea.vmem [#allocation4], 32
    %1010 = vst.msk [vmem:[%s1009] sm:$0xff] %vm315, %v1008
    %v1011 = vpack.c.bf16 %v1008, %v1008
    %v1013 = vsel %vm315, %v1011, 0
    %v1016 = vsel %vm378, %v314, 0
    %1018 = vmatprep.subr.bf16.mxu0 0
    %1019 = vmatpush1.bf16.msra.mxu0 0
    %1020 = vmatprep.subr.bf16.mxu0 0
    %1021 = vmatpush1.bf16.msra.mxu0 0
    %1022 = vmatprep.subr.bf16.mxu0 0
    %1023 = vmatpush1.bf16.msra.mxu0 0
    %1024 = vmatprep.subr.bf16.mxu0 0
    %1025 = vmatpush1.bf16.msra.mxu0 0
    %1026 = vmatprep.subr.bf16.mxu0 0
    %1027 = vmatpush1.bf16.msra.mxu0 0
    %1028 = vmatprep.subr.bf16.mxu0 0
    %1029 = vmatpush1.bf16.msra.mxu0 0
    %1030 = vmatprep.subr.bf16.mxu0 0
    %1031 = vmatpush1.bf16.msra.mxu0 0
    %1032 = vmatprep.subr.bf16.mxu0 0
    %1033 = vmatpush1.bf16.msra.mxu0 %v1016
    %1034 = vmatprep.subr.bf16.mxu0 0
    %1035 = vmatpush2.bf16.msra.mxu0 0
    %1036 = vmatprep.subr.bf16.mxu0 0
    %1037 = vmatpush2.bf16.msra.mxu0 0
    %1038 = vmatprep.subr.bf16.mxu0 0
    %1039 = vmatpush2.bf16.msra.mxu0 0
    %1040 = vmatprep.subr.bf16.mxu0 0
    %1041 = vmatpush2.bf16.msra.mxu0 0
    %1042 = vmatprep.subr.bf16.mxu0 0
    %1043 = vmatpush2.bf16.msra.mxu0 0
    %1044 = vmatprep.subr.bf16.mxu0 0
    %1045 = vmatpush2.bf16.msra.mxu0 0
    %1046 = vmatprep.subr.bf16.mxu0 0
    %1047 = vmatpush2.bf16.msra.mxu0 0
    %1048 = vmatprep.subr.bf16.mxu0 0
    %1049 = vmatpush2.bf16.msra.mxu0 0
    %1050 = vmatprep.mubr.bf16.mxu0 0
    %1051 = vmatmul.mubr.bf16.gmra.mxu0 %v1013
    %v1052 = vpop.f32.mrf.mxu0
    %v1053 = vadd.f32 0.0, %v1052
    %v1054 = vpop.f32.mrf.mxu0
    %v1055 = vpop.f32.mrf.mxu0
    %v1056 = vpop.f32.mrf.mxu0
    %1057 = vdwg.mxu0
    %v1058 = vpack.c.bf16 %v1053, %v1053
    %v1059 = vld [vmem:[%s7] sm:$0xf]
    %1060 = vrot.lane.b32.xlu0 %v302, 120
    %v1061 = vpop.permute.xlu0 %1060
    %1062 = vrot.lane.b32.xlu0 %v308, 120
    %v1063 = vpop.permute.xlu0 %1062
    %v1065 = vsel %vm315, %v1061, 0
    %v1068 = vsel %vm315, %v1063, 0
    %1070 = vmatprep.subr.bf16.mxu0 0
    %1071 = vmatpush1.bf16.xpose.msra.mxu0 0
    %1072 = vmatprep.subr.bf16.mxu0 0
    %1073 = vmatpush1.bf16.xpose.msra.mxu0 0
    %1074 = vmatprep.subr.bf16.mxu0 0
    %1075 = vmatpush1.bf16.xpose.msra.mxu0 0
    %1076 = vmatprep.subr.bf16.mxu0 0
    %1077 = vmatpush1.bf16.xpose.msra.mxu0 0
    %1078 = vmatprep.subr.bf16.mxu0 0
    %1079 = vmatpush1.bf16.xpose.msra.mxu0 0
    %1080 = vmatprep.subr.bf16.mxu0 0
    %1081 = vmatpush1.bf16.xpose.msra.mxu0 0
    %1082 = vmatprep.subr.bf16.mxu0 0
    %1083 = vmatpush1.bf16.xpose.msra.mxu0 0
    %1084 = vmatprep.subr.bf16.mxu0 0
    %1085 = vmatpush1.bf16.xpose.msra.mxu0 %v1068
    %1086 = vmatprep.subr.bf16.mxu0 0
    %1087 = vmatpush2.bf16.xpose.msra.mxu0 0
    %1088 = vmatprep.subr.bf16.mxu0 0
    %1089 = vmatpush2.bf16.xpose.msra.mxu0 0
    %1090 = vmatprep.subr.bf16.mxu0 0
    %1091 = vmatpush2.bf16.xpose.msra.mxu0 0
    %1092 = vmatprep.subr.bf16.mxu0 0
    %1093 = vmatpush2.bf16.xpose.msra.mxu0 0
    %1094 = vmatprep.subr.bf16.mxu0 0
    %1095 = vmatpush2.bf16.xpose.msra.mxu0 0
    %1096 = vmatprep.subr.bf16.mxu0 0
    %1097 = vmatpush2.bf16.xpose.msra.mxu0 0
    %1098 = vmatprep.subr.bf16.mxu0 0
    %1099 = vmatpush2.bf16.xpose.msra.mxu0 0
    %1100 = vmatprep.subr.bf16.mxu0 0
    %1101 = vmatpush2.bf16.xpose.msra.mxu0 0
    %1102 = vmatprep.mubr.bf16.mxu0 0
    %1103 = vmatmul.mubr.bf16.gmra.mxu0 %v1065
    %v1104 = vpop.f32.mrf.mxu0
    %v1105 = vadd.f32 0.0, %v1104
    %v1106 = vpop.f32.mrf.mxu0
    %v1107 = vpop.f32.mrf.mxu0
    %v1108 = vpop.f32.mrf.mxu0
    %1109 = vdwg.mxu0
    %v1110 = vsel %vm315, %v1105, -inf
    %1111 = vmax.xlane.f32.xlu0 %v1110
    %v1112 = vpop.xlane.xlu0 %1111
    %v1113 = vsub.f32 %v1105, %v1112
    %v1114 = vmul.f32 %v1113, 1.442695
    %v1115 = vpow.pop %v1114
    %v1116 = vsel %vm315, %v1115, 0.0
    %1117 = vadd.xlane.f32.xlu0 %v1116
    %v1118 = vpop.xlane.xlu0 %1117
    %v1119 = vrcp.pop %v1118
    %v1120 = vmul.f32 %v1115, %v1119
    %s1121 = scalar_lea.vmem [#allocation4], 40
    %1122 = vst.msk [vmem:[%s1121] sm:$0xff] %vm315, %v1120
    %v1123 = vpack.c.bf16 %v1120, %v1120
    %1124 = vrot.lane.b32.xlu0 %v314, 120
    %v1125 = vpop.permute.xlu0 %1124
    %v1127 = vsel %vm315, %v1123, 0
    %v1130 = vsel %vm378, %v1125, 0
    %1132 = vmatprep.subr.bf16.mxu0 0
    %1133 = vmatpush1.bf16.msra.mxu0 0
    %1134 = vmatprep.subr.bf16.mxu0 0
    %1135 = vmatpush1.bf16.msra.mxu0 0
    %1136 = vmatprep.subr.bf16.mxu0 0
    %1137 = vmatpush1.bf16.msra.mxu0 0
    %1138 = vmatprep.subr.bf16.mxu0 0
    %1139 = vmatpush1.bf16.msra.mxu0 0
    %1140 = vmatprep.subr.bf16.mxu0 0
    %1141 = vmatpush1.bf16.msra.mxu0 0
    %1142 = vmatprep.subr.bf16.mxu0 0
    %1143 = vmatpush1.bf16.msra.mxu0 0
    %1144 = vmatprep.subr.bf16.mxu0 0
    %1145 = vmatpush1.bf16.msra.mxu0 0
    %1146 = vmatprep.subr.bf16.mxu0 0
    %1147 = vmatpush1.bf16.msra.mxu0 %v1130
    %1148 = vmatprep.subr.bf16.mxu0 0
    %1149 = vmatpush2.bf16.msra.mxu0 0
    %1150 = vmatprep.subr.bf16.mxu0 0
    %1151 = vmatpush2.bf16.msra.mxu0 0
    %1152 = vmatprep.subr.bf16.mxu0 0
    %1153 = vmatpush2.bf16.msra.mxu0 0
    %1154 = vmatprep.subr.bf16.mxu0 0
    %1155 = vmatpush2.bf16.msra.mxu0 0
    %1156 = vmatprep.subr.bf16.mxu0 0
    %1157 = vmatpush2.bf16.msra.mxu0 0
    %1158 = vmatprep.subr.bf16.mxu0 0
    %1159 = vmatpush2.bf16.msra.mxu0 0
    %1160 = vmatprep.subr.bf16.mxu0 0
    %1161 = vmatpush2.bf16.msra.mxu0 0
    %1162 = vmatprep.subr.bf16.mxu0 0
    %1163 = vmatpush2.bf16.msra.mxu0 0
    %1164 = vmatprep.mubr.bf16.mxu0 0
    %1165 = vmatmul.mubr.bf16.gmra.mxu0 %v1127
    %v1166 = vpop.f32.mrf.mxu0
    %v1167 = vadd.f32 0.0, %v1166
    %v1168 = vpop.f32.mrf.mxu0
    %v1169 = vpop.f32.mrf.mxu0
    %v1170 = vpop.f32.mrf.mxu0
    %1171 = vdwg.mxu0
    %v1172 = vpack.c.bf16 %v1167, %v1167
    %v1173 = vld [vmem:[%s7 + $0x4] sm:$0xf]
    %v1175 = vsel %vm315, %v1172, 0
    %v1178 = vsel %vm378, %v1173, 0
    %1180 = vmatprep.subr.bf16.mxu0 0
    %1181 = vmatpush1.bf16.msra.mxu0 0
    %1182 = vmatprep.subr.bf16.mxu0 0
    %1183 = vmatpush1.bf16.msra.mxu0 0
    %1184 = vmatprep.subr.bf16.mxu0 0
    %1185 = vmatpush1.bf16.msra.mxu0 0
    %1186 = vmatprep.subr.bf16.mxu0 0
    %1187 = vmatpush1.bf16.msra.mxu0 0
    %1188 = vmatprep.subr.bf16.mxu0 0
    %1189 = vmatpush1.bf16.msra.mxu0 0
    %1190 = vmatprep.subr.bf16.mxu0 0
    %1191 = vmatpush1.bf16.msra.mxu0 0
    %1192 = vmatprep.subr.bf16.mxu0 0
    %1193 = vmatpush1.bf16.msra.mxu0 0
    %1194 = vmatprep.subr.bf16.mxu0 0
    %1195 = vmatpush1.bf16.msra.mxu0 %v1178
    %1196 = vmatprep.subr.bf16.mxu0 0
    %1197 = vmatpush2.bf16.msra.mxu0 0
    %1198 = vmatprep.subr.bf16.mxu0 0
    %1199 = vmatpush2.bf16.msra.mxu0 0
    %1200 = vmatprep.subr.bf16.mxu0 0
    %1201 = vmatpush2.bf16.msra.mxu0 0
    %1202 = vmatprep.subr.bf16.mxu0 0
    %1203 = vmatpush2.bf16.msra.mxu0 0
    %1204 = vmatprep.subr.bf16.mxu0 0
    %1205 = vmatpush2.bf16.msra.mxu0 0
    %1206 = vmatprep.subr.bf16.mxu0 0
    %1207 = vmatpush2.bf16.msra.mxu0 0
    %1208 = vmatprep.subr.bf16.mxu0 0
    %1209 = vmatpush2.bf16.msra.mxu0 0
    %1210 = vmatprep.subr.bf16.mxu0 0
    %1211 = vmatpush2.bf16.msra.mxu0 0
    %1212 = vmatprep.mubr.bf16.mxu0 0
    %1213 = vmatmul.mubr.bf16.gmra.mxu0 %v1175
    %v1214 = vpop.f32.mrf.mxu0
    %v1215 = vadd.f32 0.0, %v1214
    %v1216 = vpop.f32.mrf.mxu0
    %v1217 = vpop.f32.mrf.mxu0
    %v1218 = vpop.f32.mrf.mxu0
    %1219 = vdwg.mxu0
    %v1221 = vsel %vm315, %v1058, 0
    %v1224 = vsel %vm378, %v1059, 0
    %1226 = vmatprep.subr.bf16.mxu0 0
    %1227 = vmatpush1.bf16.msra.mxu0 0
    %1228 = vmatprep.subr.bf16.mxu0 0
    %1229 = vmatpush1.bf16.msra.mxu0 0
    %1230 = vmatprep.subr.bf16.mxu0 0
    %1231 = vmatpush1.bf16.msra.mxu0 0
    %1232 = vmatprep.subr.bf16.mxu0 0
    %1233 = vmatpush1.bf16.msra.mxu0 0
    %1234 = vmatprep.subr.bf16.mxu0 0
    %1235 = vmatpush1.bf16.msra.mxu0 0
    %1236 = vmatprep.subr.bf16.mxu0 0
    %1237 = vmatpush1.bf16.msra.mxu0 0
    %1238 = vmatprep.subr.bf16.mxu0 0
    %1239 = vmatpush1.bf16.msra.mxu0 0
    %1240 = vmatprep.subr.bf16.mxu0 0
    %1241 = vmatpush1.bf16.msra.mxu0 %v1224
    %1242 = vmatprep.subr.bf16.mxu0 0
    %1243 = vmatpush2.bf16.msra.mxu0 0
    %1244 = vmatprep.subr.bf16.mxu0 0
    %1245 = vmatpush2.bf16.msra.mxu0 0
    %1246 = vmatprep.subr.bf16.mxu0 0
    %1247 = vmatpush2.bf16.msra.mxu0 0
    %1248 = vmatprep.subr.bf16.mxu0 0
    %1249 = vmatpush2.bf16.msra.mxu0 0
    %1250 = vmatprep.subr.bf16.mxu0 0
    %1251 = vmatpush2.bf16.msra.mxu0 0
    %1252 = vmatprep.subr.bf16.mxu0 0
    %1253 = vmatpush2.bf16.msra.mxu0 0
    %1254 = vmatprep.subr.bf16.mxu0 0
    %1255 = vmatpush2.bf16.msra.mxu0 0
    %1256 = vmatprep.subr.bf16.mxu0 0
    %1257 = vmatpush2.bf16.msra.mxu0 0
    %1258 = vmatprep.mubr.bf16.mxu0 0
    %1259 = vmatmul.mubr.bf16.gmra.mxu0 %v1221
    %v1260 = vpop.f32.mrf.mxu0
    %v1261 = vadd.f32 %v1215, %v1260
    %v1262 = vpop.f32.mrf.mxu0
    %v1263 = vpop.f32.mrf.mxu0
    %v1264 = vpop.f32.mrf.mxu0
    %1265 = vdwg.mxu0
    %1266 = vrot.lane.b32.xlu0 %v302, 112
    %v1267 = vpop.permute.xlu0 %1266
    %1268 = vrot.lane.b32.xlu0 %v308, 112
    %v1269 = vpop.permute.xlu0 %1268
    %v1271 = vsel %vm315, %v1267, 0
    %v1274 = vsel %vm315, %v1269, 0
    %1276 = vmatprep.subr.bf16.mxu0 0
    %1277 = vmatpush1.bf16.xpose.msra.mxu0 0
    %1278 = vmatprep.subr.bf16.mxu0 0
    %1279 = vmatpush1.bf16.xpose.msra.mxu0 0
    %1280 = vmatprep.subr.bf16.mxu0 0
    %1281 = vmatpush1.bf16.xpose.msra.mxu0 0
    %1282 = vmatprep.subr.bf16.mxu0 0
    %1283 = vmatpush1.bf16.xpose.msra.mxu0 0
    %1284 = vmatprep.subr.bf16.mxu0 0
    %1285 = vmatpush1.bf16.xpose.msra.mxu0 0
    %1286 = vmatprep.subr.bf16.mxu0 0
    %1287 = vmatpush1.bf16.xpose.msra.mxu0 0
    %1288 = vmatprep.subr.bf16.mxu0 0
    %1289 = vmatpush1.bf16.xpose.msra.mxu0 0
    %1290 = vmatprep.subr.bf16.mxu0 0
    %1291 = vmatpush1.bf16.xpose.msra.mxu0 %v1274
    %1292 = vmatprep.subr.bf16.mxu0 0
    %1293 = vmatpush2.bf16.xpose.msra.mxu0 0
    %1294 = vmatprep.subr.bf16.mxu0 0
    %1295 = vmatpush2.bf16.xpose.msra.mxu0 0
    %1296 = vmatprep.subr.bf16.mxu0 0
    %1297 = vmatpush2.bf16.xpose.msra.mxu0 0
    %1298 = vmatprep.subr.bf16.mxu0 0
    %1299 = vmatpush2.bf16.xpose.msra.mxu0 0
    %1300 = vmatprep.subr.bf16.mxu0 0
    %1301 = vmatpush2.bf16.xpose.msra.mxu0 0
    %1302 = vmatprep.subr.bf16.mxu0 0
    %1303 = vmatpush2.bf16.xpose.msra.mxu0 0
    %1304 = vmatprep.subr.bf16.mxu0 0
    %1305 = vmatpush2.bf16.xpose.msra.mxu0 0
    %1306 = vmatprep.subr.bf16.mxu0 0
    %1307 = vmatpush2.bf16.xpose.msra.mxu0 0
    %1308 = vmatprep.mubr.bf16.mxu0 0
    %1309 = vmatmul.mubr.bf16.gmra.mxu0 %v1271
    %v1310 = vpop.f32.mrf.mxu0
    %v1311 = vadd.f32 0.0, %v1310
    %v1312 = vpop.f32.mrf.mxu0
    %v1313 = vpop.f32.mrf.mxu0
    %v1314 = vpop.f32.mrf.mxu0
    %1315 = vdwg.mxu0
    %v1316 = vsel %vm315, %v1311, -inf
    %1317 = vmax.xlane.f32.xlu0 %v1316
    %v1318 = vpop.xlane.xlu0 %1317
    %v1319 = vsub.f32 %v1311, %v1318
    %v1320 = vmul.f32 %v1319, 1.442695
    %v1321 = vpow.pop %v1320
    %v1322 = vsel %vm315, %v1321, 0.0
    %1323 = vadd.xlane.f32.xlu0 %v1322
    %v1324 = vpop.xlane.xlu0 %1323
    %v1325 = vrcp.pop %v1324
    %v1326 = vmul.f32 %v1321, %v1325
    %s1327 = scalar_lea.vmem [#allocation4], 48
    %1328 = vst.msk [vmem:[%s1327] sm:$0xff] %vm315, %v1326
    %v1329 = vpack.c.bf16 %v1326, %v1326
    %1330 = vrot.lane.b32.xlu0 %v314, 112
    %v1331 = vpop.permute.xlu0 %1330
    %v1333 = vsel %vm315, %v1329, 0
    %v1336 = vsel %vm378, %v1331, 0
    %1338 = vmatprep.subr.bf16.mxu0 0
    %1339 = vmatpush1.bf16.msra.mxu0 0
    %1340 = vmatprep.subr.bf16.mxu0 0
    %1341 = vmatpush1.bf16.msra.mxu0 0
    %1342 = vmatprep.subr.bf16.mxu0 0
    %1343 = vmatpush1.bf16.msra.mxu0 0
    %1344 = vmatprep.subr.bf16.mxu0 0
    %1345 = vmatpush1.bf16.msra.mxu0 0
    %1346 = vmatprep.subr.bf16.mxu0 0
    %1347 = vmatpush1.bf16.msra.mxu0 0
    %1348 = vmatprep.subr.bf16.mxu0 0
    %1349 = vmatpush1.bf16.msra.mxu0 0
    %1350 = vmatprep.subr.bf16.mxu0 0
    %1351 = vmatpush1.bf16.msra.mxu0 0
    %1352 = vmatprep.subr.bf16.mxu0 0
    %1353 = vmatpush1.bf16.msra.mxu0 %v1336
    %1354 = vmatprep.subr.bf16.mxu0 0
    %1355 = vmatpush2.bf16.msra.mxu0 0
    %1356 = vmatprep.subr.bf16.mxu0 0
    %1357 = vmatpush2.bf16.msra.mxu0 0
    %1358 = vmatprep.subr.bf16.mxu0 0
    %1359 = vmatpush2.bf16.msra.mxu0 0
    %1360 = vmatprep.subr.bf16.mxu0 0
    %1361 = vmatpush2.bf16.msra.mxu0 0
    %1362 = vmatprep.subr.bf16.mxu0 0
    %1363 = vmatpush2.bf16.msra.mxu0 0
    %1364 = vmatprep.subr.bf16.mxu0 0
    %1365 = vmatpush2.bf16.msra.mxu0 0
    %1366 = vmatprep.subr.bf16.mxu0 0
    %1367 = vmatpush2.bf16.msra.mxu0 0
    %1368 = vmatprep.subr.bf16.mxu0 0
    %1369 = vmatpush2.bf16.msra.mxu0 0
    %1370 = vmatprep.mubr.bf16.mxu0 0
    %1371 = vmatmul.mubr.bf16.gmra.mxu0 %v1333
    %v1372 = vpop.f32.mrf.mxu0
    %v1373 = vadd.f32 0.0, %v1372
    %v1374 = vpop.f32.mrf.mxu0
    %v1375 = vpop.f32.mrf.mxu0
    %v1376 = vpop.f32.mrf.mxu0
    %1377 = vdwg.mxu0
    %v1378 = vpack.c.bf16 %v1373, %v1373
    %v1379 = vld [vmem:[%s7 + $0x8] sm:$0xf]
    %v1381 = vsel %vm315, %v1378, 0
    %v1384 = vsel %vm378, %v1379, 0
    %1386 = vmatprep.subr.bf16.mxu0 0
    %1387 = vmatpush1.bf16.msra.mxu0 0
    %1388 = vmatprep.subr.bf16.mxu0 0
    %1389 = vmatpush1.bf16.msra.mxu0 0
    %1390 = vmatprep.subr.bf16.mxu0 0
    %1391 = vmatpush1.bf16.msra.mxu0 0
    %1392 = vmatprep.subr.bf16.mxu0 0
    %1393 = vmatpush1.bf16.msra.mxu0 0
    %1394 = vmatprep.subr.bf16.mxu0 0
    %1395 = vmatpush1.bf16.msra.mxu0 0
    %1396 = vmatprep.subr.bf16.mxu0 0
    %1397 = vmatpush1.bf16.msra.mxu0 0
    %1398 = vmatprep.subr.bf16.mxu0 0
    %1399 = vmatpush1.bf16.msra.mxu0 0
    %1400 = vmatprep.subr.bf16.mxu0 0
    %1401 = vmatpush1.bf16.msra.mxu0 %v1384
    %1402 = vmatprep.subr.bf16.mxu0 0
    %1403 = vmatpush2.bf16.msra.mxu0 0
    %1404 = vmatprep.subr.bf16.mxu0 0
    %1405 = vmatpush2.bf16.msra.mxu0 0
    %1406 = vmatprep.subr.bf16.mxu0 0
    %1407 = vmatpush2.bf16.msra.mxu0 0
    %1408 = vmatprep.subr.bf16.mxu0 0
    %1409 = vmatpush2.bf16.msra.mxu0 0
    %1410 = vmatprep.subr.bf16.mxu0 0
    %1411 = vmatpush2.bf16.msra.mxu0 0
    %1412 = vmatprep.subr.bf16.mxu0 0
    %1413 = vmatpush2.bf16.msra.mxu0 0
    %1414 = vmatprep.subr.bf16.mxu0 0
    %1415 = vmatpush2.bf16.msra.mxu0 0
    %1416 = vmatprep.subr.bf16.mxu0 0
    %1417 = vmatpush2.bf16.msra.mxu0 0
    %1418 = vmatprep.mubr.bf16.mxu0 0
    %1419 = vmatmul.mubr.bf16.gmra.mxu0 %v1381
    %v1420 = vpop.f32.mrf.mxu0
    %v1421 = vadd.f32 0.0, %v1420
    %v1422 = vpop.f32.mrf.mxu0
    %v1423 = vpop.f32.mrf.mxu0
    %v1424 = vpop.f32.mrf.mxu0
    %1425 = vdwg.mxu0
    %v1426 = vadd.f32 %v1261, %v1421
    %1427 = vrot.lane.b32.xlu0 %v302, 104
    %v1428 = vpop.permute.xlu0 %1427
    %1429 = vrot.lane.b32.xlu0 %v308, 104
    %v1430 = vpop.permute.xlu0 %1429
    %v1432 = vsel %vm315, %v1428, 0
    %v1435 = vsel %vm315, %v1430, 0
    %1437 = vmatprep.subr.bf16.mxu0 0
    %1438 = vmatpush1.bf16.xpose.msra.mxu0 0
    %1439 = vmatprep.subr.bf16.mxu0 0
    %1440 = vmatpush1.bf16.xpose.msra.mxu0 0
    %1441 = vmatprep.subr.bf16.mxu0 0
    %1442 = vmatpush1.bf16.xpose.msra.mxu0 0
    %1443 = vmatprep.subr.bf16.mxu0 0
    %1444 = vmatpush1.bf16.xpose.msra.mxu0 0
    %1445 = vmatprep.subr.bf16.mxu0 0
    %1446 = vmatpush1.bf16.xpose.msra.mxu0 0
    %1447 = vmatprep.subr.bf16.mxu0 0
    %1448 = vmatpush1.bf16.xpose.msra.mxu0 0
    %1449 = vmatprep.subr.bf16.mxu0 0
    %1450 = vmatpush1.bf16.xpose.msra.mxu0 0
    %1451 = vmatprep.subr.bf16.mxu0 0
    %1452 = vmatpush1.bf16.xpose.msra.mxu0 %v1435
    %1453 = vmatprep.subr.bf16.mxu0 0
    %1454 = vmatpush2.bf16.xpose.msra.mxu0 0
    %1455 = vmatprep.subr.bf16.mxu0 0
    %1456 = vmatpush2.bf16.xpose.msra.mxu0 0
    %1457 = vmatprep.subr.bf16.mxu0 0
    %1458 = vmatpush2.bf16.xpose.msra.mxu0 0
    %1459 = vmatprep.subr.bf16.mxu0 0
    %1460 = vmatpush2.bf16.xpose.msra.mxu0 0
    %1461 = vmatprep.subr.bf16.mxu0 0
    %1462 = vmatpush2.bf16.xpose.msra.mxu0 0
    %1463 = vmatprep.subr.bf16.mxu0 0
    %1464 = vmatpush2.bf16.xpose.msra.mxu0 0
    %1465 = vmatprep.subr.bf16.mxu0 0
    %1466 = vmatpush2.bf16.xpose.msra.mxu0 0
    %1467 = vmatprep.subr.bf16.mxu0 0
    %1468 = vmatpush2.bf16.xpose.msra.mxu0 0
    %1469 = vmatprep.mubr.bf16.mxu0 0
    %1470 = vmatmul.mubr.bf16.gmra.mxu0 %v1432
    %v1471 = vpop.f32.mrf.mxu0
    %v1472 = vadd.f32 0.0, %v1471
    %v1473 = vpop.f32.mrf.mxu0
    %v1474 = vpop.f32.mrf.mxu0
    %v1475 = vpop.f32.mrf.mxu0
    %1476 = vdwg.mxu0
    %v1477 = vsel %vm315, %v1472, -inf
    %1478 = vmax.xlane.f32.xlu0 %v1477
    %v1479 = vpop.xlane.xlu0 %1478
    %v1480 = vsub.f32 %v1472, %v1479
    %v1481 = vmul.f32 %v1480, 1.442695
    %v1482 = vpow.pop %v1481
    %v1483 = vsel %vm315, %v1482, 0.0
    %1484 = vadd.xlane.f32.xlu0 %v1483
    %v1485 = vpop.xlane.xlu0 %1484
    %v1486 = vrcp.pop %v1485
    %v1487 = vmul.f32 %v1482, %v1486
    %s1488 = scalar_lea.vmem [#allocation4], 56
    %1489 = vst.msk [vmem:[%s1488] sm:$0xff] %vm315, %v1487
    %v1490 = vpack.c.bf16 %v1487, %v1487
    %1491 = vrot.lane.b32.xlu0 %v314, 104
    %v1492 = vpop.permute.xlu0 %1491
    %v1494 = vsel %vm315, %v1490, 0
    %v1497 = vsel %vm378, %v1492, 0
    %1499 = vmatprep.subr.bf16.mxu0 0
    %1500 = vmatpush1.bf16.msra.mxu0 0
    %1501 = vmatprep.subr.bf16.mxu0 0
    %1502 = vmatpush1.bf16.msra.mxu0 0
    %1503 = vmatprep.subr.bf16.mxu0 0
    %1504 = vmatpush1.bf16.msra.mxu0 0
    %1505 = vmatprep.subr.bf16.mxu0 0
    %1506 = vmatpush1.bf16.msra.mxu0 0
    %1507 = vmatprep.subr.bf16.mxu0 0
    %1508 = vmatpush1.bf16.msra.mxu0 0
    %1509 = vmatprep.subr.bf16.mxu0 0
    %1510 = vmatpush1.bf16.msra.mxu0 0
    %1511 = vmatprep.subr.bf16.mxu0 0
    %1512 = vmatpush1.bf16.msra.mxu0 0
    %1513 = vmatprep.subr.bf16.mxu0 0
    %1514 = vmatpush1.bf16.msra.mxu0 %v1497
    %1515 = vmatprep.subr.bf16.mxu0 0
    %1516 = vmatpush2.bf16.msra.mxu0 0
    %1517 = vmatprep.subr.bf16.mxu0 0
    %1518 = vmatpush2.bf16.msra.mxu0 0
    %1519 = vmatprep.subr.bf16.mxu0 0
    %1520 = vmatpush2.bf16.msra.mxu0 0
    %1521 = vmatprep.subr.bf16.mxu0 0
    %1522 = vmatpush2.bf16.msra.mxu0 0
    %1523 = vmatprep.subr.bf16.mxu0 0
    %1524 = vmatpush2.bf16.msra.mxu0 0
    %1525 = vmatprep.subr.bf16.mxu0 0
    %1526 = vmatpush2.bf16.msra.mxu0 0
    %1527 = vmatprep.subr.bf16.mxu0 0
    %1528 = vmatpush2.bf16.msra.mxu0 0
    %1529 = vmatprep.subr.bf16.mxu0 0
    %1530 = vmatpush2.bf16.msra.mxu0 0
    %1531 = vmatprep.mubr.bf16.mxu0 0
    %1532 = vmatmul.mubr.bf16.gmra.mxu0 %v1494
    %v1533 = vpop.f32.mrf.mxu0
    %v1534 = vadd.f32 0.0, %v1533
    %v1535 = vpop.f32.mrf.mxu0
    %v1536 = vpop.f32.mrf.mxu0
    %v1537 = vpop.f32.mrf.mxu0
    %1538 = vdwg.mxu0
    %v1539 = vpack.c.bf16 %v1534, %v1534
    %v1540 = vld [vmem:[%s7 + $0xc] sm:$0xf]
    %v1542 = vsel %vm315, %v1539, 0
    %v1545 = vsel %vm378, %v1540, 0
    %1547 = vmatprep.subr.bf16.mxu0 0
    %1548 = vmatpush1.bf16.msra.mxu0 0
    %1549 = vmatprep.subr.bf16.mxu0 0
    %1550 = vmatpush1.bf16.msra.mxu0 0
    %1551 = vmatprep.subr.bf16.mxu0 0
    %1552 = vmatpush1.bf16.msra.mxu0 0
    %1553 = vmatprep.subr.bf16.mxu0 0
    %1554 = vmatpush1.bf16.msra.mxu0 0
    %1555 = vmatprep.subr.bf16.mxu0 0
    %1556 = vmatpush1.bf16.msra.mxu0 0
    %1557 = vmatprep.subr.bf16.mxu0 0
    %1558 = vmatpush1.bf16.msra.mxu0 0
    %1559 = vmatprep.subr.bf16.mxu0 0
    %1560 = vmatpush1.bf16.msra.mxu0 0
    %1561 = vmatprep.subr.bf16.mxu0 0
    %1562 = vmatpush1.bf16.msra.mxu0 %v1545
    %1563 = vmatprep.subr.bf16.mxu0 0
    %1564 = vmatpush2.bf16.msra.mxu0 0
    %1565 = vmatprep.subr.bf16.mxu0 0
    %1566 = vmatpush2.bf16.msra.mxu0 0
    %1567 = vmatprep.subr.bf16.mxu0 0
    %1568 = vmatpush2.bf16.msra.mxu0 0
    %1569 = vmatprep.subr.bf16.mxu0 0
    %1570 = vmatpush2.bf16.msra.mxu0 0
    %1571 = vmatprep.subr.bf16.mxu0 0
    %1572 = vmatpush2.bf16.msra.mxu0 0
    %1573 = vmatprep.subr.bf16.mxu0 0
    %1574 = vmatpush2.bf16.msra.mxu0 0
    %1575 = vmatprep.subr.bf16.mxu0 0
    %1576 = vmatpush2.bf16.msra.mxu0 0
    %1577 = vmatprep.subr.bf16.mxu0 0
    %1578 = vmatpush2.bf16.msra.mxu0 0
    %1579 = vmatprep.mubr.bf16.mxu0 0
    %1580 = vmatmul.mubr.bf16.gmra.mxu0 %v1542
    %v1581 = vpop.f32.mrf.mxu0
    %v1582 = vadd.f32 0.0, %v1581
    %v1583 = vpop.f32.mrf.mxu0
    %v1584 = vpop.f32.mrf.mxu0
    %v1585 = vpop.f32.mrf.mxu0
    %1586 = vdwg.mxu0
    %v1587 = vadd.f32 %v1426, %v1582
    %v1588 = vld [vmem:[%s8] sm:$0x1]
    %v1590 = vlaneseq
    %v1591 = vshrl.u32 %v1590, 7
    %v1592 = vsub.s32 0, %v1591
    %v1593 = vrot.slane %v1588, %v1592
    %v1595 = vadd.f32 %v951, %v1593
    %v1596 = vadd.f32 %v1587, %v1593
    %v1597 = vadd.f32 %v61, %v1595
    %v1598 = vadd.f32 %v62, %v1596
    %v1599 = vsel %vm253, %v1597, 0.0
    %1600 = vadd.xlane.f32.xlu0 %v1599
    %v1601 = vpop.xlane.xlu0 %1600
    %v1602 = vsel %vm253, %v1598, 0.0
    %1603 = vadd.xlane.f32.xlu0 %v1602
    %v1604 = vpop.xlane.xlu0 %1603
    %v1605 = vrcp.pop 32.0
    %v1606 = vmul.f32 %v1601, %v1605
    %v1607 = vmul.f32 %v1604, %v1605
    %v1608 = vsub.f32 %v1597, %v1606
    %v1609 = vsub.f32 %v1598, %v1607
    %v1610 = vmul.f32 %v1608, %v1608
    %v1611 = vmul.f32 %v1609, %v1609
    %v1612 = vsel %vm253, %v1610, 0.0
    %1613 = vadd.xlane.f32.xlu0 %v1612
    %v1614 = vpop.xlane.xlu0 %1613
    %v1615 = vsel %vm253, %v1611, 0.0
    %1616 = vadd.xlane.f32.xlu0 %v1615
    %v1617 = vpop.xlane.xlu0 %1616
    %v1618 = vmul.f32 %v1614, %v1605
    %v1619 = vmul.f32 %v1617, %v1605
    %v1620 = vadd.f32 %v1618, 1e-05
    %v1621 = vadd.f32 %v1619, 1e-05
    %v1622 = vrsqrt.pop %v1620
    %v1623 = vrsqrt.pop %v1621
    %v1624 = vmul.f32 %v1608, %v1622
    %v1625 = vmul.f32 %v1609, %v1623
    %v1626 = vld [vmem:[%s9] sm:$0x1]
    %v1628 = vlaneseq
    %v1629 = vshrl.u32 %v1628, 7
    %v1630 = vsub.s32 0, %v1629
    %v1631 = vrot.slane %v1626, %v1630
    %v1633 = vmul.f32 %v1624, %v1631
    %v1634 = vmul.f32 %v1625, %v1631
    %v1635 = vld [vmem:[%s10] sm:$0x1]
    %v1637 = vlaneseq
    %v1638 = vshrl.u32 %v1637, 7
    %v1639 = vsub.s32 0, %v1638
    %v1640 = vrot.slane %v1635, %v1639
    %v1642 = vadd.f32 %v1633, %v1640
    %v1643 = vadd.f32 %v1634, %v1640
    %v1644 = vpack.c.bf16 %v1643, %v1642
    %v1645 = vld [vmem:[%s13] sm:$0xf]
    %v1646 = vld [vmem:[%s13 + $0x4] sm:$0xf]
    %v1647 = vld [vmem:[%s13 + $0x8] sm:$0xf]
    %v1648 = vld [vmem:[%s13 + $0xc] sm:$0xf]
    %v1649 = vld [vmem:[%s14] sm:$0x1]
    %v1651 = vlaneseq
    %v1652 = vshrl.u32 %v1651, 7
    %v1653 = vsub.s32 0, %v1652
    %v1654 = vrot.slane %v1649, %v1653
    %v1660 = vunpack.c.l.b16 %v1645
    %v1661 = vunpack.c.l.b16 %v1646
    %v1662 = vunpack.c.l.b16 %v1647
    %v1663 = vunpack.c.l.b16 %v1648
    %v1664 = vpack.c.b16 %v1661, %v1660
    %v1665 = vpack.c.b16 %v1663, %v1662
    %v1669 = vsel %vm253, %v1644, 0
    %1671 = vmatprep.subr.bf16.mxu0 0
    %1672 = vmatpush1.bf16.msra.mxu0 0
    %1673 = vmatprep.subr.bf16.mxu0 0
    %1674 = vmatpush1.bf16.msra.mxu0 0
    %1675 = vmatprep.subr.bf16.mxu0 0
    %1676 = vmatpush1.bf16.msra.mxu0 0
    %1677 = vmatprep.subr.bf16.mxu0 0
    %1678 = vmatpush1.bf16.msra.mxu0 0
    %1679 = vmatprep.subr.bf16.mxu0 0
    %1680 = vmatpush1.bf16.msra.mxu0 0
    %1681 = vmatprep.subr.bf16.mxu0 0
    %1682 = vmatpush1.bf16.msra.mxu0 0
    %1683 = vmatprep.subr.bf16.mxu0 0
    %1684 = vmatpush1.bf16.msra.mxu0 %v1665
    %1685 = vmatprep.subr.bf16.mxu0 0
    %1686 = vmatpush1.bf16.msra.mxu0 %v1664
    %1687 = vmatprep.subr.bf16.mxu0 0
    %1688 = vmatpush2.bf16.msra.mxu0 0
    %1689 = vmatprep.subr.bf16.mxu0 0
    %1690 = vmatpush2.bf16.msra.mxu0 0
    %1691 = vmatprep.subr.bf16.mxu0 0
    %1692 = vmatpush2.bf16.msra.mxu0 0
    %1693 = vmatprep.subr.bf16.mxu0 0
    %1694 = vmatpush2.bf16.msra.mxu0 0
    %1695 = vmatprep.subr.bf16.mxu0 0
    %1696 = vmatpush2.bf16.msra.mxu0 0
    %1697 = vmatprep.subr.bf16.mxu0 0
    %1698 = vmatpush2.bf16.msra.mxu0 0
    %1699 = vmatprep.subr.bf16.mxu0 0
    %1700 = vmatpush2.bf16.msra.mxu0 0
    %1701 = vmatprep.subr.bf16.mxu0 0
    %1702 = vmatpush2.bf16.msra.mxu0 0
    %1703 = vmatprep.mubr.bf16.mxu0 0
    %1704 = vmatmul.mubr.bf16.gmra.mxu0 %v1669
    %v1705 = vpop.f32.mrf.mxu0
    %v1706 = vadd.f32 %v1654, %v1705
    %v1707 = vpop.f32.mrf.mxu0
    %v1708 = vpop.f32.mrf.mxu0
    %v1709 = vadd.f32 %v1654, %v1708
    %v1710 = vpop.f32.mrf.mxu0
    %1711 = vdwg.mxu0
    %v1712 = vmax.f32 %v1706, 0.0
    %v1713 = vmax.f32 %v1709, 0.0
    %v1714 = vpack.c.bf16 %v1713, %v1712
    %v1715 = vld [vmem:[%s15] sm:$0xf]
    %v1716 = vld [vmem:[%s15 + $0x4] sm:$0xf]
    %v1717 = vld [vmem:[%s15 + $0x8] sm:$0xf]
    %v1718 = vld [vmem:[%s15 + $0xc] sm:$0xf]
    %v1719 = vld [vmem:[%s15 + $0x10] sm:$0xf]
    %v1720 = vld [vmem:[%s15 + $0x14] sm:$0xf]
    %v1721 = vld [vmem:[%s15 + $0x18] sm:$0xf]
    %v1722 = vld [vmem:[%s15 + $0x1c] sm:$0xf]
    %v1723 = vld [vmem:[%s15 + $0x20] sm:$0xf]
    %v1724 = vld [vmem:[%s15 + $0x24] sm:$0xf]
    %v1725 = vld [vmem:[%s15 + $0x28] sm:$0xf]
    %v1726 = vld [vmem:[%s15 + $0x2c] sm:$0xf]
    %v1727 = vld [vmem:[%s15 + $0x30] sm:$0xf]
    %v1728 = vld [vmem:[%s15 + $0x34] sm:$0xf]
    %v1729 = vld [vmem:[%s15 + $0x38] sm:$0xf]
    %v1730 = vld [vmem:[%s15 + $0x3c] sm:$0xf]
    %v1731 = vld [vmem:[%s16] sm:$0x1]
    %v1733 = vlaneseq
    %v1734 = vshrl.u32 %v1733, 7
    %v1735 = vsub.s32 0, %v1734
    %v1736 = vrot.slane %v1731, %v1735
    %v1754 = vunpack.c.l.b16 %v1715
    %v1755 = vunpack.c.l.b16 %v1716
    %v1756 = vunpack.c.l.b16 %v1717
    %v1757 = vunpack.c.l.b16 %v1718
    %v1758 = vunpack.c.l.b16 %v1719
    %v1759 = vunpack.c.l.b16 %v1720
    %v1760 = vunpack.c.l.b16 %v1721
    %v1761 = vunpack.c.l.b16 %v1722
    %v1762 = vunpack.c.l.b16 %v1723
    %v1763 = vunpack.c.l.b16 %v1724
    %v1764 = vunpack.c.l.b16 %v1725
    %v1765 = vunpack.c.l.b16 %v1726
    %v1766 = vunpack.c.l.b16 %v1727
    %v1767 = vunpack.c.l.b16 %v1728
    %v1768 = vunpack.c.l.b16 %v1729
    %v1769 = vunpack.c.l.b16 %v1730
    %v1770 = vpack.c.b16 %v1755, %v1754
    %v1771 = vpack.c.b16 %v1757, %v1756
    %v1772 = vpack.c.b16 %v1759, %v1758
    %v1773 = vpack.c.b16 %v1761, %v1760
    %v1774 = vpack.c.b16 %v1763, %v1762
    %v1775 = vpack.c.b16 %v1765, %v1764
    %v1776 = vpack.c.b16 %v1767, %v1766
    %v1777 = vpack.c.b16 %v1769, %v1768
    %1786 = vmatprep.subr.bf16.mxu0 0
    %1787 = vmatpush1.bf16.msra.mxu0 %v1777
    %1788 = vmatprep.subr.bf16.mxu0 0
    %1789 = vmatpush1.bf16.msra.mxu0 %v1776
    %1790 = vmatprep.subr.bf16.mxu0 0
    %1791 = vmatpush1.bf16.msra.mxu0 %v1775
    %1792 = vmatprep.subr.bf16.mxu0 0
    %1793 = vmatpush1.bf16.msra.mxu0 %v1774
    %1794 = vmatprep.subr.bf16.mxu0 0
    %1795 = vmatpush1.bf16.msra.mxu0 %v1773
    %1796 = vmatprep.subr.bf16.mxu0 0
    %1797 = vmatpush1.bf16.msra.mxu0 %v1772
    %1798 = vmatprep.subr.bf16.mxu0 0
    %1799 = vmatpush1.bf16.msra.mxu0 %v1771
    %1800 = vmatprep.subr.bf16.mxu0 0
    %1801 = vmatpush1.bf16.msra.mxu0 %v1770
    %1802 = vmatprep.subr.bf16.mxu0 0
    %1803 = vmatpush2.bf16.msra.mxu0 0
    %1804 = vmatprep.subr.bf16.mxu0 0
    %1805 = vmatpush2.bf16.msra.mxu0 0
    %1806 = vmatprep.subr.bf16.mxu0 0
    %1807 = vmatpush2.bf16.msra.mxu0 0
    %1808 = vmatprep.subr.bf16.mxu0 0
    %1809 = vmatpush2.bf16.msra.mxu0 0
    %1810 = vmatprep.subr.bf16.mxu0 0
    %1811 = vmatpush2.bf16.msra.mxu0 0
    %1812 = vmatprep.subr.bf16.mxu0 0
    %1813 = vmatpush2.bf16.msra.mxu0 0
    %1814 = vmatprep.subr.bf16.mxu0 0
    %1815 = vmatpush2.bf16.msra.mxu0 0
    %1816 = vmatprep.subr.bf16.mxu0 0
    %1817 = vmatpush2.bf16.msra.mxu0 0
    %1818 = vmatprep.mubr.bf16.mxu0 0
    %1819 = vmatmul.mubr.bf16.gmra.mxu0 %v1714
    %v1820 = vpop.f32.mrf.mxu0
    %v1821 = vadd.f32 %v1736, %v1820
    %v1822 = vpop.f32.mrf.mxu0
    %v1823 = vpop.f32.mrf.mxu0
    %v1824 = vadd.f32 %v1736, %v1823
    %v1825 = vpop.f32.mrf.mxu0
    %1826 = vdwg.mxu0
    %v1827 = vadd.f32 %v1642, %v1821
    %v1828 = vadd.f32 %v1643, %v1824
    %v1829 = vsel %vm253, %v1827, 0.0
    %1830 = vadd.xlane.f32.xlu0 %v1829
    %v1831 = vpop.xlane.xlu0 %1830
    %v1832 = vsel %vm253, %v1828, 0.0
    %1833 = vadd.xlane.f32.xlu0 %v1832
    %v1834 = vpop.xlane.xlu0 %1833
    %v1835 = vmul.f32 %v1831, %v1605
    %v1836 = vmul.f32 %v1834, %v1605
    %v1837 = vsub.f32 %v1827, %v1835
    %v1838 = vsub.f32 %v1828, %v1836
    %v1839 = vmul.f32 %v1837, %v1837
    %v1840 = vmul.f32 %v1838, %v1838
    %v1841 = vsel %vm253, %v1839, 0.0
    %1842 = vadd.xlane.f32.xlu0 %v1841
    %v1843 = vpop.xlane.xlu0 %1842
    %v1844 = vsel %vm253, %v1840, 0.0
    %1845 = vadd.xlane.f32.xlu0 %v1844
    %v1846 = vpop.xlane.xlu0 %1845
    %v1847 = vmul.f32 %v1843, %v1605
    %v1848 = vmul.f32 %v1846, %v1605
    %v1849 = vadd.f32 %v1847, 1e-05
    %v1850 = vadd.f32 %v1848, 1e-05
    %v1851 = vrsqrt.pop %v1849
    %v1852 = vrsqrt.pop %v1850
    %v1853 = vmul.f32 %v1837, %v1851
    %v1854 = vmul.f32 %v1838, %v1852
    %v1855 = vld [vmem:[%s11] sm:$0x1]
    %v1857 = vlaneseq
    %v1858 = vshrl.u32 %v1857, 7
    %v1859 = vsub.s32 0, %v1858
    %v1860 = vrot.slane %v1855, %v1859
    %v1862 = vmul.f32 %v1853, %v1860
    %v1863 = vmul.f32 %v1854, %v1860
    %v1864 = vld [vmem:[%s12] sm:$0x1]
    %v1866 = vlaneseq
    %v1867 = vshrl.u32 %v1866, 7
    %v1868 = vsub.s32 0, %v1867
    %v1869 = vrot.slane %v1864, %v1868
    %v1871 = vadd.f32 %v1862, %v1869
    %v1872 = vadd.f32 %v1863, %v1869
    %1873 = vst.msk [vmem:[#allocation2] sm:$0xff] %vm253, %v1871
    %1874 = vst.msk [vmem:[#allocation2 + $0x8] sm:$0xff] %vm253, %v1872
    // Predicated region
    $region70: #{tpu_custom_call.1} parent=1 // pred_check
      _
    $region71: #{tpu_custom_call.1} parent=1 // pred_check_branch
      %1876 = sbr.rel (0) target = $region73
    $region72: #{tpu_custom_call.1} parent=1 // pred_region
      %s1878 = ssub.s32 256, 256
      %1879 = vsyncadd [#allocation3], %s1878
      %s1880 = sshll.u32 [#allocation2], 4
      %s1881 = int_to_ptr.vmem [resolvable:$true] %s1880
      %1886 = dma.vmem_to_hbm [thread:$0]  %s1881, 256, %s17, [#allocation3], 128, 128, 8
    $region73: #{tpu_custom_call.1} parent=1 // pred_fallthru
      _
    // Predicated region
    $region74: #{tpu_custom_call.1} parent=1 // pred_check
      _
    $region75: #{tpu_custom_call.1} parent=1 // pred_check_branch
      %1888 = sbr.rel (0) target = $region77
    $region76: #{tpu_custom_call.1} parent=1 // pred_region
      %s1890 = ssub.s32 1024, 1024
      %1891 = vsyncadd [#allocation5], %s1890
      %s1892 = sshll.u32 [#allocation4], 4
      %s1893 = int_to_ptr.vmem [resolvable:$true] %s1892
      %1898 = dma.vmem_to_hbm [thread:$0]  %s1893, 1024, %s18, [#allocation5], 128, 128, 8
    $region77: #{tpu_custom_call.1} parent=1 // pred_fallthru
      _
    // Predicated region
    $region78: #{tpu_custom_call.1} parent=1 // pred_check
      _
    $region79: #{tpu_custom_call.1} parent=1 // pred_check_branch
      %1900 = sbr.rel (0) target = $region81
    $region80: #{tpu_custom_call.1} parent=1 // pred_region
      %1901 = dma.done [#allocation3], 256
    $region81: #{tpu_custom_call.1} parent=1 // pred_fallthru
      _
    // Predicated region
    $region82: #{tpu_custom_call.1} parent=1 // pred_check
      _
    $region83: #{tpu_custom_call.1} parent=1 // pred_check_branch
      %1903 = sbr.rel (0) target = $region85
    $region84: #{tpu_custom_call.1} parent=1 // pred_region
      %1904 = dma.done [#allocation5], 1024
    $region85: #{tpu_custom_call.1} parent=1 // pred_fallthru
      _
    %1905 = vsyncpa [#allocation3], 1
    %1906 = vsyncpa [#allocation5], 1

</llo_original>
